<compile_context>
chip_gen: v6e
topology: v6e:2x2x1
jax: 0.10.0
libtpu: 0.0.40
codegen_flags: <defaults>
</compile_context>

<pallas_src>
import numpy as np
import jax
import jax.numpy as jnp
from jax import lax
from jax.experimental import pallas as pl
from jax.experimental.pallas import tpu as pltpu

EPS = 1e-5


# ----------------------------- Pallas kernels -----------------------------

def _tconv_kernel(x_ref, w_ref, b_ref, o_ref):
    """ConvTranspose3d(k=2, s=2, p=0) for one output depth plane d2 = 2*d + kd.

    x_ref : (1, 1, H, W, cin)         bf16  channels-last x1 plane d
    w_ref : (1, 2, cin, 2*cout)       bf16  kd-slice; [kh] -> (cin, (kw, co))
    b_ref : (1, 2*cout)               f32   bias tiled over kw
    o_ref : (1, 1, 2*H, W, 2*cout)    bf16  output plane, cols ordered (kw, co)
    """
    H = x_ref.shape[2]
    b = b_ref[...]
    for kh in range(2):
        w = w_ref[0, kh]                                    # (cin, 2*cout)
        for h in range(H):
            r = jnp.dot(x_ref[0, 0, h], w,
                        preferred_element_type=jnp.float32) + b
            o_ref[0, 0, 2 * h + kh] = r.astype(o_ref.dtype)


def _conv_relu_stats_kernel(x_ref, w_ref, b_ref, y_ref, s_ref, ss_ref, acc_ref):
    """3x3x3 conv (pad=1) + bias + ReLU for one output depth plane, fused with
    per-plane BN partial sums.  Depth taps come in via the kd grid axis.

    x_ref  : (1, 1, H2+2, W2+2, C)  bf16  padded concat plane at depth d2 + kd
    w_ref  : (1, 3, 3, C, cout)     bf16  kd-slice of the conv weight
    b_ref  : (1, cout)              f32
    y_ref  : (1, 1, H2*W2, cout)    f32   conv+ReLU output plane
    s_ref  : (1, 1, 1, cout)        f32   per-plane sum(y)
    ss_ref : (1, 1, 1, cout)        f32   per-plane sum(y*y)
    acc_ref: (H2*W2, cout)          f32   VMEM accumulator
    """
    kd = pl.program_id(2)
    Hp, Wp, C = x_ref.shape[2], x_ref.shape[3], x_ref.shape[4]
    H2, W2 = Hp - 2, Wp - 2

    @pl.when(kd == 0)
    def _():
        acc_ref[...] = jnp.zeros_like(acc_ref)

    acc = acc_ref[...]
    for kh in range(3):
        for kw in range(3):
            xs = x_ref[0, 0, kh:kh + H2, kw:kw + W2, :].reshape(H2 * W2, C)
            acc = acc + jnp.dot(xs, w_ref[0, kh, kw],
                                preferred_element_type=jnp.float32)
    acc_ref[...] = acc

    @pl.when(kd == pl.num_programs(2) - 1)
    def _():
        y = jnp.maximum(acc_ref[...] + b_ref[...], 0.0)
        y_ref[0, 0] = y.astype(y_ref.dtype)
        s_ref[0, 0] = jnp.sum(y, axis=0, keepdims=True)
        ss_ref[0, 0] = jnp.sum(y * y, axis=0, keepdims=True)


def _bn_apply_kernel(y_ref, scale_ref, shift_ref, o_ref):
    # y * (gamma * inv_std) + (beta - mean * gamma * inv_std), per plane
    o_ref[0, 0] = (y_ref[0, 0].astype(jnp.float32) * scale_ref[...]
                   + shift_ref[...])


# ------------------------------ Pallas wrappers ----------------------------

def tconv_pallas(x1_cl, wt_r, bt2, N, D, H, W, cin, cout):
    D2, H2 = 2 * D, 2 * H
    return pl.pallas_call(
        _tconv_kernel,
        out_shape=jax.ShapeDtypeStruct((N, D2, H2, W, 2 * cout), jnp.bfloat16),
        grid=(N, D, 2),
        in_specs=[
            pl.BlockSpec((1, 1, H, W, cin), lambda n, d, kd: (n, d, 0, 0, 0)),
            pl.BlockSpec((1, 2, cin, 2 * cout), lambda n, d, kd: (kd, 0, 0, 0)),
            pl.BlockSpec((1, 2 * cout), lambda n, d, kd: (0, 0)),
        ],
        out_specs=pl.BlockSpec((1, 1, H2, W, 2 * cout),
                               lambda n, d, kd: (n, 2 * d + kd, 0, 0, 0)),
        compiler_params=pltpu.CompilerParams(
            dimension_semantics=("parallel", "parallel", "parallel")),
    )(x1_cl, wt_r, bt2)


def conv_relu_stats_pallas(concat_pad, wc_r, bc2, N, D2, H2, W2, C, cout):
    HW = H2 * W2
    return pl.pallas_call(
        _conv_relu_stats_kernel,
        out_shape=(jax.ShapeDtypeStruct((N, D2, HW, cout), jnp.float32),
                   jax.ShapeDtypeStruct((N, D2, 1, cout), jnp.float32),
                   jax.ShapeDtypeStruct((N, D2, 1, cout), jnp.float32)),
        grid=(N, D2, 3),
        in_specs=[
            pl.BlockSpec((1, 1, H2 + 2, W2 + 2, C),
                         lambda n, d2, kd: (n, d2 + kd, 0, 0, 0)),
            pl.BlockSpec((1, 3, 3, C, cout),
                         lambda n, d2, kd: (kd, 0, 0, 0, 0)),
            pl.BlockSpec((1, cout), lambda n, d2, kd: (0, 0)),
        ],
        out_specs=(
            pl.BlockSpec((1, 1, HW, cout), lambda n, d2, kd: (n, d2, 0, 0)),
            pl.BlockSpec((1, 1, 1, cout), lambda n, d2, kd: (n, d2, 0, 0)),
            pl.BlockSpec((1, 1, 1, cout), lambda n, d2, kd: (n, d2, 0, 0)),
        ),
        scratch_shapes=[pltpu.VMEM((HW, cout), jnp.float32)],
        compiler_params=pltpu.CompilerParams(
            dimension_semantics=("parallel", "parallel", "arbitrary")),
    )(concat_pad, wc_r, bc2)


def bn_apply_pallas(y2, scale, shift):
    N, D2, HW, cout = y2.shape
    return pl.pallas_call(
        _bn_apply_kernel,
        out_shape=jax.ShapeDtypeStruct((N, D2, HW, cout), jnp.float32),
        grid=(N, D2),
        in_specs=[
            pl.BlockSpec((1, 1, HW, cout), lambda n, d2: (n, d2, 0, 0)),
            pl.BlockSpec((1, cout), lambda n, d2: (0, 0)),
            pl.BlockSpec((1, cout), lambda n, d2: (0, 0)),
        ],
        out_specs=pl.BlockSpec((1, 1, HW, cout), lambda n, d2: (n, d2, 0, 0)),
        compiler_params=pltpu.CompilerParams(
            dimension_semantics=("parallel", "parallel")),
    )(y2, scale, shift)


# ------------------------------ decode forward -----------------------------

def decode_forward(x1, x2, params):
    wt, bt = params["wt"], params["bt"]      # ConvTranspose3d: (cin,cout,2,2,2), (cout,)
    wc, bc = params["wc"], params["bc"]      # Conv3d:          (cout,C,3,3,3),   (cout,)
    gamma, beta = params["gamma"], params["beta"]

    N, cin, D, H, W = x1.shape
    cout = wt.shape[1]
    D2, H2, W2 = 2 * D, 2 * H, 2 * W
    C = cout + x2.shape[1]                   # channels of the concat (== cin here)

    # ---- ConvTranspose3d(cin, cout, 2, 2): per-plane matmuls, interleave
    #      folded into the out_spec + static in-kernel indexing ----
    x1_cl = jnp.transpose(x1, (0, 2, 3, 4, 1)).astype(jnp.bfloat16)    # (N,D,H,W,cin)
    wt_r = jnp.transpose(wt, (2, 3, 0, 4, 1)).reshape(
        2, 2, cin, 2 * cout).astype(jnp.bfloat16)                      # (kd,kh,cin,(kw,co))
    bt2 = jnp.tile(bt, 2).reshape(1, 2 * cout).astype(jnp.float32)
    y1 = tconv_pallas(x1_cl, wt_r, bt2, N, D, H, W, cin, cout)
    y1 = y1.reshape(N, D2, H2, W2, cout)     # free reshape (adjacent dims only)

    # ---- channel concat + spatial zero-pad (channels-last, bf16) ----
    x2_cl = jnp.transpose(x2, (0, 2, 3, 4, 1)).astype(jnp.bfloat16)
    concat = jnp.concatenate([y1, x2_cl], axis=-1)                     # (N,D2,H2,W2,C)
    concat_pad = jnp.pad(concat, ((0, 0), (1, 1), (1, 1), (1, 1), (0, 0)))

    # ---- Conv3d(C, cout, 3, 1, 1) + ReLU + per-plane BN partial sums ----
    wc_r = jnp.transpose(wc, (2, 3, 4, 1, 0)).astype(jnp.bfloat16)     # (3,3,3,C,cout)
    bc2 = bc.reshape(1, cout).astype(jnp.float32)
    y2, s, ss = conv_relu_stats_pallas(concat_pad, wc_r, bc2,
                                       N, D2, H2, W2, C, cout)

    # ---- BatchNorm3d (training mode: biased batch statistics) ----
    M2 = float(N * D2 * H2 * W2)
    s_tot = jnp.sum(s, axis=(0, 1))                                    # (1, cout)
    ss_tot = jnp.sum(ss, axis=(0, 1))
    mean = s_tot / M2
    var = jnp.maximum(ss_tot / M2 - mean * mean, 0.0)
    inv_std = 1.0 / jnp.sqrt(var + EPS)
    scale = (gamma.reshape(1, cout) * inv_std).astype(jnp.float32)
    shift = (beta.reshape(1, cout) - mean * scale).astype(jnp.float32)

    out = bn_apply_pallas(y2, scale, shift)                            # (N,D2,HW,cout)
    out = out.reshape(N, D2, H2, W2, cout)
    # TODO(synk): fold this NDHWC->NCDHW transpose into the BN kernel's out_spec.
    return jnp.transpose(out, (0, 4, 1, 2, 3))


# ------------------------------ pure-JAX reference --------------------------

def ref_forward(x1, x2, params):
    wt, bt = params["wt"], params["bt"]
    wc, bc = params["wc"], params["bc"]
    gamma, beta = params["gamma"], params["beta"]

    # ConvTranspose3d(k=2, s=2, p=0) == lhs-dilated conv with flipped kernel
    kern_t = jnp.transpose(wt[:, :, ::-1, ::-1, ::-1], (1, 0, 2, 3, 4))
    y1 = lax.conv_general_dilated(
        x1, kern_t, window_strides=(1, 1, 1),
        padding=((1, 1), (1, 1), (1, 1)), lhs_dilation=(2, 2, 2),
        dimension_numbers=("NCDHW", "OIDHW", "NCDHW"),
        precision=lax.Precision.HIGHEST) + bt.reshape(1, -1, 1, 1, 1)
    concat = jnp.concatenate([y1, x2], axis=1)
    y2 = lax.conv_general_dilated(
        concat, wc, window_strides=(1, 1, 1),
        padding=((1, 1), (1, 1), (1, 1)),
        dimension_numbers=("NCDHW", "OIDHW", "NCDHW"),
        precision=lax.Precision.HIGHEST) + bc.reshape(1, -1, 1, 1, 1)
    y2 = jnp.maximum(y2, 0.0)
    mean = jnp.mean(y2, axis=(0, 2, 3, 4), keepdims=True)
    var = jnp.mean((y2 - mean) ** 2, axis=(0, 2, 3, 4), keepdims=True)
    return (gamma.reshape(1, -1, 1, 1, 1) * (y2 - mean) / jnp.sqrt(var + EPS)
            + beta.reshape(1, -1, 1, 1, 1))


# ----------------------------------- main -----------------------------------

if __name__ == "__main__":
    key = jax.random.PRNGKey(0)
    N, cin, cout = 2, 8, 4           # cin = 2*cout so concat has cin channels
    D = H = W = 4
    k1, k2, k3, k4, k5, k6 = jax.random.split(key, 6)

    x1 = jax.random.normal(k1, (N, cin, D, H, W), jnp.float32)
    x2 = jax.random.normal(k2, (N, cin - cout, 2 * D, 2 * H, 2 * W), jnp.float32)

    params = dict(
        wt=0.2 * jax.random.normal(k3, (cin, cout, 2, 2, 2), jnp.float32),
        bt=0.1 * jax.random.normal(k4, (cout,), jnp.float32),
        wc=0.1 * jax.random.normal(k5, (cout, cin, 3, 3, 3), jnp.float32),
        bc=0.1 * jax.random.normal(k6, (cout,), jnp.float32),
        gamma=jnp.ones((cout,), jnp.float32),   # PyTorch BatchNorm3d default init
        beta=jnp.zeros((cout,), jnp.float32),
    )

    decode_jit = jax.jit(decode_forward)
    out = jax.block_until_ready(decode_jit(x1, x2, params))
    ref = jax.block_until_ready(ref_forward(x1, x2, params))

    assert out.shape == (N, cout, 2 * D, 2 * H, 2 * W)
    np.testing.assert_allclose(np.asarray(out), np.asarray(ref),
                               rtol=2e-2, atol=2e-2)
    print("KERNEL_OK")
</pallas_src>

<mosaic_0001>
module attributes {stable_mosaic.version = 11 : i64} {
  func.func @_tconv_kernel(%arg0: i32, %arg1: i32, %arg2: i32, %arg3: memref<1x1x4x4x8xbf16, #tpu.memory_space<vmem>>, %arg4: memref<1x2x8x8xbf16, #tpu.memory_space<vmem>>, %arg5: memref<1x8xf32, #tpu.memory_space<vmem>>, %arg6: memref<1x1x8x4x8xbf16, #tpu.memory_space<vmem>>) attributes {dimension_semantics = [#tpu.dimension_semantics<parallel>, #tpu.dimension_semantics<parallel>, #tpu.dimension_semantics<parallel>], iteration_bounds = array<i64: 2, 4, 2>, scalar_prefetch = 0 : i64, scratch_operands = 0 : i64, tpu.core_type = #tpu.core_type<tc>, window_params = [{transform_indices = @transform_0, window_bounds = array<i64: 1, 1, 4, 4, 8>}, {transform_indices = @transform_1, window_bounds = array<i64: 1, 2, 8, 8>}, {pipeline_mode = #tpu.pipeline_mode<synchronous>, transform_indices = @transform_2, window_bounds = array<i64: 1, 8>}, {transform_indices = @transform_3, window_bounds = array<i64: 1, 1, 8, 4, 8>}]} {
    %c0 = arith.constant 0 : index
    %c0_0 = arith.constant 0 : index
    %0 = vector.load %arg5[%c0, %c0_0] : memref<1x8xf32, #tpu.memory_space<vmem>>, vector<1x8xf32>
    %c0_1 = arith.constant 0 : index
    %c0_2 = arith.constant 0 : index
    %c0_3 = arith.constant 0 : index
    %c0_4 = arith.constant 0 : index
    %1 = vector.load %arg4[%c0_1, %c0_2, %c0_3, %c0_4] : memref<1x2x8x8xbf16, #tpu.memory_space<vmem>>, vector<1x1x8x8xbf16>
    %2 = vector.shape_cast %1 : vector<1x1x8x8xbf16> to vector<8x8xbf16>
    %c0_5 = arith.constant 0 : index
    %c0_6 = arith.constant 0 : index
    %c0_7 = arith.constant 0 : index
    %c0_8 = arith.constant 0 : index
    %c0_9 = arith.constant 0 : index
    %3 = vector.load %arg3[%c0_5, %c0_6, %c0_7, %c0_8, %c0_9] : memref<1x1x4x4x8xbf16, #tpu.memory_space<vmem>>, vector<1x1x1x4x8xbf16>
    %4 = vector.shape_cast %3 : vector<1x1x1x4x8xbf16> to vector<4x8xbf16>
    %cst = arith.constant dense<0.000000e+00> : vector<4x8xf32>
    %5 = tpu.matmul %4, %2, %cst {dimension_numbers = #tpu.dot_dimension_numbers<[1], [0], [0], [1], [0, 0, 1, 1], [], []>} : vector<4x8xbf16>, vector<8x8xbf16>, vector<4x8xf32> -> vector<4x8xf32>
    %6 = vector.broadcast %0 : vector<1x8xf32> to vector<4x8xf32>
    %7 = arith.addf %5, %6 : vector<4x8xf32>
    %8 = arith.truncf %7 : vector<4x8xf32> to vector<4x8xbf16>
    %c0_10 = arith.constant 0 : index
    %c0_11 = arith.constant 0 : index
    %c0_12 = arith.constant 0 : index
    %c0_13 = arith.constant 0 : index
    %c0_14 = arith.constant 0 : index
    %9 = vector.load %arg6[%c0_10, %c0_11, %c0_12, %c0_13, %c0_14] : memref<1x1x8x4x8xbf16, #tpu.memory_space<vmem>>, vector<1x1x1x4x8xbf16>
    %10 = vector.shape_cast %9 : vector<1x1x1x4x8xbf16> to vector<4x8xbf16>
    %11 = vector.shape_cast %8 : vector<4x8xbf16> to vector<1x1x1x4x8xbf16>
    tpu.vector_store %arg6[%c0_10, %c0_11, %c0_12, %c0_13, %c0_14], %11 {strides = array<i32>} : memref<1x1x8x4x8xbf16, #tpu.memory_space<vmem>>, vector<1x1x1x4x8xbf16>,
    %c0_15 = arith.constant 0 : index
    %c0_16 = arith.constant 0 : index
    %c1 = arith.constant 1 : index
    %c0_17 = arith.constant 0 : index
    %c0_18 = arith.constant 0 : index
    %12 = vector.load %arg3[%c0_15, %c0_16, %c1, %c0_17, %c0_18] : memref<1x1x4x4x8xbf16, #tpu.memory_space<vmem>>, vector<1x1x1x4x8xbf16>
    %13 = vector.shape_cast %12 : vector<1x1x1x4x8xbf16> to vector<4x8xbf16>
    %cst_19 = arith.constant dense<0.000000e+00> : vector<4x8xf32>
    %14 = tpu.matmul %13, %2, %cst_19 {dimension_numbers = #tpu.dot_dimension_numbers<[1], [0], [0], [1], [0, 0, 1, 1], [], []>} : vector<4x8xbf16>, vector<8x8xbf16>, vector<4x8xf32> -> vector<4x8xf32>
    %15 = vector.broadcast %0 : vector<1x8xf32> to vector<4x8xf32>
    %16 = arith.addf %14, %15 : vector<4x8xf32>
    %17 = arith.truncf %16 : vector<4x8xf32> to vector<4x8xbf16>
    %c0_20 = arith.constant 0 : index
    %c0_21 = arith.constant 0 : index
    %c2 = arith.constant 2 : index
    %c0_22 = arith.constant 0 : index
    %c0_23 = arith.constant 0 : index
    %18 = vector.load %arg6[%c0_20, %c0_21, %c2, %c0_22, %c0_23] : memref<1x1x8x4x8xbf16, #tpu.memory_space<vmem>>, vector<1x1x1x4x8xbf16>
    %19 = vector.shape_cast %18 : vector<1x1x1x4x8xbf16> to vector<4x8xbf16>
    %20 = vector.shape_cast %17 : vector<4x8xbf16> to vector<1x1x1x4x8xbf16>
    tpu.vector_store %arg6[%c0_20, %c0_21, %c2, %c0_22, %c0_23], %20 {strides = array<i32>} : memref<1x1x8x4x8xbf16, #tpu.memory_space<vmem>>, vector<1x1x1x4x8xbf16>,
    %c0_24 = arith.constant 0 : index
    %c0_25 = arith.constant 0 : index
    %c2_26 = arith.constant 2 : index
    %c0_27 = arith.constant 0 : index
    %c0_28 = arith.constant 0 : index
    %21 = vector.load %arg3[%c0_24, %c0_25, %c2_26, %c0_27, %c0_28] : memref<1x1x4x4x8xbf16, #tpu.memory_space<vmem>>, vector<1x1x1x4x8xbf16>
    %22 = vector.shape_cast %21 : vector<1x1x1x4x8xbf16> to vector<4x8xbf16>
    %cst_29 = arith.constant dense<0.000000e+00> : vector<4x8xf32>
    %23 = tpu.matmul %22, %2, %cst_29 {dimension_numbers = #tpu.dot_dimension_numbers<[1], [0], [0], [1], [0, 0, 1, 1], [], []>} : vector<4x8xbf16>, vector<8x8xbf16>, vector<4x8xf32> -> vector<4x8xf32>
    %24 = vector.broadcast %0 : vector<1x8xf32> to vector<4x8xf32>
    %25 = arith.addf %23, %24 : vector<4x8xf32>
    %26 = arith.truncf %25 : vector<4x8xf32> to vector<4x8xbf16>
    %c0_30 = arith.constant 0 : index
    %c0_31 = arith.constant 0 : index
    %c4 = arith.constant 4 : index
    %c0_32 = arith.constant 0 : index
    %c0_33 = arith.constant 0 : index
    %27 = vector.load %arg6[%c0_30, %c0_31, %c4, %c0_32, %c0_33] : memref<1x1x8x4x8xbf16, #tpu.memory_space<vmem>>, vector<1x1x1x4x8xbf16>
    %28 = vector.shape_cast %27 : vector<1x1x1x4x8xbf16> to vector<4x8xbf16>
    %29 = vector.shape_cast %26 : vector<4x8xbf16> to vector<1x1x1x4x8xbf16>
    tpu.vector_store %arg6[%c0_30, %c0_31, %c4, %c0_32, %c0_33], %29 {strides = array<i32>} : memref<1x1x8x4x8xbf16, #tpu.memory_space<vmem>>, vector<1x1x1x4x8xbf16>,
    %c0_34 = arith.constant 0 : index
    %c0_35 = arith.constant 0 : index
    %c3 = arith.constant 3 : index
    %c0_36 = arith.constant 0 : index
    %c0_37 = arith.constant 0 : index
    %30 = vector.load %arg3[%c0_34, %c0_35, %c3, %c0_36, %c0_37] : memref<1x1x4x4x8xbf16, #tpu.memory_space<vmem>>, vector<1x1x1x4x8xbf16>
    %31 = vector.shape_cast %30 : vector<1x1x1x4x8xbf16> to vector<4x8xbf16>
    %cst_38 = arith.constant dense<0.000000e+00> : vector<4x8xf32>
    %32 = tpu.matmul %31, %2, %cst_38 {dimension_numbers = #tpu.dot_dimension_numbers<[1], [0], [0], [1], [0, 0, 1, 1], [], []>} : vector<4x8xbf16>, vector<8x8xbf16>, vector<4x8xf32> -> vector<4x8xf32>
    %33 = vector.broadcast %0 : vector<1x8xf32> to vector<4x8xf32>
    %34 = arith.addf %32, %33 : vector<4x8xf32>
    %35 = arith.truncf %34 : vector<4x8xf32> to vector<4x8xbf16>
    %c0_39 = arith.constant 0 : index
    %c0_40 = arith.constant 0 : index
    %c6 = arith.constant 6 : index
    %c0_41 = arith.constant 0 : index
    %c0_42 = arith.constant 0 : index
    %36 = vector.load %arg6[%c0_39, %c0_40, %c6, %c0_41, %c0_42] : memref<1x1x8x4x8xbf16, #tpu.memory_space<vmem>>, vector<1x1x1x4x8xbf16>
    %37 = vector.shape_cast %36 : vector<1x1x1x4x8xbf16> to vector<4x8xbf16>
    %38 = vector.shape_cast %35 : vector<4x8xbf16> to vector<1x1x1x4x8xbf16>
    tpu.vector_store %arg6[%c0_39, %c0_40, %c6, %c0_41, %c0_42], %38 {strides = array<i32>} : memref<1x1x8x4x8xbf16, #tpu.memory_space<vmem>>, vector<1x1x1x4x8xbf16>,
    %c0_43 = arith.constant 0 : index
    %c1_44 = arith.constant 1 : index
    %c0_45 = arith.constant 0 : index
    %c0_46 = arith.constant 0 : index
    %39 = vector.load %arg4[%c0_43, %c1_44, %c0_45, %c0_46] : memref<1x2x8x8xbf16, #tpu.memory_space<vmem>>, vector<1x1x8x8xbf16>
    %40 = vector.shape_cast %39 : vector<1x1x8x8xbf16> to vector<8x8xbf16>
    %c0_47 = arith.constant 0 : index
    %c0_48 = arith.constant 0 : index
    %c0_49 = arith.constant 0 : index
    %c0_50 = arith.constant 0 : index
    %c0_51 = arith.constant 0 : index
    %41 = vector.load %arg3[%c0_47, %c0_48, %c0_49, %c0_50, %c0_51] : memref<1x1x4x4x8xbf16, #tpu.memory_space<vmem>>, vector<1x1x1x4x8xbf16>
    %42 = vector.shape_cast %41 : vector<1x1x1x4x8xbf16> to vector<4x8xbf16>
    %cst_52 = arith.constant dense<0.000000e+00> : vector<4x8xf32>
    %43 = tpu.matmul %42, %40, %cst_52 {dimension_numbers = #tpu.dot_dimension_numbers<[1], [0], [0], [1], [0, 0, 1, 1], [], []>} : vector<4x8xbf16>, vector<8x8xbf16>, vector<4x8xf32> -> vector<4x8xf32>
    %44 = vector.broadcast %0 : vector<1x8xf32> to vector<4x8xf32>
    %45 = arith.addf %43, %44 : vector<4x8xf32>
    %46 = arith.truncf %45 : vector<4x8xf32> to vector<4x8xbf16>
    %c0_53 = arith.constant 0 : index
    %c0_54 = arith.constant 0 : index
    %c1_55 = arith.constant 1 : index
    %c0_56 = arith.constant 0 : index
    %c0_57 = arith.constant 0 : index
    %47 = vector.load %arg6[%c0_53, %c0_54, %c1_55, %c0_56, %c0_57] : memref<1x1x8x4x8xbf16, #tpu.memory_space<vmem>>, vector<1x1x1x4x8xbf16>
    %48 = vector.shape_cast %47 : vector<1x1x1x4x8xbf16> to vector<4x8xbf16>
    %49 = vector.shape_cast %46 : vector<4x8xbf16> to vector<1x1x1x4x8xbf16>
    tpu.vector_store %arg6[%c0_53, %c0_54, %c1_55, %c0_56, %c0_57], %49 {strides = array<i32>} : memref<1x1x8x4x8xbf16, #tpu.memory_space<vmem>>, vector<1x1x1x4x8xbf16>,
    %c0_58 = arith.constant 0 : index
    %c0_59 = arith.constant 0 : index
    %c1_60 = arith.constant 1 : index
    %c0_61 = arith.constant 0 : index
    %c0_62 = arith.constant 0 : index
    %50 = vector.load %arg3[%c0_58, %c0_59, %c1_60, %c0_61, %c0_62] : memref<1x1x4x4x8xbf16, #tpu.memory_space<vmem>>, vector<1x1x1x4x8xbf16>
    %51 = vector.shape_cast %50 : vector<1x1x1x4x8xbf16> to vector<4x8xbf16>
    %cst_63 = arith.constant dense<0.000000e+00> : vector<4x8xf32>
    %52 = tpu.matmul %51, %40, %cst_63 {dimension_numbers = #tpu.dot_dimension_numbers<[1], [0], [0], [1], [0, 0, 1, 1], [], []>} : vector<4x8xbf16>, vector<8x8xbf16>, vector<4x8xf32> -> vector<4x8xf32>
    %53 = vector.broadcast %0 : vector<1x8xf32> to vector<4x8xf32>
    %54 = arith.addf %52, %53 : vector<4x8xf32>
    %55 = arith.truncf %54 : vector<4x8xf32> to vector<4x8xbf16>
    %c0_64 = arith.constant 0 : index
    %c0_65 = arith.constant 0 : index
    %c3_66 = arith.constant 3 : index
    %c0_67 = arith.constant 0 : index
    %c0_68 = arith.constant 0 : index
    %56 = vector.load %arg6[%c0_64, %c0_65, %c3_66, %c0_67, %c0_68] : memref<1x1x8x4x8xbf16, #tpu.memory_space<vmem>>, vector<1x1x1x4x8xbf16>
    %57 = vector.shape_cast %56 : vector<1x1x1x4x8xbf16> to vector<4x8xbf16>
    %58 = vector.shape_cast %55 : vector<4x8xbf16> to vector<1x1x1x4x8xbf16>
    tpu.vector_store %arg6[%c0_64, %c0_65, %c3_66, %c0_67, %c0_68], %58 {strides = array<i32>} : memref<1x1x8x4x8xbf16, #tpu.memory_space<vmem>>, vector<1x1x1x4x8xbf16>,
    %c0_69 = arith.constant 0 : index
    %c0_70 = arith.constant 0 : index
    %c2_71 = arith.constant 2 : index
    %c0_72 = arith.constant 0 : index
    %c0_73 = arith.constant 0 : index
    %59 = vector.load %arg3[%c0_69, %c0_70, %c2_71, %c0_72, %c0_73] : memref<1x1x4x4x8xbf16, #tpu.memory_space<vmem>>, vector<1x1x1x4x8xbf16>
    %60 = vector.shape_cast %59 : vector<1x1x1x4x8xbf16> to vector<4x8xbf16>
    %cst_74 = arith.constant dense<0.000000e+00> : vector<4x8xf32>
    %61 = tpu.matmul %60, %40, %cst_74 {dimension_numbers = #tpu.dot_dimension_numbers<[1], [0], [0], [1], [0, 0, 1, 1], [], []>} : vector<4x8xbf16>, vector<8x8xbf16>, vector<4x8xf32> -> vector<4x8xf32>
    %62 = vector.broadcast %0 : vector<1x8xf32> to vector<4x8xf32>
    %63 = arith.addf %61, %62 : vector<4x8xf32>
    %64 = arith.truncf %63 : vector<4x8xf32> to vector<4x8xbf16>
    %c0_75 = arith.constant 0 : index
    %c0_76 = arith.constant 0 : index
    %c5 = arith.constant 5 : index
    %c0_77 = arith.constant 0 : index
    %c0_78 = arith.constant 0 : index
    %65 = vector.load %arg6[%c0_75, %c0_76, %c5, %c0_77, %c0_78] : memref<1x1x8x4x8xbf16, #tpu.memory_space<vmem>>, vector<1x1x1x4x8xbf16>
    %66 = vector.shape_cast %65 : vector<1x1x1x4x8xbf16> to vector<4x8xbf16>
    %67 = vector.shape_cast %64 : vector<4x8xbf16> to vector<1x1x1x4x8xbf16>
    tpu.vector_store %arg6[%c0_75, %c0_76, %c5, %c0_77, %c0_78], %67 {strides = array<i32>} : memref<1x1x8x4x8xbf16, #tpu.memory_space<vmem>>, vector<1x1x1x4x8xbf16>,
    %c0_79 = arith.constant 0 : index
    %c0_80 = arith.constant 0 : index
    %c3_81 = arith.constant 3 : index
    %c0_82 = arith.constant 0 : index
    %c0_83 = arith.constant 0 : index
    %68 = vector.load %arg3[%c0_79, %c0_80, %c3_81, %c0_82, %c0_83] : memref<1x1x4x4x8xbf16, #tpu.memory_space<vmem>>, vector<1x1x1x4x8xbf16>
    %69 = vector.shape_cast %68 : vector<1x1x1x4x8xbf16> to vector<4x8xbf16>
    %cst_84 = arith.constant dense<0.000000e+00> : vector<4x8xf32>
    %70 = tpu.matmul %69, %40, %cst_84 {dimension_numbers = #tpu.dot_dimension_numbers<[1], [0], [0], [1], [0, 0, 1, 1], [], []>} : vector<4x8xbf16>, vector<8x8xbf16>, vector<4x8xf32> -> vector<4x8xf32>
    %71 = vector.broadcast %0 : vector<1x8xf32> to vector<4x8xf32>
    %72 = arith.addf %70, %71 : vector<4x8xf32>
    %73 = arith.truncf %72 : vector<4x8xf32> to vector<4x8xbf16>
    %c0_85 = arith.constant 0 : index
    %c0_86 = arith.constant 0 : index
    %c7 = arith.constant 7 : index
    %c0_87 = arith.constant 0 : index
    %c0_88 = arith.constant 0 : index
    %74 = vector.load %arg6[%c0_85, %c0_86, %c7, %c0_87, %c0_88] : memref<1x1x8x4x8xbf16, #tpu.memory_space<vmem>>, vector<1x1x1x4x8xbf16>
    %75 = vector.shape_cast %74 : vector<1x1x1x4x8xbf16> to vector<4x8xbf16>
    %76 = vector.shape_cast %73 : vector<4x8xbf16> to vector<1x1x1x4x8xbf16>
    tpu.vector_store %arg6[%c0_85, %c0_86, %c7, %c0_87, %c0_88], %76 {strides = array<i32>} : memref<1x1x8x4x8xbf16, #tpu.memory_space<vmem>>, vector<1x1x1x4x8xbf16>,
    return
  }
  func.func @transform_0(%arg0: i32, %arg1: i32, %arg2: i32) -> (i32, i32, i32, i32, i32) {
    %c0_i32 = arith.constant 0 : i32
    %c0_i32_0 = arith.constant 0 : i32
    %c0_i32_1 = arith.constant 0 : i32
    %c0_i32_2 = arith.constant 0 : i32
    return %arg0, %arg1, %c0_i32, %c0_i32_0, %c0_i32_1 : i32, i32, i32, i32, i32
  }
  func.func @transform_1(%arg0: i32, %arg1: i32, %arg2: i32) -> (i32, i32, i32, i32) {
    %c0_i32 = arith.constant 0 : i32
    %c0_i32_0 = arith.constant 0 : i32
    %c0_i32_1 = arith.constant 0 : i32
    %c0_i32_2 = arith.constant 0 : i32
    return %arg2, %c0_i32, %c0_i32_0, %c0_i32_1 : i32, i32, i32, i32
  }
  func.func @transform_2(%arg0: i32, %arg1: i32, %arg2: i32) -> (i32, i32) {
    %c0_i32 = arith.constant 0 : i32
    %c0_i32_0 = arith.constant 0 : i32
    %c0_i32_1 = arith.constant 0 : i32
    return %c0_i32, %c0_i32_0 : i32, i32
  }
  func.func @transform_3(%arg0: i32, %arg1: i32, %arg2: i32) -> (i32, i32, i32, i32, i32) {
    %c2_i32 = arith.constant 2 : i32
    %0 = arith.muli %c2_i32, %arg1 : i32
    %1 = arith.addi %0, %arg2 : i32
    %c0_i32 = arith.constant 0 : i32
    %c0_i32_0 = arith.constant 0 : i32
    %c0_i32_1 = arith.constant 0 : i32
    %c0_i32_2 = arith.constant 0 : i32
    return %arg0, %1, %c0_i32, %c0_i32_0, %c0_i32_1 : i32, i32, i32, i32, i32
  }
}

module attributes {stable_mosaic.version = 11 : i64} {
  func.func @_conv_relu_stats_kernel(%arg0: i32, %arg1: i32, %arg2: i32, %arg3: memref<1x1x10x10x8xbf16, #tpu.memory_space<vmem>>, %arg4: memref<1x3x3x8x4xbf16, #tpu.memory_space<vmem>>, %arg5: memref<1x4xf32, #tpu.memory_space<vmem>>, %arg6: memref<1x1x64x4xf32, #tpu.memory_space<vmem>>, %arg7: memref<1x1x1x4xf32, #tpu.memory_space<vmem>>, %arg8: memref<1x1x1x4xf32, #tpu.memory_space<vmem>>, %arg9: memref<64x4xf32, #tpu.memory_space<vmem>>) attributes {dimension_semantics = [#tpu.dimension_semantics<parallel>, #tpu.dimension_semantics<parallel>, #tpu.dimension_semantics<arbitrary>], iteration_bounds = array<i64: 2, 8, 3>, scalar_prefetch = 0 : i64, scratch_operands = 1 : i64, tpu.core_type = #tpu.core_type<tc>, window_params = [{transform_indices = @transform_0, window_bounds = array<i64: 1, 1, 10, 10, 8>}, {transform_indices = @transform_1, window_bounds = array<i64: 1, 3, 3, 8, 4>}, {pipeline_mode = #tpu.pipeline_mode<synchronous>, transform_indices = @transform_2, window_bounds = array<i64: 1, 4>}, {transform_indices = @transform_3, window_bounds = array<i64: 1, 1, 64, 4>}, {transform_indices = @transform_4, window_bounds = array<i64: 1, 1, 1, 4>}, {transform_indices = @transform_5, window_bounds = array<i64: 1, 1, 1, 4>}]} {
    %c0_i32 = arith.constant 0 : i32
    %0 = arith.cmpi eq, %arg2, %c0_i32 : i32
    %1 = arith.extui %0 : i1 to i32
    %c0_i32_0 = arith.constant 0 : i32
    %2 = arith.cmpi ne, %1, %c0_i32_0 : i32
    scf.if %2 {
      %cst_101 = arith.constant 0.000000e+00 : f32
      %71 = vector.broadcast %cst_101 : f32 to vector<64x4xf32>
      %c0_102 = arith.constant 0 : index
      %c0_103 = arith.constant 0 : index
      %72 = vector.load %arg9[%c0_102, %c0_103] : memref<64x4xf32, #tpu.memory_space<vmem>>, vector<64x4xf32>
      tpu.vector_store %arg9[%c0_102, %c0_103], %71 {strides = array<i32>} : memref<64x4xf32, #tpu.memory_space<vmem>>, vector<64x4xf32>,
    } else {
    }
    %c0 = arith.constant 0 : index
    %c0_1 = arith.constant 0 : index
    %3 = vector.load %arg9[%c0, %c0_1] : memref<64x4xf32, #tpu.memory_space<vmem>>, vector<64x4xf32>
    %c0_2 = arith.constant 0 : index
    %c0_3 = arith.constant 0 : index
    %c0_4 = arith.constant 0 : index
    %c0_5 = arith.constant 0 : index
    %c0_6 = arith.constant 0 : index
    %4 = vector.load %arg3[%c0_2, %c0_3, %c0_4, %c0_5, %c0_6] : memref<1x1x10x10x8xbf16, #tpu.memory_space<vmem>>, vector<1x1x8x8x8xbf16>
    %5 = vector.shape_cast %4 : vector<1x1x8x8x8xbf16> to vector<8x8x8xbf16>
    %6 = vector.shape_cast %5 : vector<8x8x8xbf16> to vector<64x8xbf16>
    %c0_7 = arith.constant 0 : index
    %c0_8 = arith.constant 0 : index
    %c0_9 = arith.constant 0 : index
    %c0_10 = arith.constant 0 : index
    %c0_11 = arith.constant 0 : index
    %7 = vector.load %arg4[%c0_7, %c0_8, %c0_9, %c0_10, %c0_11] : memref<1x3x3x8x4xbf16, #tpu.memory_space<vmem>>, vector<1x1x1x8x4xbf16>
    %8 = vector.shape_cast %7 : vector<1x1x1x8x4xbf16> to vector<8x4xbf16>
    %cst = arith.constant dense<0.000000e+00> : vector<64x4xf32>
    %9 = tpu.matmul %6, %8, %cst {dimension_numbers = #tpu.dot_dimension_numbers<[1], [0], [0], [1], [0, 0, 1, 1], [], []>} : vector<64x8xbf16>, vector<8x4xbf16>, vector<64x4xf32> -> vector<64x4xf32>
    %10 = arith.addf %3, %9 : vector<64x4xf32>
    %c0_12 = arith.constant 0 : index
    %c0_13 = arith.constant 0 : index
    %c0_14 = arith.constant 0 : index
    %c1 = arith.constant 1 : index
    %c0_15 = arith.constant 0 : index
    %11 = vector.load %arg3[%c0_12, %c0_13, %c0_14, %c1, %c0_15] : memref<1x1x10x10x8xbf16, #tpu.memory_space<vmem>>, vector<1x1x8x8x8xbf16>
    %12 = vector.shape_cast %11 : vector<1x1x8x8x8xbf16> to vector<8x8x8xbf16>
    %13 = vector.shape_cast %12 : vector<8x8x8xbf16> to vector<64x8xbf16>
    %c0_16 = arith.constant 0 : index
    %c0_17 = arith.constant 0 : index
    %c1_18 = arith.constant 1 : index
    %c0_19 = arith.constant 0 : index
    %c0_20 = arith.constant 0 : index
    %14 = vector.load %arg4[%c0_16, %c0_17, %c1_18, %c0_19, %c0_20] : memref<1x3x3x8x4xbf16, #tpu.memory_space<vmem>>, vector<1x1x1x8x4xbf16>
    %15 = vector.shape_cast %14 : vector<1x1x1x8x4xbf16> to vector<8x4xbf16>
    %cst_21 = arith.constant dense<0.000000e+00> : vector<64x4xf32>
    %16 = tpu.matmul %13, %15, %cst_21 {dimension_numbers = #tpu.dot_dimension_numbers<[1], [0], [0], [1], [0, 0, 1, 1], [], []>} : vector<64x8xbf16>, vector<8x4xbf16>, vector<64x4xf32> -> vector<64x4xf32>
    %17 = arith.addf %10, %16 : vector<64x4xf32>
    %c0_22 = arith.constant 0 : index
    %c0_23 = arith.constant 0 : index
    %c0_24 = arith.constant 0 : index
    %c2 = arith.constant 2 : index
    %c0_25 = arith.constant 0 : index
    %18 = vector.load %arg3[%c0_22, %c0_23, %c0_24, %c2, %c0_25] : memref<1x1x10x10x8xbf16, #tpu.memory_space<vmem>>, vector<1x1x8x8x8xbf16>
    %19 = vector.shape_cast %18 : vector<1x1x8x8x8xbf16> to vector<8x8x8xbf16>
    %20 = vector.shape_cast %19 : vector<8x8x8xbf16> to vector<64x8xbf16>
    %c0_26 = arith.constant 0 : index
    %c0_27 = arith.constant 0 : index
    %c2_28 = arith.constant 2 : index
    %c0_29 = arith.constant 0 : index
    %c0_30 = arith.constant 0 : index
    %21 = vector.load %arg4[%c0_26, %c0_27, %c2_28, %c0_29, %c0_30] : memref<1x3x3x8x4xbf16, #tpu.memory_space<vmem>>, vector<1x1x1x8x4xbf16>
    %22 = vector.shape_cast %21 : vector<1x1x1x8x4xbf16> to vector<8x4xbf16>
    %cst_31 = arith.constant dense<0.000000e+00> : vector<64x4xf32>
    %23 = tpu.matmul %20, %22, %cst_31 {dimension_numbers = #tpu.dot_dimension_numbers<[1], [0], [0], [1], [0, 0, 1, 1], [], []>} : vector<64x8xbf16>, vector<8x4xbf16>, vector<64x4xf32> -> vector<64x4xf32>
    %24 = arith.addf %17, %23 : vector<64x4xf32>
    %c0_32 = arith.constant 0 : index
    %c0_33 = arith.constant 0 : index
    %c1_34 = arith.constant 1 : index
    %c0_35 = arith.constant 0 : index
    %c0_36 = arith.constant 0 : index
    %25 = vector.load %arg3[%c0_32, %c0_33, %c1_34, %c0_35, %c0_36] : memref<1x1x10x10x8xbf16, #tpu.memory_space<vmem>>, vector<1x1x8x8x8xbf16>
    %26 = vector.shape_cast %25 : vector<1x1x8x8x8xbf16> to vector<8x8x8xbf16>
    %27 = vector.shape_cast %26 : vector<8x8x8xbf16> to vector<64x8xbf16>
    %c0_37 = arith.constant 0 : index
    %c1_38 = arith.constant 1 : index
    %c0_39 = arith.constant 0 : index
    %c0_40 = arith.constant 0 : index
    %c0_41 = arith.constant 0 : index
    %28 = vector.load %arg4[%c0_37, %c1_38, %c0_39, %c0_40, %c0_41] : memref<1x3x3x8x4xbf16, #tpu.memory_space<vmem>>, vector<1x1x1x8x4xbf16>
    %29 = vector.shape_cast %28 : vector<1x1x1x8x4xbf16> to vector<8x4xbf16>
    %cst_42 = arith.constant dense<0.000000e+00> : vector<64x4xf32>
    %30 = tpu.matmul %27, %29, %cst_42 {dimension_numbers = #tpu.dot_dimension_numbers<[1], [0], [0], [1], [0, 0, 1, 1], [], []>} : vector<64x8xbf16>, vector<8x4xbf16>, vector<64x4xf32> -> vector<64x4xf32>
    %31 = arith.addf %24, %30 : vector<64x4xf32>
    %c0_43 = arith.constant 0 : index
    %c0_44 = arith.constant 0 : index
    %c1_45 = arith.constant 1 : index
    %c1_46 = arith.constant 1 : index
    %c0_47 = arith.constant 0 : index
    %32 = vector.load %arg3[%c0_43, %c0_44, %c1_45, %c1_46, %c0_47] : memref<1x1x10x10x8xbf16, #tpu.memory_space<vmem>>, vector<1x1x8x8x8xbf16>
    %33 = vector.shape_cast %32 : vector<1x1x8x8x8xbf16> to vector<8x8x8xbf16>
    %34 = vector.shape_cast %33 : vector<8x8x8xbf16> to vector<64x8xbf16>
    %c0_48 = arith.constant 0 : index
    %c1_49 = arith.constant 1 : index
    %c1_50 = arith.constant 1 : index
    %c0_51 = arith.constant 0 : index
    %c0_52 = arith.constant 0 : index
    %35 = vector.load %arg4[%c0_48, %c1_49, %c1_50, %c0_51, %c0_52] : memref<1x3x3x8x4xbf16, #tpu.memory_space<vmem>>, vector<1x1x1x8x4xbf16>
    %36 = vector.shape_cast %35 : vector<1x1x1x8x4xbf16> to vector<8x4xbf16>
    %cst_53 = arith.constant dense<0.000000e+00> : vector<64x4xf32>
    %37 = tpu.matmul %34, %36, %cst_53 {dimension_numbers = #tpu.dot_dimension_numbers<[1], [0], [0], [1], [0, 0, 1, 1], [], []>} : vector<64x8xbf16>, vector<8x4xbf16>, vector<64x4xf32> -> vector<64x4xf32>
    %38 = arith.addf %31, %37 : vector<64x4xf32>
    %c0_54 = arith.constant 0 : index
    %c0_55 = arith.constant 0 : index
    %c1_56 = arith.constant 1 : index
    %c2_57 = arith.constant 2 : index
    %c0_58 = arith.constant 0 : index
    %39 = vector.load %arg3[%c0_54, %c0_55, %c1_56, %c2_57, %c0_58] : memref<1x1x10x10x8xbf16, #tpu.memory_space<vmem>>, vector<1x1x8x8x8xbf16>
    %40 = vector.shape_cast %39 : vector<1x1x8x8x8xbf16> to vector<8x8x8xbf16>
    %41 = vector.shape_cast %40 : vector<8x8x8xbf16> to vector<64x8xbf16>
    %c0_59 = arith.constant 0 : index
    %c1_60 = arith.constant 1 : index
    %c2_61 = arith.constant 2 : index
    %c0_62 = arith.constant 0 : index
    %c0_63 = arith.constant 0 : index
    %42 = vector.load %arg4[%c0_59, %c1_60, %c2_61, %c0_62, %c0_63] : memref<1x3x3x8x4xbf16, #tpu.memory_space<vmem>>, vector<1x1x1x8x4xbf16>
    %43 = vector.shape_cast %42 : vector<1x1x1x8x4xbf16> to vector<8x4xbf16>
    %cst_64 = arith.constant dense<0.000000e+00> : vector<64x4xf32>
    %44 = tpu.matmul %41, %43, %cst_64 {dimension_numbers = #tpu.dot_dimension_numbers<[1], [0], [0], [1], [0, 0, 1, 1], [], []>} : vector<64x8xbf16>, vector<8x4xbf16>, vector<64x4xf32> -> vector<64x4xf32>
    %45 = arith.addf %38, %44 : vector<64x4xf32>
    %c0_65 = arith.constant 0 : index
    %c0_66 = arith.constant 0 : index
    %c2_67 = arith.constant 2 : index
    %c0_68 = arith.constant 0 : index
    %c0_69 = arith.constant 0 : index
    %46 = vector.load %arg3[%c0_65, %c0_66, %c2_67, %c0_68, %c0_69] : memref<1x1x10x10x8xbf16, #tpu.memory_space<vmem>>, vector<1x1x8x8x8xbf16>
    %47 = vector.shape_cast %46 : vector<1x1x8x8x8xbf16> to vector<8x8x8xbf16>
    %48 = vector.shape_cast %47 : vector<8x8x8xbf16> to vector<64x8xbf16>
    %c0_70 = arith.constant 0 : index
    %c2_71 = arith.constant 2 : index
    %c0_72 = arith.constant 0 : index
    %c0_73 = arith.constant 0 : index
    %c0_74 = arith.constant 0 : index
    %49 = vector.load %arg4[%c0_70, %c2_71, %c0_72, %c0_73, %c0_74] : memref<1x3x3x8x4xbf16, #tpu.memory_space<vmem>>, vector<1x1x1x8x4xbf16>
    %50 = vector.shape_cast %49 : vector<1x1x1x8x4xbf16> to vector<8x4xbf16>
    %cst_75 = arith.constant dense<0.000000e+00> : vector<64x4xf32>
    %51 = tpu.matmul %48, %50, %cst_75 {dimension_numbers = #tpu.dot_dimension_numbers<[1], [0], [0], [1], [0, 0, 1, 1], [], []>} : vector<64x8xbf16>, vector<8x4xbf16>, vector<64x4xf32> -> vector<64x4xf32>
    %52 = arith.addf %45, %51 : vector<64x4xf32>
    %c0_76 = arith.constant 0 : index
    %c0_77 = arith.constant 0 : index
    %c2_78 = arith.constant 2 : index
    %c1_79 = arith.constant 1 : index
    %c0_80 = arith.constant 0 : index
    %53 = vector.load %arg3[%c0_76, %c0_77, %c2_78, %c1_79, %c0_80] : memref<1x1x10x10x8xbf16, #tpu.memory_space<vmem>>, vector<1x1x8x8x8xbf16>
    %54 = vector.shape_cast %53 : vector<1x1x8x8x8xbf16> to vector<8x8x8xbf16>
    %55 = vector.shape_cast %54 : vector<8x8x8xbf16> to vector<64x8xbf16>
    %c0_81 = arith.constant 0 : index
    %c2_82 = arith.constant 2 : index
    %c1_83 = arith.constant 1 : index
    %c0_84 = arith.constant 0 : index
    %c0_85 = arith.constant 0 : index
    %56 = vector.load %arg4[%c0_81, %c2_82, %c1_83, %c0_84, %c0_85] : memref<1x3x3x8x4xbf16, #tpu.memory_space<vmem>>, vector<1x1x1x8x4xbf16>
    %57 = vector.shape_cast %56 : vector<1x1x1x8x4xbf16> to vector<8x4xbf16>
    %cst_86 = arith.constant dense<0.000000e+00> : vector<64x4xf32>
    %58 = tpu.matmul %55, %57, %cst_86 {dimension_numbers = #tpu.dot_dimension_numbers<[1], [0], [0], [1], [0, 0, 1, 1], [], []>} : vector<64x8xbf16>, vector<8x4xbf16>, vector<64x4xf32> -> vector<64x4xf32>
    %59 = arith.addf %52, %58 : vector<64x4xf32>
    %c0_87 = arith.constant 0 : index
    %c0_88 = arith.constant 0 : index
    %c2_89 = arith.constant 2 : index
    %c2_90 = arith.constant 2 : index
    %c0_91 = arith.constant 0 : index
    %60 = vector.load %arg3[%c0_87, %c0_88, %c2_89, %c2_90, %c0_91] : memref<1x1x10x10x8xbf16, #tpu.memory_space<vmem>>, vector<1x1x8x8x8xbf16>
    %61 = vector.shape_cast %60 : vector<1x1x8x8x8xbf16> to vector<8x8x8xbf16>
    %62 = vector.shape_cast %61 : vector<8x8x8xbf16> to vector<64x8xbf16>
    %c0_92 = arith.constant 0 : index
    %c2_93 = arith.constant 2 : index
    %c2_94 = arith.constant 2 : index
    %c0_95 = arith.constant 0 : index
    %c0_96 = arith.constant 0 : index
    %63 = vector.load %arg4[%c0_92, %c2_93, %c2_94, %c0_95, %c0_96] : memref<1x3x3x8x4xbf16, #tpu.memory_space<vmem>>, vector<1x1x1x8x4xbf16>
    %64 = vector.shape_cast %63 : vector<1x1x1x8x4xbf16> to vector<8x4xbf16>
    %cst_97 = arith.constant dense<0.000000e+00> : vector<64x4xf32>
    %65 = tpu.matmul %62, %64, %cst_97 {dimension_numbers = #tpu.dot_dimension_numbers<[1], [0], [0], [1], [0, 0, 1, 1], [], []>} : vector<64x8xbf16>, vector<8x4xbf16>, vector<64x4xf32> -> vector<64x4xf32>
    %66 = arith.addf %59, %65 : vector<64x4xf32>
    %c0_98 = arith.constant 0 : index
    %c0_99 = arith.constant 0 : index
    %67 = vector.load %arg9[%c0_98, %c0_99] : memref<64x4xf32, #tpu.memory_space<vmem>>, vector<64x4xf32>
    tpu.vector_store %arg9[%c0_98, %c0_99], %66 {strides = array<i32>} : memref<64x4xf32, #tpu.memory_space<vmem>>, vector<64x4xf32>,
    %c2_i32 = arith.constant 2 : i32
    %68 = arith.cmpi eq, %arg2, %c2_i32 : i32
    %69 = arith.extui %68 : i1 to i32
    %c0_i32_100 = arith.constant 0 : i32
    %70 = arith.cmpi ne, %69, %c0_i32_100 : i32
    scf.if %70 {
      %c0_101 = arith.constant 0 : index
      %c0_102 = arith.constant 0 : index
      %71 = vector.load %arg9[%c0_101, %c0_102] : memref<64x4xf32, #tpu.memory_space<vmem>>, vector<64x4xf32>
      %c0_103 = arith.constant 0 : index
      %c0_104 = arith.constant 0 : index
      %72 = vector.load %arg5[%c0_103, %c0_104] : memref<1x4xf32, #tpu.memory_space<vmem>>, vector<1x4xf32>
      %73 = vector.broadcast %72 : vector<1x4xf32> to vector<64x4xf32>
      %74 = arith.addf %71, %73 : vector<64x4xf32>
      %cst_105 = arith.constant 0.000000e+00 : f32
      %75 = vector.broadcast %cst_105 : f32 to vector<64x4xf32>
      %76 = arith.maximumf %74, %75 : vector<64x4xf32>
      %c0_106 = arith.constant 0 : index
      %c0_107 = arith.constant 0 : index
      %c0_108 = arith.constant 0 : index
      %c0_109 = arith.constant 0 : index
      %77 = vector.load %arg6[%c0_106, %c0_107, %c0_108, %c0_109] : memref<1x1x64x4xf32, #tpu.memory_space<vmem>>, vector<1x1x64x4xf32>
      %78 = vector.shape_cast %77 : vector<1x1x64x4xf32> to vector<64x4xf32>
      %79 = vector.shape_cast %76 : vector<64x4xf32> to vector<1x1x64x4xf32>
      tpu.vector_store %arg6[%c0_106, %c0_107, %c0_108, %c0_109], %79 {strides = array<i32>} : memref<1x1x64x4xf32, #tpu.memory_space<vmem>>, vector<1x1x64x4xf32>,
      %cst_110 = arith.constant dense<0.000000e+00> : vector<4xf32>
      %80 = vector.multi_reduction <add>, %76, %cst_110 [0] : vector<64x4xf32> to vector<4xf32>
      %81 = vector.shape_cast %80 : vector<4xf32> to vector<1x4xf32>
      %c0_111 = arith.constant 0 : index
      %c0_112 = arith.constant 0 : index
      %c0_113 = arith.constant 0 : index
      %c0_114 = arith.constant 0 : index
      %82 = vector.load %arg7[%c0_111, %c0_112, %c0_113, %c0_114] : memref<1x1x1x4xf32, #tpu.memory_space<vmem>>, vector<1x1x1x4xf32>
      %83 = vector.shape_cast %82 : vector<1x1x1x4xf32> to vector<1x4xf32>
      %84 = vector.shape_cast %81 : vector<1x4xf32> to vector<1x1x1x4xf32>
      tpu.vector_store %arg7[%c0_111, %c0_112, %c0_113, %c0_114], %84 {strides = array<i32>} : memref<1x1x1x4xf32, #tpu.memory_space<vmem>>, vector<1x1x1x4xf32>,
      %85 = arith.mulf %76, %76 : vector<64x4xf32>
      %cst_115 = arith.constant dense<0.000000e+00> : vector<4xf32>
      %86 = vector.multi_reduction <add>, %85, %cst_115 [0] : vector<64x4xf32> to vector<4xf32>
      %87 = vector.shape_cast %86 : vector<4xf32> to vector<1x4xf32>
      %c0_116 = arith.constant 0 : index
      %c0_117 = arith.constant 0 : index
      %c0_118 = arith.constant 0 : index
      %c0_119 = arith.constant 0 : index
      %88 = vector.load %arg8[%c0_116, %c0_117, %c0_118, %c0_119] : memref<1x1x1x4xf32, #tpu.memory_space<vmem>>, vector<1x1x1x4xf32>
      %89 = vector.shape_cast %88 : vector<1x1x1x4xf32> to vector<1x4xf32>
      %90 = vector.shape_cast %87 : vector<1x4xf32> to vector<1x1x1x4xf32>
      tpu.vector_store %arg8[%c0_116, %c0_117, %c0_118, %c0_119], %90 {strides = array<i32>} : memref<1x1x1x4xf32, #tpu.memory_space<vmem>>, vector<1x1x1x4xf32>,
    } else {
    }
    return
  }
  func.func @transform_0(%arg0: i32, %arg1: i32, %arg2: i32) -> (i32, i32, i32, i32, i32) {
    %0 = arith.addi %arg1, %arg2 : i32
    %c0_i32 = arith.constant 0 : i32
    %c0_i32_0 = arith.constant 0 : i32
    %c0_i32_1 = arith.constant 0 : i32
    %c0_i32_2 = arith.constant 0 : i32
    return %arg0, %0, %c0_i32, %c0_i32_0, %c0_i32_1 : i32, i32, i32, i32, i32
  }
  func.func @transform_1(%arg0: i32, %arg1: i32, %arg2: i32) -> (i32, i32, i32, i32, i32) {
    %c0_i32 = arith.constant 0 : i32
    %c0_i32_0 = arith.constant 0 : i32
    %c0_i32_1 = arith.constant 0 : i32
    %c0_i32_2 = arith.constant 0 : i32
    %c0_i32_3 = arith.constant 0 : i32
    return %arg2, %c0_i32, %c0_i32_0, %c0_i32_1, %c0_i32_2 : i32, i32, i32, i32, i32
  }
  func.func @transform_2(%arg0: i32, %arg1: i32, %arg2: i32) -> (i32, i32) {
    %c0_i32 = arith.constant 0 : i32
    %c0_i32_0 = arith.constant 0 : i32
    %c0_i32_1 = arith.constant 0 : i32
    return %c0_i32, %c0_i32_0 : i32, i32
  }
  func.func @transform_3(%arg0: i32, %arg1: i32, %arg2: i32) -> (i32, i32, i32, i32) {
    %c0_i32 = arith.constant 0 : i32
    %c0_i32_0 = arith.constant 0 : i32
    %c0_i32_1 = arith.constant 0 : i32
    return %arg0, %arg1, %c0_i32, %c0_i32_0 : i32, i32, i32, i32
  }
  func.func @transform_4(%arg0: i32, %arg1: i32, %arg2: i32) -> (i32, i32, i32, i32) {
    %c0_i32 = arith.constant 0 : i32
    %c0_i32_0 = arith.constant 0 : i32
    %c0_i32_1 = arith.constant 0 : i32
    return %arg0, %arg1, %c0_i32, %c0_i32_0 : i32, i32, i32, i32
  }
  func.func @transform_5(%arg0: i32, %arg1: i32, %arg2: i32) -> (i32, i32, i32, i32) {
    %c0_i32 = arith.constant 0 : i32
    %c0_i32_0 = arith.constant 0 : i32
    %c0_i32_1 = arith.constant 0 : i32
    return %arg0, %arg1, %c0_i32, %c0_i32_0 : i32, i32, i32, i32
  }
}

module attributes {stable_mosaic.version = 11 : i64} {
  func.func @_bn_apply_kernel(%arg0: i32, %arg1: i32, %arg2: memref<1x1x64x4xf32, #tpu.memory_space<vmem>>, %arg3: memref<1x4xf32, #tpu.memory_space<vmem>>, %arg4: memref<1x4xf32, #tpu.memory_space<vmem>>, %arg5: memref<1x1x64x4xf32, #tpu.memory_space<vmem>>) attributes {dimension_semantics = [#tpu.dimension_semantics<parallel>, #tpu.dimension_semantics<parallel>], iteration_bounds = array<i64: 2, 8>, scalar_prefetch = 0 : i64, scratch_operands = 0 : i64, tpu.core_type = #tpu.core_type<tc>, window_params = [{transform_indices = @transform_0, window_bounds = array<i64: 1, 1, 64, 4>}, {pipeline_mode = #tpu.pipeline_mode<synchronous>, transform_indices = @transform_1, window_bounds = array<i64: 1, 4>}, {pipeline_mode = #tpu.pipeline_mode<synchronous>, transform_indices = @transform_2, window_bounds = array<i64: 1, 4>}, {transform_indices = @transform_3, window_bounds = array<i64: 1, 1, 64, 4>}]} {
    %c0 = arith.constant 0 : index
    %c0_0 = arith.constant 0 : index
    %c0_1 = arith.constant 0 : index
    %c0_2 = arith.constant 0 : index
    %0 = vector.load %arg2[%c0, %c0_0, %c0_1, %c0_2] : memref<1x1x64x4xf32, #tpu.memory_space<vmem>>, vector<1x1x64x4xf32>
    %1 = vector.shape_cast %0 : vector<1x1x64x4xf32> to vector<64x4xf32>
    %c0_3 = arith.constant 0 : index
    %c0_4 = arith.constant 0 : index
    %2 = vector.load %arg3[%c0_3, %c0_4] : memref<1x4xf32, #tpu.memory_space<vmem>>, vector<1x4xf32>
    %3 = vector.broadcast %2 : vector<1x4xf32> to vector<64x4xf32>
    %4 = arith.mulf %1, %3 : vector<64x4xf32>
    %c0_5 = arith.constant 0 : index
    %c0_6 = arith.constant 0 : index
    %5 = vector.load %arg4[%c0_5, %c0_6] : memref<1x4xf32, #tpu.memory_space<vmem>>, vector<1x4xf32>
    %6 = vector.broadcast %5 : vector<1x4xf32> to vector<64x4xf32>
    %7 = arith.addf %4, %6 : vector<64x4xf32>
    %c0_7 = arith.constant 0 : index
    %c0_8 = arith.constant 0 : index
    %c0_9 = arith.constant 0 : index
    %c0_10 = arith.constant 0 : index
    %8 = vector.load %arg5[%c0_7, %c0_8, %c0_9, %c0_10] : memref<1x1x64x4xf32, #tpu.memory_space<vmem>>, vector<1x1x64x4xf32>
    %9 = vector.shape_cast %8 : vector<1x1x64x4xf32> to vector<64x4xf32>
    %10 = vector.shape_cast %7 : vector<64x4xf32> to vector<1x1x64x4xf32>
    tpu.vector_store %arg5[%c0_7, %c0_8, %c0_9, %c0_10], %10 {strides = array<i32>} : memref<1x1x64x4xf32, #tpu.memory_space<vmem>>, vector<1x1x64x4xf32>,
    return
  }
  func.func @transform_0(%arg0: i32, %arg1: i32) -> (i32, i32, i32, i32) {
    %c0_i32 = arith.constant 0 : i32
    %c0_i32_0 = arith.constant 0 : i32
    %c0_i32_1 = arith.constant 0 : i32
    return %arg0, %arg1, %c0_i32, %c0_i32_0 : i32, i32, i32, i32
  }
  func.func @transform_1(%arg0: i32, %arg1: i32) -> (i32, i32) {
    %c0_i32 = arith.constant 0 : i32
    %c0_i32_0 = arith.constant 0 : i32
    %c0_i32_1 = arith.constant 0 : i32
    return %c0_i32, %c0_i32_0 : i32, i32
  }
  func.func @transform_2(%arg0: i32, %arg1: i32) -> (i32, i32) {
    %c0_i32 = arith.constant 0 : i32
    %c0_i32_0 = arith.constant 0 : i32
    %c0_i32_1 = arith.constant 0 : i32
    return %c0_i32, %c0_i32_0 : i32, i32
  }
  func.func @transform_3(%arg0: i32, %arg1: i32) -> (i32, i32, i32, i32) {
    %c0_i32 = arith.constant 0 : i32
    %c0_i32_0 = arith.constant 0 : i32
    %c0_i32_1 = arith.constant 0 : i32
    return %arg0, %arg1, %c0_i32, %c0_i32_0 : i32, i32, i32, i32
  }
}

</mosaic_0001>

<llo_original>
// kernel: tile.9
$region0: #{tile.9}
  %s0 = inlined_call_operand.vmem [shape: f32[2,4], index: 0, kind: input, shape index: {}]
  %s1 = inlined_call_operand.vmem [shape: f32[1,8], index: 1, kind: output, shape index: {}]
  $region1: #{tile.9} parent=0
    #allocation0 [shape = 'u8[4096]{0}', space=vmem, size = 0x1000, scoped, tag = 'scoped mem for output reshape']
    #allocation1 [shape = 'u8[4096]{0}', space=vmem, size = 0x1000, scoped, tag = 'scoped mem for input reshape']
    %s3 = sshll.u32 1, 2
    %s4 = ssub.s32 %s3, 1
    %v5 = vld [vmem:[%s0] sm:%s4]
    %6 = vst [vmem:[#allocation1] sm:%s4] %v5
    %v7 = vld [vmem:[#allocation1] sm:$0x1]
    %vm8 = vcmask 31744
    %9 = vst.msk [vmem:[#allocation0] sm:$0x1] %vm8, %v7
    %s10 = scalar_lea.vmem [#allocation1], 1
    %v11 = vld [vmem:[%s10] sm:$0x1]
    %12 = vrot.lane.b32.xlu0 %v11, 4
    %v13 = vpop.permute.xlu0 %12
    %vm14 = vcmask 64544
    %15 = vst.msk [vmem:[#allocation0] sm:$0x1] %vm14, %v13
    %s17 = sshll.u32 1, 1
    %s18 = ssub.s32 %s17, 1
    %v20 = vld [vmem:[#allocation0] sm:%s18]
    %s21 = sshll.u32 1, 1
    %s22 = ssub.s32 %s21, 1
    %23 = vst [vmem:[%s1] sm:%s22] %v20

// kernel: tile.8
$region0: #{tile.8}
  #allocation2 [shape = 's32[1]{0}', space=sflag, size = 0x4, scoped, tag = 'scoped memory for tile.8']
  %s0 = inlined_call_operand.hbm [shape: f32[4], index: 0, kind: input, shape index: {}]
  %s1 = inlined_call_operand.vmem [shape: f32[2,4], index: 1, kind: output, shape index: {}]
  $region1: #{tile.8} parent=0
    #allocation0 [shape = 'u8[512]{0}', space=vmem, size = 0x400, scoped, tag = 'operand span for operand 0']
    #allocation1 [shape = 's32[1]{0}', space=sflag, size = 0x4, scoped, tag = 'scoped memory for tile.8']
    %2 = vsyncpa [#allocation1], 0
    // Predicated region
    $region2: #{tile.8} parent=1 // pred_check
      _
    $region3: #{tile.8} parent=1 // pred_check_branch
      %4 = sbr.rel (0) target = $region5
    $region4: #{tile.8} parent=1 // pred_region
      %s6 = ssub.s32 16, 16
      %7 = vsyncadd [#allocation1], %s6
      %s9 = sshll.u32 [#allocation0], 4
      %s10 = int_to_ptr.vmem [resolvable:$true] %s9
      %12 = dma.hbm_to_vmem [thread:$0]  %s0, 16, %s10, [#allocation1]
    $region5: #{tile.8} parent=1 // pred_fallthru
      _
    // Predicated region
    $region6: #{tile.8} parent=1 // pred_check
      _
    $region7: #{tile.8} parent=1 // pred_check_branch
      %14 = sbr.rel (0) target = $region9
    $region8: #{tile.8} parent=1 // pred_region
      %15 = dma.done [#allocation1], 16
    $region9: #{tile.8} parent=1 // pred_fallthru
      _
    %v16 = vld [vmem:[#allocation0] ss:$0 sm:$0xff]
    %17 = vst [vmem:[%s1] sm:$0x3] %v16
    %18 = vsyncpa [#allocation1], 1

// kernel: decode_forward.3
$region0: #{decode_forward.3}
  #allocation0 [shape = 'u32[]', space=smem, size = 0x4, offset = 0x4, fixed_abs, tag = 'smem constant byte address 0x4 - core index']
  #allocation1 [shape = 'u32[144,128]{1,0:T(1,128)}', space=vmem, size = 0x12000, scoped, tag = 'internal scratch']
  %s0 = inlined_call_operand.vmem [shape: bf16[2,4,4,4,8], index: 0, kind: input, shape index: {}]
  %s1 = inlined_call_operand.vmem [shape: bf16[2,2,8,8], index: 1, kind: input, shape index: {}]
  %s2 = inlined_call_operand.vmem [shape: f32[1,8], index: 2, kind: input, shape index: {}]
  %s3 = inlined_call_operand.vmem [shape: bf16[2,8,8,4,8], index: 3, kind: output, shape index: {}]
  %s4 = sld [smem:[#allocation0]]
  $region45: #{decode_forward.3} parent=0
    _
  %s6 = ssub.s32 1, %s4
  %s7 = scalar_select 0, %s6, %s4
  loop: start=0, step=1, limit=18
  $region2: #{decode_forward.3} parent=0 // loop_pre_header
    _
  $region3: #{decode_forward.3} parent=0 // loop_header
    %s9 = sphi 0, %s13
    %p10 = scmp.ge.s32.totalorder %s9, 18
    %s16 = sphi 0, %s35
    %s17 = sphi 0, %s31
    %s18 = sphi 0, %s27
    %s19 = sphi 0, %s16
    %s20 = sphi 0, %s17
    %s21 = sphi 0, %s18
    %s22 = sphi 0, %s19
    %s23 = sphi 0, %s20
    %s24 = sphi 0, %s21
    %s40 = sphi 0, %s42
    %s43 = sphi 0, %s40
    %s44 = sphi 0, %s43
    %s60 = sphi 0, %s44
    %s66 = sphi 0, %s68
    %s69 = sphi 0, %s66
    %s70 = sphi 0, %s69
    %s86 = sphi 0, %s70
    %s90 = sphi 0, %s90
    %s92 = sphi 0, %s90
    %s93 = sphi 0, %s92
    %s107 = sphi 0, %s93
    %s119 = sphi 0, %s121
    %s122 = sphi 0, %s119
    %s123 = sphi 0, %s122
    %s139 = sphi 0, %s123
  $region4: #{decode_forward.3} parent=0 // loop_header_branch
    %12 = sbr.rel (%p10) target = $region8
  $region5: #{decode_forward.3} parent=0 // loop_body
    %s14 = ssub.s32 %s9, 1
    %s15 = ssub.s32 %s9, 2
    %s25 = sadd.s32 1, %s18
    %p26 = scmp.ge.s32.totalorder %s25, 2
    %s27 = scalar_select %p26, 0, %s25
    %s28 = sadd.s32 1, %s17
    %s29 = scalar_select %p26, %s28, %s17
    %p30 = scmp.ge.s32.totalorder %s29, 4
    %s31 = scalar_select %p30, 0, %s29
    %s32 = sadd.s32 1, %s16
    %s33 = scalar_select %p30, %s32, %s16
    %p34 = scmp.ge.s32.totalorder %s33, 2
    %s35 = scalar_select %p34, 0, %s33
    %s36 = ssub.s32 %s16, %s35
    %s37 = ssub.s32 %s17, %s31
    %s38 = sor.u32 %s36, %s37
    %p39 = scmp.eq.s32.totalorder %s38, 0
    %s41 = sadd.s32 %s40, 1
    %s42 = scalar_select %p39, %s40, %s41
    %p45 = pneg %p39
    %p46 = scmp.eq.s32.totalorder %s9, 15
    %p47 = por %p45, %p46
    %p48 = scmp.ne.s32.totalorder %s40, %s43
    %p49 = scmp.eq.s32.totalorder %s9, 0
    %p50 = por %p48, %p49
    %p51 = scmp.ne.s32.totalorder %s40, %s43
    %p52 = scmp.eq.s32.totalorder %s14, 15
    %p53 = por %p51, %p52
    %p54 = scmp.ne.s32.totalorder %s43, %s44
    %p55 = scmp.eq.s32.totalorder %s14, 0
    %p56 = por %p54, %p55
    %p57 = scmp.ne.s32.totalorder %s43, %s44
    %p58 = scmp.eq.s32.totalorder %s15, 15
    %p59 = por %p57, %p58
    %p61 = scmp.ne.s32.totalorder %s44, %s60
    %p62 = scmp.eq.s32.totalorder %s15, 0
    %p63 = por %p61, %p62
    %s64 = ssub.s32 %s18, %s27
    %p65 = scmp.eq.s32.totalorder %s64, 0
    %s67 = sadd.s32 %s66, 1
    %s68 = scalar_select %p65, %s66, %s67
    %p71 = pneg %p65
    %p72 = scmp.eq.s32.totalorder %s9, 15
    %p73 = por %p71, %p72
    %p74 = scmp.ne.s32.totalorder %s66, %s69
    %p75 = scmp.eq.s32.totalorder %s9, 0
    %p76 = por %p74, %p75
    %p77 = scmp.ne.s32.totalorder %s66, %s69
    %p78 = scmp.eq.s32.totalorder %s14, 15
    %p79 = por %p77, %p78
    %p80 = scmp.ne.s32.totalorder %s69, %s70
    %p81 = scmp.eq.s32.totalorder %s14, 0
    %p82 = por %p80, %p81
    %p83 = scmp.ne.s32.totalorder %s69, %s70
    %p84 = scmp.eq.s32.totalorder %s15, 15
    %p85 = por %p83, %p84
    %p87 = scmp.ne.s32.totalorder %s70, %s86
    %p88 = scmp.eq.s32.totalorder %s15, 0
    %p89 = por %p87, %p88
    %s91 = sadd.s32 %s90, 1
    %p94 = scmp.eq.s32.totalorder %s9, 15
    %p95 = scmp.ne.s32.totalorder %s90, %s92
    %p96 = scmp.eq.s32.totalorder %s9, 0
    %p97 = por %p95, %p96
    %p98 = scmp.ne.s32.totalorder %s90, %s92
    %p99 = scmp.eq.s32.totalorder %s14, 15
    %p100 = por %p98, %p99
    %p101 = scmp.ne.s32.totalorder %s92, %s93
    %p102 = scmp.eq.s32.totalorder %s14, 0
    %p103 = por %p101, %p102
    %p104 = scmp.ne.s32.totalorder %s92, %s93
    %p105 = scmp.eq.s32.totalorder %s15, 15
    %p106 = por %p104, %p105
    %p108 = scmp.ne.s32.totalorder %s93, %s107
    %p109 = scmp.eq.s32.totalorder %s15, 0
    %p110 = por %p108, %p109
    %s111 = smul.u32 %s17, 2
    %s112 = sadd.s32 %s111, %s18
    %s113 = smul.u32 %s31, 2
    %s114 = sadd.s32 %s113, %s27
    %s115 = ssub.s32 %s16, %s35
    %s116 = ssub.s32 %s112, %s114
    %s117 = sor.u32 %s115, %s116
    %p118 = scmp.eq.s32.totalorder %s117, 0
    %s120 = sadd.s32 %s119, 1
    %s121 = scalar_select %p118, %s119, %s120
    %p124 = pneg %p118
    %p125 = scmp.eq.s32.totalorder %s9, 15
    %p126 = por %p124, %p125
    %p127 = scmp.ne.s32.totalorder %s119, %s122
    %p128 = scmp.eq.s32.totalorder %s9, 0
    %p129 = por %p127, %p128
    %p130 = scmp.ne.s32.totalorder %s119, %s122
    %p131 = scmp.eq.s32.totalorder %s14, 15
    %p132 = por %p130, %p131
    %p133 = scmp.ne.s32.totalorder %s122, %s123
    %p134 = scmp.eq.s32.totalorder %s14, 0
    %p135 = por %p133, %p134
    %p136 = scmp.ne.s32.totalorder %s122, %s123
    %p137 = scmp.eq.s32.totalorder %s15, 15
    %p138 = por %p136, %p137
    %p140 = scmp.ne.s32.totalorder %s123, %s139
    %p141 = scmp.eq.s32.totalorder %s15, 0
    %p142 = por %p140, %p141
    %p143 = scmp.le.s32.totalorder 1, %s9
    %p144 = scmp.lt.s32.totalorder %s9, 17
    %p145 = pnand %p143, %p144
    %p146 = pneg %p145
    // Predicated region
    $region9: #{decode_forward.3} parent=5 // pred_check
      _
    $region10: #{decode_forward.3} parent=5 // pred_check_branch
      %148 = sbr.rel (%p145) target = $region12
    $region11: #{decode_forward.3} parent=5 // pred_region
      %s149 = ssub.s32 %s9, 1
      // Predicated region
      $region13: #{decode_forward.3} parent=11 // pred_check
        %p150 = pneg %p103
      $region14: #{decode_forward.3} parent=11 // pred_check_branch
        %152 = sbr.rel (%p150) target = $region16
      $region15: #{decode_forward.3} parent=11 // pred_region
        _
      $region16: #{decode_forward.3} parent=11 // pred_fallthru
        _
    $region12: #{decode_forward.3} parent=5 // pred_fallthru
      _
    %p153 = scmp.lt.s32.totalorder %s9, 16
    // Predicated region
    $region17: #{decode_forward.3} parent=5 // pred_check
      %p154 = pneg %p153
    $region18: #{decode_forward.3} parent=5 // pred_check_branch
      %156 = sbr.rel (%p154) target = $region20
    $region19: #{decode_forward.3} parent=5 // pred_region
      // Predicated region
      $region21: #{decode_forward.3} parent=19 // pred_check
        %p157 = pneg %p50
      $region22: #{decode_forward.3} parent=19 // pred_check_branch
        %159 = sbr.rel (%p157) target = $region24
      $region23: #{decode_forward.3} parent=19 // pred_region
        %p160 = scmp.lt.s32.totalorder %s16, 1
        %s161 = scalar_select %p160, %s16, 1
        %p162 = scmp.lt.s32.totalorder %s17, 3
        %s163 = scalar_select %p162, %s17, 3
        %s164 = smul.addr %s163, 4
        %s165 = smul.addr %s161, 16
        %s166 = sadd.s32 %s164, %s165
        %s167 = smul.addr %s166, 2
        %s168 = scalar_lea.vmem %s0, %s167
      $region24: #{decode_forward.3} parent=19 // pred_fallthru
        _
      // Predicated region
      $region25: #{decode_forward.3} parent=19 // pred_check
        %p169 = pneg %p76
      $region26: #{decode_forward.3} parent=19 // pred_check_branch
        %171 = sbr.rel (%p169) target = $region28
      $region27: #{decode_forward.3} parent=19 // pred_region
        %p172 = scmp.lt.s32.totalorder %s18, 1
        %s173 = scalar_select %p172, %s18, 1
        %s174 = smul.addr %s173, 2
        %s175 = smul.addr %s174, 4
        %s176 = scalar_lea.vmem %s1, %s175
      $region28: #{decode_forward.3} parent=19 // pred_fallthru
        _
    $region20: #{decode_forward.3} parent=5 // pred_fallthru
      _
    %p177 = scmp.le.s32.totalorder 1, %s9
    %p178 = scmp.lt.s32.totalorder %s9, 17
    %p179 = pnand %p177, %p178
    %p180 = pneg %p179
    // Predicated region
    $region29: #{decode_forward.3} parent=5 // pred_check
      _
    $region30: #{decode_forward.3} parent=5 // pred_check_branch
      %182 = sbr.rel (%p179) target = $region32
    $region31: #{decode_forward.3} parent=5 // pred_region
      %s183 = ssub.s32 %s9, 1
      %p184 = scmp.lt.s32.totalorder %s19, 1
      %s185 = scalar_select %p184, %s19, 1
      %p186 = scmp.lt.s32.totalorder %s20, 3
      %s187 = scalar_select %p186, %s20, 3
      %s188 = smul.addr %s187, 4
      %s189 = smul.addr %s185, 16
      %s190 = sadd.s32 %s188, %s189
      %s191 = smul.addr %s190, 2
      %s192 = scalar_lea.vmem %s0, %s191
      %p193 = pneg %p56
      %p194 = pneg %p53
      %p195 = scmp.lt.s32.totalorder %s21, 1
      %s196 = scalar_select %p195, %s21, 1
      %s197 = smul.addr %s196, 2
      %s198 = smul.addr %s197, 4
      %s199 = scalar_lea.vmem %s1, %s198
      %p200 = pneg %p82
      %p201 = pneg %p79
      %p202 = pneg %p103
      %p203 = pneg %p100
      %p204 = pneg %p135
      %p205 = pneg %p132
      %s206 = smul.u32 %s20, 2
      %s207 = sadd.s32 %s206, %s21
      %p208 = scmp.lt.s32.totalorder %s19, 1
      %s209 = scalar_select %p208, %s19, 1
      %p210 = scmp.lt.s32.totalorder %s207, 7
      %s211 = scalar_select %p210, %s207, 7
      %s212 = smul.addr %s211, 8
      %s213 = smul.addr %s209, 64
      %s214 = sadd.s32 %s212, %s213
      %s215 = smul.addr %s214, 2
      %s216 = scalar_lea.vmem %s3, %s215
      %p217 = scmp.lt.s32.totalorder %s19, 1
      %s218 = scalar_select %p217, %s19, 1
      %p219 = scmp.lt.s32.totalorder %s20, 3
      %s220 = scalar_select %p219, %s20, 3
      %s221 = smul.addr %s220, 4
      %s222 = smul.addr %s218, 16
      %s223 = sadd.s32 %s221, %s222
      %s224 = smul.addr %s223, 2
      %s225 = scalar_lea.vmem %s0, %s224
      %p226 = scmp.lt.s32.totalorder %s21, 1
      %s227 = scalar_select %p226, %s21, 1
      %s228 = smul.addr %s227, 2
      %s229 = smul.addr %s228, 4
      %s230 = scalar_lea.vmem %s1, %s229
      %s231 = smul.u32 %s20, 2
      %s232 = sadd.s32 %s231, %s21
      %p233 = scmp.lt.s32.totalorder %s19, 1
      %s234 = scalar_select %p233, %s19, 1
      %p235 = scmp.lt.s32.totalorder %s232, 7
      %s236 = scalar_select %p235, %s232, 7
      %s237 = smul.addr %s236, 8
      %s238 = smul.addr %s234, 64
      %s239 = sadd.s32 %s237, %s238
      %s240 = smul.addr %s239, 2
      %s241 = scalar_lea.vmem %s3, %s240
      %s242 = smul.u32 %s20, 2
      %s243 = sadd.s32 %s242, %s21
      %v245 = vld [vmem:[%s2] sm:$0x1]
      %v246 = vld [vmem:[%s230] sm:$0xf]
      %v247 = vld [vmem:[%s225] sm:$0x3]
      %v249 = vlaneseq
      %v250 = vshrl.u32 %v249, 7
      %v251 = vsub.s32 0, %v250
      %v252 = vrot.slane %v245, %v251
      %vm254 = vcmask 64512
      %v256 = vsel %vm254, %v247, 0
      %vm258 = vcmask 1043456
      %v260 = vsel %vm258, %v246, 0
      %262 = vmatprep.subr.bf16.mxu0 0
      %263 = vmatpush1.bf16.msra.mxu0 0
      %264 = vmatprep.subr.bf16.mxu0 0
      %265 = vmatpush1.bf16.msra.mxu0 0
      %266 = vmatprep.subr.bf16.mxu0 0
      %267 = vmatpush1.bf16.msra.mxu0 0
      %268 = vmatprep.subr.bf16.mxu0 0
      %269 = vmatpush1.bf16.msra.mxu0 0
      %270 = vmatprep.subr.bf16.mxu0 0
      %271 = vmatpush1.bf16.msra.mxu0 0
      %272 = vmatprep.subr.bf16.mxu0 0
      %273 = vmatpush1.bf16.msra.mxu0 0
      %274 = vmatprep.subr.bf16.mxu0 0
      %275 = vmatpush1.bf16.msra.mxu0 0
      %276 = vmatprep.subr.bf16.mxu0 0
      %277 = vmatpush1.bf16.msra.mxu0 %v260
      %278 = vmatprep.subr.bf16.mxu0 0
      %279 = vmatpush2.bf16.msra.mxu0 0
      %280 = vmatprep.subr.bf16.mxu0 0
      %281 = vmatpush2.bf16.msra.mxu0 0
      %282 = vmatprep.subr.bf16.mxu0 0
      %283 = vmatpush2.bf16.msra.mxu0 0
      %284 = vmatprep.subr.bf16.mxu0 0
      %285 = vmatpush2.bf16.msra.mxu0 0
      %286 = vmatprep.subr.bf16.mxu0 0
      %287 = vmatpush2.bf16.msra.mxu0 0
      %288 = vmatprep.subr.bf16.mxu0 0
      %289 = vmatpush2.bf16.msra.mxu0 0
      %290 = vmatprep.subr.bf16.mxu0 0
      %291 = vmatpush2.bf16.msra.mxu0 0
      %292 = vmatprep.subr.bf16.mxu0 0
      %293 = vmatpush2.bf16.msra.mxu0 0
      %294 = vmatprep.mubr.bf16.mxu0 0
      %295 = vmatmul.mubr.bf16.gmra.mxu0 %v256
      %v296 = vpop.f32.mrf.mxu0
      %v297 = vadd.f32 %v252, %v296
      %v298 = vpop.f32.mrf.mxu0
      %v299 = vpop.f32.mrf.mxu0
      %v300 = vpop.f32.mrf.mxu0
      %301 = vdwg.mxu0
      %v302 = vpack.c.bf16 %v297, %v297
      %vm303 = vcmask 58368
      %304 = vst.msk [vmem:[%s241] sm:$0x3] %vm303, %v302
      %s305 = scalar_lea.vmem %s225, 2
      %v306 = vld [vmem:[%s305] sm:$0x3]
      %v308 = vsel %vm254, %v306, 0
      %310 = vmatprep.subr.bf16.mxu0 0
      %311 = vmatpush1.bf16.msra.mxu0 0
      %312 = vmatprep.subr.bf16.mxu0 0
      %313 = vmatpush1.bf16.msra.mxu0 0
      %314 = vmatprep.subr.bf16.mxu0 0
      %315 = vmatpush1.bf16.msra.mxu0 0
      %316 = vmatprep.subr.bf16.mxu0 0
      %317 = vmatpush1.bf16.msra.mxu0 0
      %318 = vmatprep.subr.bf16.mxu0 0
      %319 = vmatpush1.bf16.msra.mxu0 0
      %320 = vmatprep.subr.bf16.mxu0 0
      %321 = vmatpush1.bf16.msra.mxu0 0
      %322 = vmatprep.subr.bf16.mxu0 0
      %323 = vmatpush1.bf16.msra.mxu0 0
      %324 = vmatprep.subr.bf16.mxu0 0
      %325 = vmatpush1.bf16.msra.mxu0 %v260
      %326 = vmatprep.subr.bf16.mxu0 0
      %327 = vmatpush2.bf16.msra.mxu0 0
      %328 = vmatprep.subr.bf16.mxu0 0
      %329 = vmatpush2.bf16.msra.mxu0 0
      %330 = vmatprep.subr.bf16.mxu0 0
      %331 = vmatpush2.bf16.msra.mxu0 0
      %332 = vmatprep.subr.bf16.mxu0 0
      %333 = vmatpush2.bf16.msra.mxu0 0
      %334 = vmatprep.subr.bf16.mxu0 0
      %335 = vmatpush2.bf16.msra.mxu0 0
      %336 = vmatprep.subr.bf16.mxu0 0
      %337 = vmatpush2.bf16.msra.mxu0 0
      %338 = vmatprep.subr.bf16.mxu0 0
      %339 = vmatpush2.bf16.msra.mxu0 0
      %340 = vmatprep.subr.bf16.mxu0 0
      %341 = vmatpush2.bf16.msra.mxu0 0
      %342 = vmatprep.mubr.bf16.mxu0 0
      %343 = vmatmul.mubr.bf16.gmra.mxu0 %v308
      %v344 = vpop.f32.mrf.mxu0
      %v345 = vadd.f32 %v252, %v344
      %v346 = vpop.f32.mrf.mxu0
      %v347 = vpop.f32.mrf.mxu0
      %v348 = vpop.f32.mrf.mxu0
      %349 = vdwg.mxu0
      %v350 = vpack.c.bf16 %v345, %v345
      %s351 = scalar_lea.vmem %s241, 4
      %352 = vst.msk [vmem:[%s351] sm:$0x3] %vm303, %v350
      %s353 = scalar_lea.vmem %s225, 4
      %v354 = vld [vmem:[%s353] sm:$0x3]
      %v356 = vsel %vm254, %v354, 0
      %358 = vmatprep.subr.bf16.mxu0 0
      %359 = vmatpush1.bf16.msra.mxu0 0
      %360 = vmatprep.subr.bf16.mxu0 0
      %361 = vmatpush1.bf16.msra.mxu0 0
      %362 = vmatprep.subr.bf16.mxu0 0
      %363 = vmatpush1.bf16.msra.mxu0 0
      %364 = vmatprep.subr.bf16.mxu0 0
      %365 = vmatpush1.bf16.msra.mxu0 0
      %366 = vmatprep.subr.bf16.mxu0 0
      %367 = vmatpush1.bf16.msra.mxu0 0
      %368 = vmatprep.subr.bf16.mxu0 0
      %369 = vmatpush1.bf16.msra.mxu0 0
      %370 = vmatprep.subr.bf16.mxu0 0
      %371 = vmatpush1.bf16.msra.mxu0 0
      %372 = vmatprep.subr.bf16.mxu0 0
      %373 = vmatpush1.bf16.msra.mxu0 %v260
      %374 = vmatprep.subr.bf16.mxu0 0
      %375 = vmatpush2.bf16.msra.mxu0 0
      %376 = vmatprep.subr.bf16.mxu0 0
      %377 = vmatpush2.bf16.msra.mxu0 0
      %378 = vmatprep.subr.bf16.mxu0 0
      %379 = vmatpush2.bf16.msra.mxu0 0
      %380 = vmatprep.subr.bf16.mxu0 0
      %381 = vmatpush2.bf16.msra.mxu0 0
      %382 = vmatprep.subr.bf16.mxu0 0
      %383 = vmatpush2.bf16.msra.mxu0 0
      %384 = vmatprep.subr.bf16.mxu0 0
      %385 = vmatpush2.bf16.msra.mxu0 0
      %386 = vmatprep.subr.bf16.mxu0 0
      %387 = vmatpush2.bf16.msra.mxu0 0
      %388 = vmatprep.subr.bf16.mxu0 0
      %389 = vmatpush2.bf16.msra.mxu0 0
      %390 = vmatprep.mubr.bf16.mxu0 0
      %391 = vmatmul.mubr.bf16.gmra.mxu0 %v356
      %v392 = vpop.f32.mrf.mxu0
      %v393 = vadd.f32 %v252, %v392
      %v394 = vpop.f32.mrf.mxu0
      %v395 = vpop.f32.mrf.mxu0
      %v396 = vpop.f32.mrf.mxu0
      %397 = vdwg.mxu0
      %v398 = vpack.c.bf16 %v393, %v393
      %s399 = scalar_lea.vmem %s241, 8
      %400 = vst.msk [vmem:[%s399] sm:$0x3] %vm303, %v398
      %s401 = scalar_lea.vmem %s225, 6
      %v402 = vld [vmem:[%s401] sm:$0x3]
      %v404 = vsel %vm254, %v402, 0
      %406 = vmatprep.subr.bf16.mxu0 0
      %407 = vmatpush1.bf16.msra.mxu0 0
      %408 = vmatprep.subr.bf16.mxu0 0
      %409 = vmatpush1.bf16.msra.mxu0 0
      %410 = vmatprep.subr.bf16.mxu0 0
      %411 = vmatpush1.bf16.msra.mxu0 0
      %412 = vmatprep.subr.bf16.mxu0 0
      %413 = vmatpush1.bf16.msra.mxu0 0
      %414 = vmatprep.subr.bf16.mxu0 0
      %415 = vmatpush1.bf16.msra.mxu0 0
      %416 = vmatprep.subr.bf16.mxu0 0
      %417 = vmatpush1.bf16.msra.mxu0 0
      %418 = vmatprep.subr.bf16.mxu0 0
      %419 = vmatpush1.bf16.msra.mxu0 0
      %420 = vmatprep.subr.bf16.mxu0 0
      %421 = vmatpush1.bf16.msra.mxu0 %v260
      %422 = vmatprep.subr.bf16.mxu0 0
      %423 = vmatpush2.bf16.msra.mxu0 0
      %424 = vmatprep.subr.bf16.mxu0 0
      %425 = vmatpush2.bf16.msra.mxu0 0
      %426 = vmatprep.subr.bf16.mxu0 0
      %427 = vmatpush2.bf16.msra.mxu0 0
      %428 = vmatprep.subr.bf16.mxu0 0
      %429 = vmatpush2.bf16.msra.mxu0 0
      %430 = vmatprep.subr.bf16.mxu0 0
      %431 = vmatpush2.bf16.msra.mxu0 0
      %432 = vmatprep.subr.bf16.mxu0 0
      %433 = vmatpush2.bf16.msra.mxu0 0
      %434 = vmatprep.subr.bf16.mxu0 0
      %435 = vmatpush2.bf16.msra.mxu0 0
      %436 = vmatprep.subr.bf16.mxu0 0
      %437 = vmatpush2.bf16.msra.mxu0 0
      %438 = vmatprep.mubr.bf16.mxu0 0
      %439 = vmatmul.mubr.bf16.gmra.mxu0 %v404
      %v440 = vpop.f32.mrf.mxu0
      %v441 = vadd.f32 %v252, %v440
      %v442 = vpop.f32.mrf.mxu0
      %v443 = vpop.f32.mrf.mxu0
      %v444 = vpop.f32.mrf.mxu0
      %445 = vdwg.mxu0
      %v446 = vpack.c.bf16 %v441, %v441
      %s447 = scalar_lea.vmem %s241, 12
      %448 = vst.msk [vmem:[%s447] sm:$0x3] %vm303, %v446
      %s449 = scalar_lea.vmem %s230, 4
      %v450 = vld [vmem:[%s449] sm:$0xf]
      %v451 = vld [vmem:[%s225] sm:$0x3]
      %v453 = vsel %vm254, %v451, 0
      %v456 = vsel %vm258, %v450, 0
      %458 = vmatprep.subr.bf16.mxu0 0
      %459 = vmatpush1.bf16.msra.mxu0 0
      %460 = vmatprep.subr.bf16.mxu0 0
      %461 = vmatpush1.bf16.msra.mxu0 0
      %462 = vmatprep.subr.bf16.mxu0 0
      %463 = vmatpush1.bf16.msra.mxu0 0
      %464 = vmatprep.subr.bf16.mxu0 0
      %465 = vmatpush1.bf16.msra.mxu0 0
      %466 = vmatprep.subr.bf16.mxu0 0
      %467 = vmatpush1.bf16.msra.mxu0 0
      %468 = vmatprep.subr.bf16.mxu0 0
      %469 = vmatpush1.bf16.msra.mxu0 0
      %470 = vmatprep.subr.bf16.mxu0 0
      %471 = vmatpush1.bf16.msra.mxu0 0
      %472 = vmatprep.subr.bf16.mxu0 0
      %473 = vmatpush1.bf16.msra.mxu0 %v456
      %474 = vmatprep.subr.bf16.mxu0 0
      %475 = vmatpush2.bf16.msra.mxu0 0
      %476 = vmatprep.subr.bf16.mxu0 0
      %477 = vmatpush2.bf16.msra.mxu0 0
      %478 = vmatprep.subr.bf16.mxu0 0
      %479 = vmatpush2.bf16.msra.mxu0 0
      %480 = vmatprep.subr.bf16.mxu0 0
      %481 = vmatpush2.bf16.msra.mxu0 0
      %482 = vmatprep.subr.bf16.mxu0 0
      %483 = vmatpush2.bf16.msra.mxu0 0
      %484 = vmatprep.subr.bf16.mxu0 0
      %485 = vmatpush2.bf16.msra.mxu0 0
      %486 = vmatprep.subr.bf16.mxu0 0
      %487 = vmatpush2.bf16.msra.mxu0 0
      %488 = vmatprep.subr.bf16.mxu0 0
      %489 = vmatpush2.bf16.msra.mxu0 0
      %490 = vmatprep.mubr.bf16.mxu0 0
      %491 = vmatmul.mubr.bf16.gmra.mxu0 %v453
      %v492 = vpop.f32.mrf.mxu0
      %v493 = vadd.f32 %v252, %v492
      %v494 = vpop.f32.mrf.mxu0
      %v495 = vpop.f32.mrf.mxu0
      %v496 = vpop.f32.mrf.mxu0
      %497 = vdwg.mxu0
      %v498 = vpack.c.bf16 %v493, %v493
      %s499 = scalar_lea.vmem %s241, 2
      %500 = vst.msk [vmem:[%s499] sm:$0x3] %vm303, %v498
      %v501 = vld [vmem:[%s305] sm:$0x3]
      %v503 = vsel %vm254, %v501, 0
      %505 = vmatprep.subr.bf16.mxu0 0
      %506 = vmatpush1.bf16.msra.mxu0 0
      %507 = vmatprep.subr.bf16.mxu0 0
      %508 = vmatpush1.bf16.msra.mxu0 0
      %509 = vmatprep.subr.bf16.mxu0 0
      %510 = vmatpush1.bf16.msra.mxu0 0
      %511 = vmatprep.subr.bf16.mxu0 0
      %512 = vmatpush1.bf16.msra.mxu0 0
      %513 = vmatprep.subr.bf16.mxu0 0
      %514 = vmatpush1.bf16.msra.mxu0 0
      %515 = vmatprep.subr.bf16.mxu0 0
      %516 = vmatpush1.bf16.msra.mxu0 0
      %517 = vmatprep.subr.bf16.mxu0 0
      %518 = vmatpush1.bf16.msra.mxu0 0
      %519 = vmatprep.subr.bf16.mxu0 0
      %520 = vmatpush1.bf16.msra.mxu0 %v456
      %521 = vmatprep.subr.bf16.mxu0 0
      %522 = vmatpush2.bf16.msra.mxu0 0
      %523 = vmatprep.subr.bf16.mxu0 0
      %524 = vmatpush2.bf16.msra.mxu0 0
      %525 = vmatprep.subr.bf16.mxu0 0
      %526 = vmatpush2.bf16.msra.mxu0 0
      %527 = vmatprep.subr.bf16.mxu0 0
      %528 = vmatpush2.bf16.msra.mxu0 0
      %529 = vmatprep.subr.bf16.mxu0 0
      %530 = vmatpush2.bf16.msra.mxu0 0
      %531 = vmatprep.subr.bf16.mxu0 0
      %532 = vmatpush2.bf16.msra.mxu0 0
      %533 = vmatprep.subr.bf16.mxu0 0
      %534 = vmatpush2.bf16.msra.mxu0 0
      %535 = vmatprep.subr.bf16.mxu0 0
      %536 = vmatpush2.bf16.msra.mxu0 0
      %537 = vmatprep.mubr.bf16.mxu0 0
      %538 = vmatmul.mubr.bf16.gmra.mxu0 %v503
      %v539 = vpop.f32.mrf.mxu0
      %v540 = vadd.f32 %v252, %v539
      %v541 = vpop.f32.mrf.mxu0
      %v542 = vpop.f32.mrf.mxu0
      %v543 = vpop.f32.mrf.mxu0
      %544 = vdwg.mxu0
      %v545 = vpack.c.bf16 %v540, %v540
      %s546 = scalar_lea.vmem %s241, 6
      %547 = vst.msk [vmem:[%s546] sm:$0x3] %vm303, %v545
      %v548 = vld [vmem:[%s353] sm:$0x3]
      %v550 = vsel %vm254, %v548, 0
      %552 = vmatprep.subr.bf16.mxu0 0
      %553 = vmatpush1.bf16.msra.mxu0 0
      %554 = vmatprep.subr.bf16.mxu0 0
      %555 = vmatpush1.bf16.msra.mxu0 0
      %556 = vmatprep.subr.bf16.mxu0 0
      %557 = vmatpush1.bf16.msra.mxu0 0
      %558 = vmatprep.subr.bf16.mxu0 0
      %559 = vmatpush1.bf16.msra.mxu0 0
      %560 = vmatprep.subr.bf16.mxu0 0
      %561 = vmatpush1.bf16.msra.mxu0 0
      %562 = vmatprep.subr.bf16.mxu0 0
      %563 = vmatpush1.bf16.msra.mxu0 0
      %564 = vmatprep.subr.bf16.mxu0 0
      %565 = vmatpush1.bf16.msra.mxu0 0
      %566 = vmatprep.subr.bf16.mxu0 0
      %567 = vmatpush1.bf16.msra.mxu0 %v456
      %568 = vmatprep.subr.bf16.mxu0 0
      %569 = vmatpush2.bf16.msra.mxu0 0
      %570 = vmatprep.subr.bf16.mxu0 0
      %571 = vmatpush2.bf16.msra.mxu0 0
      %572 = vmatprep.subr.bf16.mxu0 0
      %573 = vmatpush2.bf16.msra.mxu0 0
      %574 = vmatprep.subr.bf16.mxu0 0
      %575 = vmatpush2.bf16.msra.mxu0 0
      %576 = vmatprep.subr.bf16.mxu0 0
      %577 = vmatpush2.bf16.msra.mxu0 0
      %578 = vmatprep.subr.bf16.mxu0 0
      %579 = vmatpush2.bf16.msra.mxu0 0
      %580 = vmatprep.subr.bf16.mxu0 0
      %581 = vmatpush2.bf16.msra.mxu0 0
      %582 = vmatprep.subr.bf16.mxu0 0
      %583 = vmatpush2.bf16.msra.mxu0 0
      %584 = vmatprep.mubr.bf16.mxu0 0
      %585 = vmatmul.mubr.bf16.gmra.mxu0 %v550
      %v586 = vpop.f32.mrf.mxu0
      %v587 = vadd.f32 %v252, %v586
      %v588 = vpop.f32.mrf.mxu0
      %v589 = vpop.f32.mrf.mxu0
      %v590 = vpop.f32.mrf.mxu0
      %591 = vdwg.mxu0
      %v592 = vpack.c.bf16 %v587, %v587
      %s593 = scalar_lea.vmem %s241, 10
      %594 = vst.msk [vmem:[%s593] sm:$0x3] %vm303, %v592
      %v595 = vld [vmem:[%s401] sm:$0x3]
      %v597 = vsel %vm254, %v595, 0
      %599 = vmatprep.subr.bf16.mxu0 0
      %600 = vmatpush1.bf16.msra.mxu0 0
      %601 = vmatprep.subr.bf16.mxu0 0
      %602 = vmatpush1.bf16.msra.mxu0 0
      %603 = vmatprep.subr.bf16.mxu0 0
      %604 = vmatpush1.bf16.msra.mxu0 0
      %605 = vmatprep.subr.bf16.mxu0 0
      %606 = vmatpush1.bf16.msra.mxu0 0
      %607 = vmatprep.subr.bf16.mxu0 0
      %608 = vmatpush1.bf16.msra.mxu0 0
      %609 = vmatprep.subr.bf16.mxu0 0
      %610 = vmatpush1.bf16.msra.mxu0 0
      %611 = vmatprep.subr.bf16.mxu0 0
      %612 = vmatpush1.bf16.msra.mxu0 0
      %613 = vmatprep.subr.bf16.mxu0 0
      %614 = vmatpush1.bf16.msra.mxu0 %v456
      %615 = vmatprep.subr.bf16.mxu0 0
      %616 = vmatpush2.bf16.msra.mxu0 0
      %617 = vmatprep.subr.bf16.mxu0 0
      %618 = vmatpush2.bf16.msra.mxu0 0
      %619 = vmatprep.subr.bf16.mxu0 0
      %620 = vmatpush2.bf16.msra.mxu0 0
      %621 = vmatprep.subr.bf16.mxu0 0
      %622 = vmatpush2.bf16.msra.mxu0 0
      %623 = vmatprep.subr.bf16.mxu0 0
      %624 = vmatpush2.bf16.msra.mxu0 0
      %625 = vmatprep.subr.bf16.mxu0 0
      %626 = vmatpush2.bf16.msra.mxu0 0
      %627 = vmatprep.subr.bf16.mxu0 0
      %628 = vmatpush2.bf16.msra.mxu0 0
      %629 = vmatprep.subr.bf16.mxu0 0
      %630 = vmatpush2.bf16.msra.mxu0 0
      %631 = vmatprep.mubr.bf16.mxu0 0
      %632 = vmatmul.mubr.bf16.gmra.mxu0 %v597
      %v633 = vpop.f32.mrf.mxu0
      %v634 = vadd.f32 %v252, %v633
      %v635 = vpop.f32.mrf.mxu0
      %v636 = vpop.f32.mrf.mxu0
      %v637 = vpop.f32.mrf.mxu0
      %638 = vdwg.mxu0
      %v639 = vpack.c.bf16 %v634, %v634
      %s640 = scalar_lea.vmem %s241, 14
      %641 = vst.msk [vmem:[%s640] sm:$0x3] %vm303, %v639
      %s642 = smul.u32 %s20, 2
      %s643 = sadd.s32 %s642, %s21
      %p644 = scmp.lt.s32.totalorder %s19, 1
      %s645 = scalar_select %p644, %s19, 1
      %p646 = scmp.lt.s32.totalorder %s643, 7
      %s647 = scalar_select %p646, %s643, 7
      %s648 = smul.addr %s647, 8
      %s649 = smul.addr %s645, 64
      %s650 = sadd.s32 %s648, %s649
      %s651 = smul.addr %s650, 2
      %s652 = scalar_lea.vmem %s3, %s651
      // Predicated region
      $region33: #{decode_forward.3} parent=31 // pred_check
        %p653 = pneg %p132
      $region34: #{decode_forward.3} parent=31 // pred_check_branch
        %655 = sbr.rel (%p653) target = $region36
      $region35: #{decode_forward.3} parent=31 // pred_region
        %s656 = smul.u32 %s20, 2
        %s657 = sadd.s32 %s656, %s21
      $region36: #{decode_forward.3} parent=31 // pred_fallthru
        _
    $region32: #{decode_forward.3} parent=5 // pred_fallthru
      _
    %p658 = scmp.le.s32.totalorder 2, %s9
    // Predicated region
    $region37: #{decode_forward.3} parent=5 // pred_check
      %p659 = pneg %p658
    $region38: #{decode_forward.3} parent=5 // pred_check_branch
      %661 = sbr.rel (%p659) target = $region40
    $region39: #{decode_forward.3} parent=5 // pred_region
      %s662 = ssub.s32 %s9, 2
      // Predicated region
      $region41: #{decode_forward.3} parent=39 // pred_check
        %p663 = pneg %p138
      $region42: #{decode_forward.3} parent=39 // pred_check_branch
        %665 = sbr.rel (%p663) target = $region44
      $region43: #{decode_forward.3} parent=39 // pred_region
        %s666 = smul.u32 %s23, 2
        %s667 = sadd.s32 %s666, %s24
        %p668 = scmp.lt.s32.totalorder %s22, 1
        %s669 = scalar_select %p668, %s22, 1
        %p670 = scmp.lt.s32.totalorder %s667, 7
        %s671 = scalar_select %p670, %s667, 7
        %s672 = smul.addr %s671, 8
        %s673 = smul.addr %s669, 64
        %s674 = sadd.s32 %s672, %s673
        %s675 = smul.addr %s674, 2
        %s676 = scalar_lea.vmem %s3, %s675
      $region44: #{decode_forward.3} parent=39 // pred_fallthru
        _
    $region40: #{decode_forward.3} parent=5 // pred_fallthru
      _
  $region6: #{decode_forward.3} parent=0 // loop_footer
    %s13 = sadd.s32 1, %s9
  $region7: #{decode_forward.3} parent=0 // loop_footer_branch
    %8 = sbr.rel target = $region3
  $region8: #{decode_forward.3} parent=0 // loop_exit
    _

// kernel: decode_forward.5
$region0: #{decode_forward.5}
  #allocation0 [shape = 'u32[]', space=smem, size = 0x4, offset = 0x4, fixed_abs, tag = 'smem constant byte address 0x4 - core index']
  #allocation1 [shape = 'u32[144,128]{1,0:T(1,128)}', space=vmem, size = 0x12000, scoped, tag = 'internal scratch']
  %s0 = inlined_call_operand.vmem [shape: f32[2,8,64,4], index: 0, kind: input, shape index: {}]
  %s1 = inlined_call_operand.vmem [shape: f32[1,4], index: 1, kind: input, shape index: {}]
  %s2 = inlined_call_operand.vmem [shape: f32[1,4], index: 2, kind: input, shape index: {}]
  %s3 = inlined_call_operand.vmem [shape: f32[2,8,64,4], index: 3, kind: output, shape index: {}]
  %s4 = sld [smem:[#allocation0]]
  $region45: #{decode_forward.5} parent=0
    _
  %s6 = ssub.s32 1, %s4
  %s7 = scalar_select 0, %s6, %s4
  loop: start=0, step=1, limit=18
  $region2: #{decode_forward.5} parent=0 // loop_pre_header
    _
  $region3: #{decode_forward.5} parent=0 // loop_header
    %s9 = sphi 0, %s13
    %p10 = scmp.ge.s32.totalorder %s9, 18
    %s16 = sphi 0, %s28
    %s17 = sphi 0, %s24
    %s18 = sphi 0, %s16
    %s19 = sphi 0, %s17
    %s20 = sphi 0, %s18
    %s21 = sphi 0, %s19
    %s33 = sphi 0, %s35
    %s36 = sphi 0, %s33
    %s37 = sphi 0, %s36
    %s53 = sphi 0, %s37
    %s57 = sphi 0, %s57
    %s59 = sphi 0, %s57
    %s60 = sphi 0, %s59
    %s74 = sphi 0, %s60
    %s78 = sphi 0, %s78
    %s80 = sphi 0, %s78
    %s81 = sphi 0, %s80
    %s95 = sphi 0, %s81
    %s103 = sphi 0, %s105
    %s106 = sphi 0, %s103
    %s107 = sphi 0, %s106
    %s123 = sphi 0, %s107
  $region4: #{decode_forward.5} parent=0 // loop_header_branch
    %12 = sbr.rel (%p10) target = $region8
  $region5: #{decode_forward.5} parent=0 // loop_body
    %s14 = ssub.s32 %s9, 1
    %s15 = ssub.s32 %s9, 2
    %s22 = sadd.s32 1, %s17
    %p23 = scmp.ge.s32.totalorder %s22, 8
    %s24 = scalar_select %p23, 0, %s22
    %s25 = sadd.s32 1, %s16
    %s26 = scalar_select %p23, %s25, %s16
    %p27 = scmp.ge.s32.totalorder %s26, 2
    %s28 = scalar_select %p27, 0, %s26
    %s29 = ssub.s32 %s16, %s28
    %s30 = ssub.s32 %s17, %s24
    %s31 = sor.u32 %s29, %s30
    %p32 = scmp.eq.s32.totalorder %s31, 0
    %s34 = sadd.s32 %s33, 1
    %s35 = scalar_select %p32, %s33, %s34
    %p38 = pneg %p32
    %p39 = scmp.eq.s32.totalorder %s9, 15
    %p40 = por %p38, %p39
    %p41 = scmp.ne.s32.totalorder %s33, %s36
    %p42 = scmp.eq.s32.totalorder %s9, 0
    %p43 = por %p41, %p42
    %p44 = scmp.ne.s32.totalorder %s33, %s36
    %p45 = scmp.eq.s32.totalorder %s14, 15
    %p46 = por %p44, %p45
    %p47 = scmp.ne.s32.totalorder %s36, %s37
    %p48 = scmp.eq.s32.totalorder %s14, 0
    %p49 = por %p47, %p48
    %p50 = scmp.ne.s32.totalorder %s36, %s37
    %p51 = scmp.eq.s32.totalorder %s15, 15
    %p52 = por %p50, %p51
    %p54 = scmp.ne.s32.totalorder %s37, %s53
    %p55 = scmp.eq.s32.totalorder %s15, 0
    %p56 = por %p54, %p55
    %s58 = sadd.s32 %s57, 1
    %p61 = scmp.eq.s32.totalorder %s9, 15
    %p62 = scmp.ne.s32.totalorder %s57, %s59
    %p63 = scmp.eq.s32.totalorder %s9, 0
    %p64 = por %p62, %p63
    %p65 = scmp.ne.s32.totalorder %s57, %s59
    %p66 = scmp.eq.s32.totalorder %s14, 15
    %p67 = por %p65, %p66
    %p68 = scmp.ne.s32.totalorder %s59, %s60
    %p69 = scmp.eq.s32.totalorder %s14, 0
    %p70 = por %p68, %p69
    %p71 = scmp.ne.s32.totalorder %s59, %s60
    %p72 = scmp.eq.s32.totalorder %s15, 15
    %p73 = por %p71, %p72
    %p75 = scmp.ne.s32.totalorder %s60, %s74
    %p76 = scmp.eq.s32.totalorder %s15, 0
    %p77 = por %p75, %p76
    %s79 = sadd.s32 %s78, 1
    %p82 = scmp.eq.s32.totalorder %s9, 15
    %p83 = scmp.ne.s32.totalorder %s78, %s80
    %p84 = scmp.eq.s32.totalorder %s9, 0
    %p85 = por %p83, %p84
    %p86 = scmp.ne.s32.totalorder %s78, %s80
    %p87 = scmp.eq.s32.totalorder %s14, 15
    %p88 = por %p86, %p87
    %p89 = scmp.ne.s32.totalorder %s80, %s81
    %p90 = scmp.eq.s32.totalorder %s14, 0
    %p91 = por %p89, %p90
    %p92 = scmp.ne.s32.totalorder %s80, %s81
    %p93 = scmp.eq.s32.totalorder %s15, 15
    %p94 = por %p92, %p93
    %p96 = scmp.ne.s32.totalorder %s81, %s95
    %p97 = scmp.eq.s32.totalorder %s15, 0
    %p98 = por %p96, %p97
    %s99 = ssub.s32 %s16, %s28
    %s100 = ssub.s32 %s17, %s24
    %s101 = sor.u32 %s99, %s100
    %p102 = scmp.eq.s32.totalorder %s101, 0
    %s104 = sadd.s32 %s103, 1
    %s105 = scalar_select %p102, %s103, %s104
    %p108 = pneg %p102
    %p109 = scmp.eq.s32.totalorder %s9, 15
    %p110 = por %p108, %p109
    %p111 = scmp.ne.s32.totalorder %s103, %s106
    %p112 = scmp.eq.s32.totalorder %s9, 0
    %p113 = por %p111, %p112
    %p114 = scmp.ne.s32.totalorder %s103, %s106
    %p115 = scmp.eq.s32.totalorder %s14, 15
    %p116 = por %p114, %p115
    %p117 = scmp.ne.s32.totalorder %s106, %s107
    %p118 = scmp.eq.s32.totalorder %s14, 0
    %p119 = por %p117, %p118
    %p120 = scmp.ne.s32.totalorder %s106, %s107
    %p121 = scmp.eq.s32.totalorder %s15, 15
    %p122 = por %p120, %p121
    %p124 = scmp.ne.s32.totalorder %s107, %s123
    %p125 = scmp.eq.s32.totalorder %s15, 0
    %p126 = por %p124, %p125
    %p127 = scmp.le.s32.totalorder 1, %s9
    %p128 = scmp.lt.s32.totalorder %s9, 17
    %p129 = pnand %p127, %p128
    %p130 = pneg %p129
    // Predicated region
    $region9: #{decode_forward.5} parent=5 // pred_check
      _
    $region10: #{decode_forward.5} parent=5 // pred_check_branch
      %132 = sbr.rel (%p129) target = $region12
    $region11: #{decode_forward.5} parent=5 // pred_region
      %s133 = ssub.s32 %s9, 1
      // Predicated region
      $region13: #{decode_forward.5} parent=11 // pred_check
        %p134 = pneg %p70
      $region14: #{decode_forward.5} parent=11 // pred_check_branch
        %136 = sbr.rel (%p134) target = $region16
      $region15: #{decode_forward.5} parent=11 // pred_region
        _
      $region16: #{decode_forward.5} parent=11 // pred_fallthru
        _
      // Predicated region
      $region17: #{decode_forward.5} parent=11 // pred_check
        %p137 = pneg %p91
      $region18: #{decode_forward.5} parent=11 // pred_check_branch
        %139 = sbr.rel (%p137) target = $region20
      $region19: #{decode_forward.5} parent=11 // pred_region
        _
      $region20: #{decode_forward.5} parent=11 // pred_fallthru
        _
    $region12: #{decode_forward.5} parent=5 // pred_fallthru
      _
    %p140 = scmp.lt.s32.totalorder %s9, 16
    // Predicated region
    $region21: #{decode_forward.5} parent=5 // pred_check
      %p141 = pneg %p140
    $region22: #{decode_forward.5} parent=5 // pred_check_branch
      %143 = sbr.rel (%p141) target = $region24
    $region23: #{decode_forward.5} parent=5 // pred_region
      // Predicated region
      $region25: #{decode_forward.5} parent=23 // pred_check
        %p144 = pneg %p43
      $region26: #{decode_forward.5} parent=23 // pred_check_branch
        %146 = sbr.rel (%p144) target = $region28
      $region27: #{decode_forward.5} parent=23 // pred_region
        %p147 = scmp.lt.s32.totalorder %s16, 1
        %s148 = scalar_select %p147, %s16, 1
        %p149 = scmp.lt.s32.totalorder %s17, 7
        %s150 = scalar_select %p149, %s17, 7
        %s151 = smul.addr %s150, 8
        %s152 = smul.addr %s148, 64
        %s153 = sadd.s32 %s151, %s152
        %s154 = smul.addr %s153, 8
        %s155 = scalar_lea.vmem %s0, %s154
      $region28: #{decode_forward.5} parent=23 // pred_fallthru
        _
    $region24: #{decode_forward.5} parent=5 // pred_fallthru
      _
    %p156 = scmp.le.s32.totalorder 1, %s9
    %p157 = scmp.lt.s32.totalorder %s9, 17
    %p158 = pnand %p156, %p157
    %p159 = pneg %p158
    // Predicated region
    $region29: #{decode_forward.5} parent=5 // pred_check
      _
    $region30: #{decode_forward.5} parent=5 // pred_check_branch
      %161 = sbr.rel (%p158) target = $region32
    $region31: #{decode_forward.5} parent=5 // pred_region
      %s162 = ssub.s32 %s9, 1
      %p163 = scmp.lt.s32.totalorder %s18, 1
      %s164 = scalar_select %p163, %s18, 1
      %p165 = scmp.lt.s32.totalorder %s19, 7
      %s166 = scalar_select %p165, %s19, 7
      %s167 = smul.addr %s166, 8
      %s168 = smul.addr %s164, 64
      %s169 = sadd.s32 %s167, %s168
      %s170 = smul.addr %s169, 8
      %s171 = scalar_lea.vmem %s0, %s170
      %p172 = pneg %p49
      %p173 = pneg %p46
      %p174 = pneg %p70
      %p175 = pneg %p67
      %p176 = pneg %p91
      %p177 = pneg %p88
      %p178 = pneg %p119
      %p179 = pneg %p116
      %p180 = scmp.lt.s32.totalorder %s18, 1
      %s181 = scalar_select %p180, %s18, 1
      %p182 = scmp.lt.s32.totalorder %s19, 7
      %s183 = scalar_select %p182, %s19, 7
      %s184 = smul.addr %s183, 8
      %s185 = smul.addr %s181, 64
      %s186 = sadd.s32 %s184, %s185
      %s187 = smul.addr %s186, 8
      %s188 = scalar_lea.vmem %s3, %s187
      %p189 = scmp.lt.s32.totalorder %s18, 1
      %s190 = scalar_select %p189, %s18, 1
      %p191 = scmp.lt.s32.totalorder %s19, 7
      %s192 = scalar_select %p191, %s19, 7
      %s193 = smul.addr %s192, 8
      %s194 = smul.addr %s190, 64
      %s195 = sadd.s32 %s193, %s194
      %s196 = smul.addr %s195, 8
      %s197 = scalar_lea.vmem %s0, %s196
      %p198 = scmp.lt.s32.totalorder %s18, 1
      %s199 = scalar_select %p198, %s18, 1
      %p200 = scmp.lt.s32.totalorder %s19, 7
      %s201 = scalar_select %p200, %s19, 7
      %s202 = smul.addr %s201, 8
      %s203 = smul.addr %s199, 64
      %s204 = sadd.s32 %s202, %s203
      %s205 = smul.addr %s204, 8
      %s206 = scalar_lea.vmem %s3, %s205
      %v207 = vld [vmem:[%s197] sm:$0xff]
      %v208 = vld [vmem:[%s197 + $0x8] sm:$0xff]
      %v209 = vld [vmem:[%s197 + $0x10] sm:$0xff]
      %v210 = vld [vmem:[%s197 + $0x18] sm:$0xff]
      %v211 = vld [vmem:[%s197 + $0x20] sm:$0xff]
      %v212 = vld [vmem:[%s197 + $0x28] sm:$0xff]
      %v213 = vld [vmem:[%s197 + $0x30] sm:$0xff]
      %v214 = vld [vmem:[%s197 + $0x38] sm:$0xff]
      %v215 = vld [vmem:[%s1] sm:$0x1]
      %v217 = vlaneseq
      %v218 = vshrl.u32 %v217, 7
      %v219 = vsub.s32 0, %v218
      %v220 = vrot.slane %v215, %v219
      %v222 = vmul.f32 %v207, %v220
      %v223 = vmul.f32 %v208, %v220
      %v224 = vmul.f32 %v209, %v220
      %v225 = vmul.f32 %v210, %v220
      %v226 = vmul.f32 %v211, %v220
      %v227 = vmul.f32 %v212, %v220
      %v228 = vmul.f32 %v213, %v220
      %v229 = vmul.f32 %v214, %v220
      %v230 = vld [vmem:[%s2] sm:$0x1]
      %v232 = vlaneseq
      %v233 = vshrl.u32 %v232, 7
      %v234 = vsub.s32 0, %v233
      %v235 = vrot.slane %v230, %v234
      %v237 = vadd.f32 %v222, %v235
      %v238 = vadd.f32 %v223, %v235
      %v239 = vadd.f32 %v224, %v235
      %v240 = vadd.f32 %v225, %v235
      %v241 = vadd.f32 %v226, %v235
      %v242 = vadd.f32 %v227, %v235
      %v243 = vadd.f32 %v228, %v235
      %v244 = vadd.f32 %v229, %v235
      %vm245 = vcmask 31744
      %246 = vst.msk [vmem:[%s206] sm:$0xff] %vm245, %v237
      %247 = vst.msk [vmem:[%s206 + $0x8] sm:$0xff] %vm245, %v238
      %248 = vst.msk [vmem:[%s206 + $0x10] sm:$0xff] %vm245, %v239
      %249 = vst.msk [vmem:[%s206 + $0x18] sm:$0xff] %vm245, %v240
      %250 = vst.msk [vmem:[%s206 + $0x20] sm:$0xff] %vm245, %v241
      %251 = vst.msk [vmem:[%s206 + $0x28] sm:$0xff] %vm245, %v242
      %252 = vst.msk [vmem:[%s206 + $0x30] sm:$0xff] %vm245, %v243
      %253 = vst.msk [vmem:[%s206 + $0x38] sm:$0xff] %vm245, %v244
      %p254 = scmp.lt.s32.totalorder %s18, 1
      %s255 = scalar_select %p254, %s18, 1
      %p256 = scmp.lt.s32.totalorder %s19, 7
      %s257 = scalar_select %p256, %s19, 7
      %s258 = smul.addr %s257, 8
      %s259 = smul.addr %s255, 64
      %s260 = sadd.s32 %s258, %s259
      %s261 = smul.addr %s260, 8
      %s262 = scalar_lea.vmem %s3, %s261
      // Predicated region
      $region33: #{decode_forward.5} parent=31 // pred_check
        %p263 = pneg %p116
      $region34: #{decode_forward.5} parent=31 // pred_check_branch
        %265 = sbr.rel (%p263) target = $region36
      $region35: #{decode_forward.5} parent=31 // pred_region
        _
      $region36: #{decode_forward.5} parent=31 // pred_fallthru
        _
    $region32: #{decode_forward.5} parent=5 // pred_fallthru
      _
    %p266 = scmp.le.s32.totalorder 2, %s9
    // Predicated region
    $region37: #{decode_forward.5} parent=5 // pred_check
      %p267 = pneg %p266
    $region38: #{decode_forward.5} parent=5 // pred_check_branch
      %269 = sbr.rel (%p267) target = $region40
    $region39: #{decode_forward.5} parent=5 // pred_region
      %s270 = ssub.s32 %s9, 2
      // Predicated region
      $region41: #{decode_forward.5} parent=39 // pred_check
        %p271 = pneg %p122
      $region42: #{decode_forward.5} parent=39 // pred_check_branch
        %273 = sbr.rel (%p271) target = $region44
      $region43: #{decode_forward.5} parent=39 // pred_region
        %p274 = scmp.lt.s32.totalorder %s20, 1
        %s275 = scalar_select %p274, %s20, 1
        %p276 = scmp.lt.s32.totalorder %s21, 7
        %s277 = scalar_select %p276, %s21, 7
        %s278 = smul.addr %s277, 8
        %s279 = smul.addr %s275, 64
        %s280 = sadd.s32 %s278, %s279
        %s281 = smul.addr %s280, 8
        %s282 = scalar_lea.vmem %s3, %s281
      $region44: #{decode_forward.5} parent=39 // pred_fallthru
        _
    $region40: #{decode_forward.5} parent=5 // pred_fallthru
      _
  $region6: #{decode_forward.5} parent=0 // loop_footer
    %s13 = sadd.s32 1, %s9
  $region7: #{decode_forward.5} parent=0 // loop_footer_branch
    %8 = sbr.rel target = $region3
  $region8: #{decode_forward.5} parent=0 // loop_exit
    _

// kernel: decode_forward.4
$region0: #{decode_forward.4}
  #allocation0 [shape = 'u32[]', space=smem, size = 0x4, offset = 0x4, fixed_abs, tag = 'smem constant byte address 0x4 - core index']
  #allocation1 [shape = 'u32[144,128]{1,0:T(1,128)}', space=vmem, size = 0x12000, scoped, tag = 'internal scratch']
  #allocation2 [shape = 'f32[64,4]{1,0:T(8,128)}', space=vmem, size = 0x8000, scoped, tag = 'scratch operand']
  %s0 = inlined_call_operand.vmem [shape: bf16[2,10,10,10,8], index: 0, kind: input, shape index: {}]
  %s1 = inlined_call_operand.vmem [shape: bf16[3,3,3,8,4], index: 1, kind: input, shape index: {}]
  %s2 = inlined_call_operand.vmem [shape: f32[1,4], index: 2, kind: input, shape index: {}]
  %s3 = inlined_call_operand.vmem [shape: f32[2,8,64,4], index: 3, kind: output, shape index: {0}]
  %s4 = inlined_call_operand.vmem [shape: f32[2,8,1,4], index: 4, kind: output, shape index: {1}]
  %s5 = inlined_call_operand.vmem [shape: f32[2,8,1,4], index: 5, kind: output, shape index: {2}]
  %6 = xla_tuple %s3, %s4, %s5
  %s7 = sld [smem:[#allocation0]]
  $region69: #{decode_forward.4} parent=0
    _
  %s9 = ssub.s32 1, %s7
  %s10 = scalar_select 0, %s9, %s7
  loop: start=0, step=1, limit=50
  $region2: #{decode_forward.4} parent=0 // loop_pre_header
    _
  $region3: #{decode_forward.4} parent=0 // loop_header
    %s12 = sphi 0, %s16
    %p13 = scmp.ge.s32.totalorder %s12, 50
    %s19 = sphi 0, %s38
    %s20 = sphi 0, %s34
    %s21 = sphi 0, %s30
    %s22 = sphi 0, %s19
    %s23 = sphi 0, %s20
    %s24 = sphi 0, %s21
    %s25 = sphi 0, %s22
    %s26 = sphi 0, %s23
    %s27 = sphi 0, %s24
    %s45 = sphi 0, %s47
    %s48 = sphi 0, %s45
    %s49 = sphi 0, %s48
    %s65 = sphi 0, %s49
    %s71 = sphi 0, %s73
    %s74 = sphi 0, %s71
    %s75 = sphi 0, %s74
    %s91 = sphi 0, %s75
    %s95 = sphi 0, %s95
    %s97 = sphi 0, %s95
    %s98 = sphi 0, %s97
    %s112 = sphi 0, %s98
    %s120 = sphi 0, %s122
    %s123 = sphi 0, %s120
    %s124 = sphi 0, %s123
    %s140 = sphi 0, %s124
    %s148 = sphi 0, %s150
    %s151 = sphi 0, %s148
    %s152 = sphi 0, %s151
    %s168 = sphi 0, %s152
    %s176 = sphi 0, %s178
    %s179 = sphi 0, %s176
    %s180 = sphi 0, %s179
    %s196 = sphi 0, %s180
  $region4: #{decode_forward.4} parent=0 // loop_header_branch
    %15 = sbr.rel (%p13) target = $region8
  $region5: #{decode_forward.4} parent=0 // loop_body
    %s17 = ssub.s32 %s12, 1
    %s18 = ssub.s32 %s12, 2
    %s28 = sadd.s32 1, %s21
    %p29 = scmp.ge.s32.totalorder %s28, 3
    %s30 = scalar_select %p29, 0, %s28
    %s31 = sadd.s32 1, %s20
    %s32 = scalar_select %p29, %s31, %s20
    %p33 = scmp.ge.s32.totalorder %s32, 8
    %s34 = scalar_select %p33, 0, %s32
    %s35 = sadd.s32 1, %s19
    %s36 = scalar_select %p33, %s35, %s19
    %p37 = scmp.ge.s32.totalorder %s36, 2
    %s38 = scalar_select %p37, 0, %s36
    %s39 = sadd.s32 %s20, %s21
    %s40 = sadd.s32 %s34, %s30
    %s41 = ssub.s32 %s19, %s38
    %s42 = ssub.s32 %s39, %s40
    %s43 = sor.u32 %s41, %s42
    %p44 = scmp.eq.s32.totalorder %s43, 0
    %s46 = sadd.s32 %s45, 1
    %s47 = scalar_select %p44, %s45, %s46
    %p50 = pneg %p44
    %p51 = scmp.eq.s32.totalorder %s12, 47
    %p52 = por %p50, %p51
    %p53 = scmp.ne.s32.totalorder %s45, %s48
    %p54 = scmp.eq.s32.totalorder %s12, 0
    %p55 = por %p53, %p54
    %p56 = scmp.ne.s32.totalorder %s45, %s48
    %p57 = scmp.eq.s32.totalorder %s17, 47
    %p58 = por %p56, %p57
    %p59 = scmp.ne.s32.totalorder %s48, %s49
    %p60 = scmp.eq.s32.totalorder %s17, 0
    %p61 = por %p59, %p60
    %p62 = scmp.ne.s32.totalorder %s48, %s49
    %p63 = scmp.eq.s32.totalorder %s18, 47
    %p64 = por %p62, %p63
    %p66 = scmp.ne.s32.totalorder %s49, %s65
    %p67 = scmp.eq.s32.totalorder %s18, 0
    %p68 = por %p66, %p67
    %s69 = ssub.s32 %s21, %s30
    %p70 = scmp.eq.s32.totalorder %s69, 0
    %s72 = sadd.s32 %s71, 1
    %s73 = scalar_select %p70, %s71, %s72
    %p76 = pneg %p70
    %p77 = scmp.eq.s32.totalorder %s12, 47
    %p78 = por %p76, %p77
    %p79 = scmp.ne.s32.totalorder %s71, %s74
    %p80 = scmp.eq.s32.totalorder %s12, 0
    %p81 = por %p79, %p80
    %p82 = scmp.ne.s32.totalorder %s71, %s74
    %p83 = scmp.eq.s32.totalorder %s17, 47
    %p84 = por %p82, %p83
    %p85 = scmp.ne.s32.totalorder %s74, %s75
    %p86 = scmp.eq.s32.totalorder %s17, 0
    %p87 = por %p85, %p86
    %p88 = scmp.ne.s32.totalorder %s74, %s75
    %p89 = scmp.eq.s32.totalorder %s18, 47
    %p90 = por %p88, %p89
    %p92 = scmp.ne.s32.totalorder %s75, %s91
    %p93 = scmp.eq.s32.totalorder %s18, 0
    %p94 = por %p92, %p93
    %s96 = sadd.s32 %s95, 1
    %p99 = scmp.eq.s32.totalorder %s12, 47
    %p100 = scmp.ne.s32.totalorder %s95, %s97
    %p101 = scmp.eq.s32.totalorder %s12, 0
    %p102 = por %p100, %p101
    %p103 = scmp.ne.s32.totalorder %s95, %s97
    %p104 = scmp.eq.s32.totalorder %s17, 47
    %p105 = por %p103, %p104
    %p106 = scmp.ne.s32.totalorder %s97, %s98
    %p107 = scmp.eq.s32.totalorder %s17, 0
    %p108 = por %p106, %p107
    %p109 = scmp.ne.s32.totalorder %s97, %s98
    %p110 = scmp.eq.s32.totalorder %s18, 47
    %p111 = por %p109, %p110
    %p113 = scmp.ne.s32.totalorder %s98, %s112
    %p114 = scmp.eq.s32.totalorder %s18, 0
    %p115 = por %p113, %p114
    %s116 = ssub.s32 %s19, %s38
    %s117 = ssub.s32 %s20, %s34
    %s118 = sor.u32 %s116, %s117
    %p119 = scmp.eq.s32.totalorder %s118, 0
    %s121 = sadd.s32 %s120, 1
    %s122 = scalar_select %p119, %s120, %s121
    %p125 = pneg %p119
    %p126 = scmp.eq.s32.totalorder %s12, 47
    %p127 = por %p125, %p126
    %p128 = scmp.ne.s32.totalorder %s120, %s123
    %p129 = scmp.eq.s32.totalorder %s12, 0
    %p130 = por %p128, %p129
    %p131 = scmp.ne.s32.totalorder %s120, %s123
    %p132 = scmp.eq.s32.totalorder %s17, 47
    %p133 = por %p131, %p132
    %p134 = scmp.ne.s32.totalorder %s123, %s124
    %p135 = scmp.eq.s32.totalorder %s17, 0
    %p136 = por %p134, %p135
    %p137 = scmp.ne.s32.totalorder %s123, %s124
    %p138 = scmp.eq.s32.totalorder %s18, 47
    %p139 = por %p137, %p138
    %p141 = scmp.ne.s32.totalorder %s124, %s140
    %p142 = scmp.eq.s32.totalorder %s18, 0
    %p143 = por %p141, %p142
    %s144 = ssub.s32 %s19, %s38
    %s145 = ssub.s32 %s20, %s34
    %s146 = sor.u32 %s144, %s145
    %p147 = scmp.eq.s32.totalorder %s146, 0
    %s149 = sadd.s32 %s148, 1
    %s150 = scalar_select %p147, %s148, %s149
    %p153 = pneg %p147
    %p154 = scmp.eq.s32.totalorder %s12, 47
    %p155 = por %p153, %p154
    %p156 = scmp.ne.s32.totalorder %s148, %s151
    %p157 = scmp.eq.s32.totalorder %s12, 0
    %p158 = por %p156, %p157
    %p159 = scmp.ne.s32.totalorder %s148, %s151
    %p160 = scmp.eq.s32.totalorder %s17, 47
    %p161 = por %p159, %p160
    %p162 = scmp.ne.s32.totalorder %s151, %s152
    %p163 = scmp.eq.s32.totalorder %s17, 0
    %p164 = por %p162, %p163
    %p165 = scmp.ne.s32.totalorder %s151, %s152
    %p166 = scmp.eq.s32.totalorder %s18, 47
    %p167 = por %p165, %p166
    %p169 = scmp.ne.s32.totalorder %s152, %s168
    %p170 = scmp.eq.s32.totalorder %s18, 0
    %p171 = por %p169, %p170
    %s172 = ssub.s32 %s19, %s38
    %s173 = ssub.s32 %s20, %s34
    %s174 = sor.u32 %s172, %s173
    %p175 = scmp.eq.s32.totalorder %s174, 0
    %s177 = sadd.s32 %s176, 1
    %s178 = scalar_select %p175, %s176, %s177
    %p181 = pneg %p175
    %p182 = scmp.eq.s32.totalorder %s12, 47
    %p183 = por %p181, %p182
    %p184 = scmp.ne.s32.totalorder %s176, %s179
    %p185 = scmp.eq.s32.totalorder %s12, 0
    %p186 = por %p184, %p185
    %p187 = scmp.ne.s32.totalorder %s176, %s179
    %p188 = scmp.eq.s32.totalorder %s17, 47
    %p189 = por %p187, %p188
    %p190 = scmp.ne.s32.totalorder %s179, %s180
    %p191 = scmp.eq.s32.totalorder %s17, 0
    %p192 = por %p190, %p191
    %p193 = scmp.ne.s32.totalorder %s179, %s180
    %p194 = scmp.eq.s32.totalorder %s18, 47
    %p195 = por %p193, %p194
    %p197 = scmp.ne.s32.totalorder %s180, %s196
    %p198 = scmp.eq.s32.totalorder %s18, 0
    %p199 = por %p197, %p198
    %p200 = scmp.le.s32.totalorder 1, %s12
    %p201 = scmp.lt.s32.totalorder %s12, 49
    %p202 = pnand %p200, %p201
    %p203 = pneg %p202
    // Predicated region
    $region9: #{decode_forward.4} parent=5 // pred_check
      _
    $region10: #{decode_forward.4} parent=5 // pred_check_branch
      %205 = sbr.rel (%p202) target = $region12
    $region11: #{decode_forward.4} parent=5 // pred_region
      %s206 = ssub.s32 %s12, 1
      // Predicated region
      $region13: #{decode_forward.4} parent=11 // pred_check
        %p207 = pneg %p108
      $region14: #{decode_forward.4} parent=11 // pred_check_branch
        %209 = sbr.rel (%p207) target = $region16
      $region15: #{decode_forward.4} parent=11 // pred_region
        _
      $region16: #{decode_forward.4} parent=11 // pred_fallthru
        _
    $region12: #{decode_forward.4} parent=5 // pred_fallthru
      _
    %p210 = scmp.lt.s32.totalorder %s12, 48
    // Predicated region
    $region17: #{decode_forward.4} parent=5 // pred_check
      %p211 = pneg %p210
    $region18: #{decode_forward.4} parent=5 // pred_check_branch
      %213 = sbr.rel (%p211) target = $region20
    $region19: #{decode_forward.4} parent=5 // pred_region
      // Predicated region
      $region21: #{decode_forward.4} parent=19 // pred_check
        %p214 = pneg %p55
      $region22: #{decode_forward.4} parent=19 // pred_check_branch
        %216 = sbr.rel (%p214) target = $region24
      $region23: #{decode_forward.4} parent=19 // pred_region
        %s217 = sadd.s32 %s20, %s21
        %p218 = scmp.lt.s32.totalorder %s19, 1
        %s219 = scalar_select %p218, %s19, 1
        %p220 = scmp.lt.s32.totalorder %s217, 9
        %s221 = scalar_select %p220, %s217, 9
        %s222 = smul.addr %s221, 20
        %s223 = smul.addr %s219, 200
        %s224 = sadd.s32 %s222, %s223
        %s225 = smul.addr %s224, 4
        %s226 = scalar_lea.vmem %s0, %s225
        %s227 = sadd.s32 %s20, %s21
      $region24: #{decode_forward.4} parent=19 // pred_fallthru
        _
      // Predicated region
      $region25: #{decode_forward.4} parent=19 // pred_check
        %p228 = pneg %p81
      $region26: #{decode_forward.4} parent=19 // pred_check_branch
        %230 = sbr.rel (%p228) target = $region28
      $region27: #{decode_forward.4} parent=19 // pred_region
        %p231 = scmp.lt.s32.totalorder %s21, 2
        %s232 = scalar_select %p231, %s21, 2
        %s233 = smul.addr %s232, 9
        %s234 = smul.addr %s233, 4
        %s235 = scalar_lea.vmem %s1, %s234
      $region28: #{decode_forward.4} parent=19 // pred_fallthru
        _
    $region20: #{decode_forward.4} parent=5 // pred_fallthru
      _
    %p236 = scmp.le.s32.totalorder 1, %s12
    %p237 = scmp.lt.s32.totalorder %s12, 49
    %p238 = pnand %p236, %p237
    %p239 = pneg %p238
    // Predicated region
    $region29: #{decode_forward.4} parent=5 // pred_check
      _
    $region30: #{decode_forward.4} parent=5 // pred_check_branch
      %241 = sbr.rel (%p238) target = $region32
    $region31: #{decode_forward.4} parent=5 // pred_region
      %s242 = ssub.s32 %s12, 1
      %s243 = sadd.s32 %s23, %s24
      %p244 = scmp.lt.s32.totalorder %s22, 1
      %s245 = scalar_select %p244, %s22, 1
      %p246 = scmp.lt.s32.totalorder %s243, 9
      %s247 = scalar_select %p246, %s243, 9
      %s248 = smul.addr %s247, 20
      %s249 = smul.addr %s245, 200
      %s250 = sadd.s32 %s248, %s249
      %s251 = smul.addr %s250, 4
      %s252 = scalar_lea.vmem %s0, %s251
      %p253 = pneg %p61
      %p254 = pneg %p58
      %p255 = scmp.lt.s32.totalorder %s24, 2
      %s256 = scalar_select %p255, %s24, 2
      %s257 = smul.addr %s256, 9
      %s258 = smul.addr %s257, 4
      %s259 = scalar_lea.vmem %s1, %s258
      %p260 = pneg %p87
      %p261 = pneg %p84
      %p262 = pneg %p108
      %p263 = pneg %p105
      %p264 = pneg %p136
      %p265 = pneg %p133
      %p266 = scmp.lt.s32.totalorder %s22, 1
      %s267 = scalar_select %p266, %s22, 1
      %p268 = scmp.lt.s32.totalorder %s23, 7
      %s269 = scalar_select %p268, %s23, 7
      %s270 = smul.addr %s269, 8
      %s271 = smul.addr %s267, 64
      %s272 = sadd.s32 %s270, %s271
      %s273 = smul.addr %s272, 8
      %s274 = scalar_lea.vmem %s3, %s273
      %p275 = pneg %p164
      %p276 = pneg %p161
      %p277 = scmp.lt.s32.totalorder %s22, 1
      %s278 = scalar_select %p277, %s22, 1
      %p279 = scmp.lt.s32.totalorder %s23, 7
      %s280 = scalar_select %p279, %s23, 7
      %s281 = smul.addr %s278, 8
      %s282 = sadd.s32 %s280, %s281
      %s283 = scalar_lea.vmem %s4, %s282
      %p284 = pneg %p192
      %p285 = pneg %p189
      %p286 = scmp.lt.s32.totalorder %s22, 1
      %s287 = scalar_select %p286, %s22, 1
      %p288 = scmp.lt.s32.totalorder %s23, 7
      %s289 = scalar_select %p288, %s23, 7
      %s290 = smul.addr %s287, 8
      %s291 = sadd.s32 %s289, %s290
      %s292 = scalar_lea.vmem %s5, %s291
      %s293 = sadd.s32 %s23, %s24
      %p294 = scmp.lt.s32.totalorder %s22, 1
      %s295 = scalar_select %p294, %s22, 1
      %p296 = scmp.lt.s32.totalorder %s293, 9
      %s297 = scalar_select %p296, %s293, 9
      %s298 = smul.addr %s297, 20
      %s299 = smul.addr %s295, 200
      %s300 = sadd.s32 %s298, %s299
      %s301 = smul.addr %s300, 4
      %s302 = scalar_lea.vmem %s0, %s301
      %s303 = sadd.s32 %s23, %s24
      %p304 = scmp.lt.s32.totalorder %s24, 2
      %s305 = scalar_select %p304, %s24, 2
      %s306 = smul.addr %s305, 9
      %s307 = smul.addr %s306, 4
      %s308 = scalar_lea.vmem %s1, %s307
      %p309 = scmp.lt.s32.totalorder %s22, 1
      %s310 = scalar_select %p309, %s22, 1
      %p311 = scmp.lt.s32.totalorder %s23, 7
      %s312 = scalar_select %p311, %s23, 7
      %s313 = smul.addr %s312, 8
      %s314 = smul.addr %s310, 64
      %s315 = sadd.s32 %s313, %s314
      %s316 = smul.addr %s315, 8
      %s317 = scalar_lea.vmem %s3, %s316
      %p318 = scmp.lt.s32.totalorder %s22, 1
      %s319 = scalar_select %p318, %s22, 1
      %p320 = scmp.lt.s32.totalorder %s23, 7
      %s321 = scalar_select %p320, %s23, 7
      %s322 = smul.addr %s319, 8
      %s323 = sadd.s32 %s321, %s322
      %s324 = scalar_lea.vmem %s4, %s323
      %p325 = scmp.lt.s32.totalorder %s22, 1
      %s326 = scalar_select %p325, %s22, 1
      %p327 = scmp.lt.s32.totalorder %s23, 7
      %s328 = scalar_select %p327, %s23, 7
      %s329 = smul.addr %s326, 8
      %s330 = sadd.s32 %s328, %s329
      %s331 = scalar_lea.vmem %s5, %s330
      %p333 = scmp.eq.s32.totalorder %s24, 0
      // Predicated region
      $region33: #{decode_forward.4} parent=31 // pred_check
        %p334 = pneg %p333
      $region34: #{decode_forward.4} parent=31 // pred_check_branch
        %336 = sbr.rel (%p334) target = $region36
      $region35: #{decode_forward.4} parent=31 // pred_region
        %vm337 = vcmask 31744
        %338 = vst.msk [vmem:[#allocation2] sm:$0xff] %vm337, 0.0
        %339 = vst.msk [vmem:[#allocation2 + $0x8] sm:$0xff] %vm337, 0.0
        %340 = vst.msk [vmem:[#allocation2 + $0x10] sm:$0xff] %vm337, 0.0
        %341 = vst.msk [vmem:[#allocation2 + $0x18] sm:$0xff] %vm337, 0.0
        %342 = vst.msk [vmem:[#allocation2 + $0x20] sm:$0xff] %vm337, 0.0
        %343 = vst.msk [vmem:[#allocation2 + $0x28] sm:$0xff] %vm337, 0.0
        %344 = vst.msk [vmem:[#allocation2 + $0x30] sm:$0xff] %vm337, 0.0
        %345 = vst.msk [vmem:[#allocation2 + $0x38] sm:$0xff] %vm337, 0.0
      $region36: #{decode_forward.4} parent=31 // pred_fallthru
        _
      %v346 = vld [vmem:[#allocation2] sm:$0xff]
      %v347 = vld [vmem:[#allocation2 + $0x8] sm:$0xff]
      %v348 = vld [vmem:[#allocation2 + $0x10] sm:$0xff]
      %v349 = vld [vmem:[#allocation2 + $0x18] sm:$0xff]
      %v350 = vld [vmem:[#allocation2 + $0x20] sm:$0xff]
      %v351 = vld [vmem:[#allocation2 + $0x28] sm:$0xff]
      %v352 = vld [vmem:[#allocation2 + $0x30] sm:$0xff]
      %v353 = vld [vmem:[#allocation2 + $0x38] sm:$0xff]
      %v354 = vld [vmem:[%s302] sm:$0xf]
      %v355 = vld [vmem:[%s302 + $0x8] sm:$0xf]
      %v356 = vld [vmem:[%s302 + $0x10] sm:$0xf]
      %v357 = vld [vmem:[%s302 + $0x18] sm:$0xf]
      %v358 = vld [vmem:[%s302 + $0x20] sm:$0xf]
      %v359 = vld [vmem:[%s302 + $0x28] sm:$0xf]
      %v360 = vld [vmem:[%s302 + $0x30] sm:$0xf]
      %v361 = vld [vmem:[%s302 + $0x38] sm:$0xf]
      %v362 = vld [vmem:[%s308] sm:$0xf]
      %v371 = vunpack.c.l.b16 %v354
      %v372 = vunpack.c.l.b16 %v355
      %v373 = vunpack.c.l.b16 %v356
      %v374 = vunpack.c.l.b16 %v357
      %v375 = vunpack.c.l.b16 %v358
      %v376 = vunpack.c.l.b16 %v359
      %v377 = vunpack.c.l.b16 %v360
      %v378 = vunpack.c.l.b16 %v361
      %v379 = vpack.c.b16 %v372, %v371
      %v380 = vpack.c.b16 %v374, %v373
      %v381 = vpack.c.b16 %v376, %v375
      %v382 = vpack.c.b16 %v378, %v377
      %vm383 = vcmask 64512
      %v385 = vsel %vm383, %v379, 0
      %v388 = vsel %vm383, %v380, 0
      %v391 = vsel %vm383, %v381, 0
      %v394 = vsel %vm383, %v382, 0
      %vm396 = vcmask 1043456
      %v398 = vsel %vm396, %v362, 0
      %400 = vmatprep.subr.bf16.mxu0 0
      %401 = vmatpush1.bf16.msra.mxu0 0
      %402 = vmatprep.subr.bf16.mxu0 0
      %403 = vmatpush1.bf16.msra.mxu0 0
      %404 = vmatprep.subr.bf16.mxu0 0
      %405 = vmatpush1.bf16.msra.mxu0 0
      %406 = vmatprep.subr.bf16.mxu0 0
      %407 = vmatpush1.bf16.msra.mxu0 0
      %408 = vmatprep.subr.bf16.mxu0 0
      %409 = vmatpush1.bf16.msra.mxu0 0
      %410 = vmatprep.subr.bf16.mxu0 0
      %411 = vmatpush1.bf16.msra.mxu0 0
      %412 = vmatprep.subr.bf16.mxu0 0
      %413 = vmatpush1.bf16.msra.mxu0 0
      %414 = vmatprep.subr.bf16.mxu0 0
      %415 = vmatpush1.bf16.msra.mxu0 %v398
      %416 = vmatprep.subr.bf16.mxu0 0
      %417 = vmatpush2.bf16.msra.mxu0 0
      %418 = vmatprep.subr.bf16.mxu0 0
      %419 = vmatpush2.bf16.msra.mxu0 0
      %420 = vmatprep.subr.bf16.mxu0 0
      %421 = vmatpush2.bf16.msra.mxu0 0
      %422 = vmatprep.subr.bf16.mxu0 0
      %423 = vmatpush2.bf16.msra.mxu0 0
      %424 = vmatprep.subr.bf16.mxu0 0
      %425 = vmatpush2.bf16.msra.mxu0 0
      %426 = vmatprep.subr.bf16.mxu0 0
      %427 = vmatpush2.bf16.msra.mxu0 0
      %428 = vmatprep.subr.bf16.mxu0 0
      %429 = vmatpush2.bf16.msra.mxu0 0
      %430 = vmatprep.subr.bf16.mxu0 0
      %431 = vmatpush2.bf16.msra.mxu0 0
      %432 = vmatprep.mubr.bf16.mxu0 0
      %433 = vmatmul.mubr.bf16.gmra.mxu0 %v385
      %v434 = vpop.f32.mrf.mxu0
      %v435 = vadd.f32 0.0, %v434
      %v436 = vpop.f32.mrf.mxu0
      %v437 = vpop.f32.mrf.mxu0
      %v438 = vadd.f32 0.0, %v437
      %v439 = vpop.f32.mrf.mxu0
      %440 = vmatprep.mubr.bf16.mxu0 0
      %441 = vmatmul.mubr.bf16.gmra.mxu0 %v388
      %v442 = vpop.f32.mrf.mxu0
      %v443 = vadd.f32 0.0, %v442
      %v444 = vpop.f32.mrf.mxu0
      %v445 = vpop.f32.mrf.mxu0
      %v446 = vadd.f32 0.0, %v445
      %v447 = vpop.f32.mrf.mxu0
      %448 = vmatprep.mubr.bf16.mxu0 0
      %449 = vmatmul.mubr.bf16.gmra.mxu0 %v391
      %v450 = vpop.f32.mrf.mxu0
      %v451 = vadd.f32 0.0, %v450
      %v452 = vpop.f32.mrf.mxu0
      %v453 = vpop.f32.mrf.mxu0
      %v454 = vadd.f32 0.0, %v453
      %v455 = vpop.f32.mrf.mxu0
      %456 = vmatprep.mubr.bf16.mxu0 0
      %457 = vmatmul.mubr.bf16.gmra.mxu0 %v394
      %v458 = vpop.f32.mrf.mxu0
      %v459 = vadd.f32 0.0, %v458
      %v460 = vpop.f32.mrf.mxu0
      %v461 = vpop.f32.mrf.mxu0
      %v462 = vadd.f32 0.0, %v461
      %v463 = vpop.f32.mrf.mxu0
      %464 = vdwg.mxu0
      %v465 = vadd.f32 %v346, %v435
      %v466 = vadd.f32 %v347, %v438
      %v467 = vadd.f32 %v348, %v443
      %v468 = vadd.f32 %v349, %v446
      %v469 = vadd.f32 %v350, %v451
      %v470 = vadd.f32 %v351, %v454
      %v471 = vadd.f32 %v352, %v459
      %v472 = vadd.f32 %v353, %v462
      %v473 = vld [vmem:[%s302] sm:$0xf]
      %v474 = vld [vmem:[%s302 + $0x4] sm:$0x1]
      %v475 = vld [vmem:[%s302 + $0x8] sm:$0xf]
      %v476 = vld [vmem:[%s302 + $0xc] sm:$0x1]
      %v477 = vld [vmem:[%s302 + $0x10] sm:$0xf]
      %v478 = vld [vmem:[%s302 + $0x14] sm:$0x1]
      %v479 = vld [vmem:[%s302 + $0x18] sm:$0xf]
      %v480 = vld [vmem:[%s302 + $0x1c] sm:$0x1]
      %v481 = vld [vmem:[%s302 + $0x20] sm:$0xf]
      %v482 = vld [vmem:[%s302 + $0x24] sm:$0x1]
      %v483 = vld [vmem:[%s302 + $0x28] sm:$0xf]
      %v484 = vld [vmem:[%s302 + $0x2c] sm:$0x1]
      %v485 = vld [vmem:[%s302 + $0x30] sm:$0xf]
      %v486 = vld [vmem:[%s302 + $0x34] sm:$0x1]
      %v487 = vld [vmem:[%s302 + $0x38] sm:$0xf]
      %v488 = vld [vmem:[%s302 + $0x3c] sm:$0x1]
      %vm489 = vsmask.f32 3328
      %vm490 = vsmask.f32 7440
      %vm491 = vmor %vm489, %vm490
      %v493 = vshrl.u32 %v473, 16
      %v495 = vrot.slane %v493, 4
      %v496 = vshll.u32 %v473, 16
      %v498 = vrot.slane %v496, 5
      %v499 = vor.u32 %v495, %v498
      %v500 = vrot.slane %v499, 4
      %v502 = vshll.u32 %v474, 16
      %v504 = vrot.slane %v502, 5
      %v505 = vsel %vm491, %v500, %v504
      %v507 = vshrl.u32 %v475, 16
      %v509 = vrot.slane %v507, 4
      %v510 = vshll.u32 %v475, 16
      %v512 = vrot.slane %v510, 5
      %v513 = vor.u32 %v509, %v512
      %v514 = vrot.slane %v513, 4
      %v516 = vshll.u32 %v476, 16
      %v518 = vrot.slane %v516, 5
      %v519 = vsel %vm491, %v514, %v518
      %v521 = vshrl.u32 %v477, 16
      %v523 = vrot.slane %v521, 4
      %v524 = vshll.u32 %v477, 16
      %v526 = vrot.slane %v524, 5
      %v527 = vor.u32 %v523, %v526
      %v528 = vrot.slane %v527, 4
      %v530 = vshll.u32 %v478, 16
      %v532 = vrot.slane %v530, 5
      %v533 = vsel %vm491, %v528, %v532
      %v535 = vshrl.u32 %v479, 16
      %v537 = vrot.slane %v535, 4
      %v538 = vshll.u32 %v479, 16
      %v540 = vrot.slane %v538, 5
      %v541 = vor.u32 %v537, %v540
      %v542 = vrot.slane %v541, 4
      %v544 = vshll.u32 %v480, 16
      %v546 = vrot.slane %v544, 5
      %v547 = vsel %vm491, %v542, %v546
      %v549 = vshrl.u32 %v481, 16
      %v551 = vrot.slane %v549, 4
      %v552 = vshll.u32 %v481, 16
      %v554 = vrot.slane %v552, 5
      %v555 = vor.u32 %v551, %v554
      %v556 = vrot.slane %v555, 4
      %v558 = vshll.u32 %v482, 16
      %v560 = vrot.slane %v558, 5
      %v561 = vsel %vm491, %v556, %v560
      %v563 = vshrl.u32 %v483, 16
      %v565 = vrot.slane %v563, 4
      %v566 = vshll.u32 %v483, 16
      %v568 = vrot.slane %v566, 5
      %v569 = vor.u32 %v565, %v568
      %v570 = vrot.slane %v569, 4
      %v572 = vshll.u32 %v484, 16
      %v574 = vrot.slane %v572, 5
      %v575 = vsel %vm491, %v570, %v574
      %v577 = vshrl.u32 %v485, 16
      %v579 = vrot.slane %v577, 4
      %v580 = vshll.u32 %v485, 16
      %v582 = vrot.slane %v580, 5
      %v583 = vor.u32 %v579, %v582
      %v584 = vrot.slane %v583, 4
      %v586 = vshll.u32 %v486, 16
      %v588 = vrot.slane %v586, 5
      %v589 = vsel %vm491, %v584, %v588
      %v591 = vshrl.u32 %v487, 16
      %v593 = vrot.slane %v591, 4
      %v594 = vshll.u32 %v487, 16
      %v596 = vrot.slane %v594, 5
      %v597 = vor.u32 %v593, %v596
      %v598 = vrot.slane %v597, 4
      %v600 = vshll.u32 %v488, 16
      %v602 = vrot.slane %v600, 5
      %v603 = vsel %vm491, %v598, %v602
      %s604 = scalar_lea.vmem %s308, 4
      %v605 = vld [vmem:[%s604] sm:$0xf]
      %v606 = vunpack.c.l.b16 %v505
      %v607 = vunpack.c.l.b16 %v519
      %v608 = vunpack.c.l.b16 %v533
      %v609 = vunpack.c.l.b16 %v547
      %v610 = vunpack.c.l.b16 %v561
      %v611 = vunpack.c.l.b16 %v575
      %v612 = vunpack.c.l.b16 %v589
      %v613 = vunpack.c.l.b16 %v603
      %v614 = vpack.c.b16 %v607, %v606
      %v615 = vpack.c.b16 %v609, %v608
      %v616 = vpack.c.b16 %v611, %v610
      %v617 = vpack.c.b16 %v613, %v612
      %v619 = vsel %vm383, %v614, 0
      %v622 = vsel %vm383, %v615, 0
      %v625 = vsel %vm383, %v616, 0
      %v628 = vsel %vm383, %v617, 0
      %v631 = vsel %vm396, %v605, 0
      %633 = vmatprep.subr.bf16.mxu0 0
      %634 = vmatpush1.bf16.msra.mxu0 0
      %635 = vmatprep.subr.bf16.mxu0 0
      %636 = vmatpush1.bf16.msra.mxu0 0
      %637 = vmatprep.subr.bf16.mxu0 0
      %638 = vmatpush1.bf16.msra.mxu0 0
      %639 = vmatprep.subr.bf16.mxu0 0
      %640 = vmatpush1.bf16.msra.mxu0 0
      %641 = vmatprep.subr.bf16.mxu0 0
      %642 = vmatpush1.bf16.msra.mxu0 0
      %643 = vmatprep.subr.bf16.mxu0 0
      %644 = vmatpush1.bf16.msra.mxu0 0
      %645 = vmatprep.subr.bf16.mxu0 0
      %646 = vmatpush1.bf16.msra.mxu0 0
      %647 = vmatprep.subr.bf16.mxu0 0
      %648 = vmatpush1.bf16.msra.mxu0 %v631
      %649 = vmatprep.subr.bf16.mxu0 0
      %650 = vmatpush2.bf16.msra.mxu0 0
      %651 = vmatprep.subr.bf16.mxu0 0
      %652 = vmatpush2.bf16.msra.mxu0 0
      %653 = vmatprep.subr.bf16.mxu0 0
      %654 = vmatpush2.bf16.msra.mxu0 0
      %655 = vmatprep.subr.bf16.mxu0 0
      %656 = vmatpush2.bf16.msra.mxu0 0
      %657 = vmatprep.subr.bf16.mxu0 0
      %658 = vmatpush2.bf16.msra.mxu0 0
      %659 = vmatprep.subr.bf16.mxu0 0
      %660 = vmatpush2.bf16.msra.mxu0 0
      %661 = vmatprep.subr.bf16.mxu0 0
      %662 = vmatpush2.bf16.msra.mxu0 0
      %663 = vmatprep.subr.bf16.mxu0 0
      %664 = vmatpush2.bf16.msra.mxu0 0
      %665 = vmatprep.mubr.bf16.mxu0 0
      %666 = vmatmul.mubr.bf16.gmra.mxu0 %v619
      %v667 = vpop.f32.mrf.mxu0
      %v668 = vadd.f32 0.0, %v667
      %v669 = vpop.f32.mrf.mxu0
      %v670 = vpop.f32.mrf.mxu0
      %v671 = vadd.f32 0.0, %v670
      %v672 = vpop.f32.mrf.mxu0
      %673 = vmatprep.mubr.bf16.mxu0 0
      %674 = vmatmul.mubr.bf16.gmra.mxu0 %v622
      %v675 = vpop.f32.mrf.mxu0
      %v676 = vadd.f32 0.0, %v675
      %v677 = vpop.f32.mrf.mxu0
      %v678 = vpop.f32.mrf.mxu0
      %v679 = vadd.f32 0.0, %v678
      %v680 = vpop.f32.mrf.mxu0
      %681 = vmatprep.mubr.bf16.mxu0 0
      %682 = vmatmul.mubr.bf16.gmra.mxu0 %v625
      %v683 = vpop.f32.mrf.mxu0
      %v684 = vadd.f32 0.0, %v683
      %v685 = vpop.f32.mrf.mxu0
      %v686 = vpop.f32.mrf.mxu0
      %v687 = vadd.f32 0.0, %v686
      %v688 = vpop.f32.mrf.mxu0
      %689 = vmatprep.mubr.bf16.mxu0 0
      %690 = vmatmul.mubr.bf16.gmra.mxu0 %v628
      %v691 = vpop.f32.mrf.mxu0
      %v692 = vadd.f32 0.0, %v691
      %v693 = vpop.f32.mrf.mxu0
      %v694 = vpop.f32.mrf.mxu0
      %v695 = vadd.f32 0.0, %v694
      %v696 = vpop.f32.mrf.mxu0
      %697 = vdwg.mxu0
      %v698 = vadd.f32 %v465, %v668
      %v699 = vadd.f32 %v466, %v671
      %v700 = vadd.f32 %v467, %v676
      %v701 = vadd.f32 %v468, %v679
      %v702 = vadd.f32 %v469, %v684
      %v703 = vadd.f32 %v470, %v687
      %v704 = vadd.f32 %v471, %v692
      %v705 = vadd.f32 %v472, %v695
      %v706 = vld [vmem:[%s302] sm:$0xe]
      %v707 = vld [vmem:[%s302 + $0x8] sm:$0xe]
      %v708 = vld [vmem:[%s302 + $0x10] sm:$0xe]
      %v709 = vld [vmem:[%s302 + $0x18] sm:$0xe]
      %v710 = vld [vmem:[%s302 + $0x20] sm:$0xe]
      %v711 = vld [vmem:[%s302 + $0x28] sm:$0xe]
      %v712 = vld [vmem:[%s302 + $0x30] sm:$0xe]
      %v713 = vld [vmem:[%s302 + $0x38] sm:$0xe]
      %vm730 = vcmask 1042432
      %vm731 = vcmask 1046532
      %vm732 = vmor %vm730, %vm731
      %v733 = vrot.slane %v706, 5
      %v734 = vrot.slane %v733, 4
      %v735 = vrot.slane %v474, 5
      %v736 = vsel %vm732, %v734, %v735
      %v737 = vrot.slane %v707, 5
      %v738 = vrot.slane %v737, 4
      %v739 = vrot.slane %v476, 5
      %v740 = vsel %vm732, %v738, %v739
      %v741 = vrot.slane %v708, 5
      %v742 = vrot.slane %v741, 4
      %v743 = vrot.slane %v478, 5
      %v744 = vsel %vm732, %v742, %v743
      %v745 = vrot.slane %v709, 5
      %v746 = vrot.slane %v745, 4
      %v747 = vrot.slane %v480, 5
      %v748 = vsel %vm732, %v746, %v747
      %v749 = vrot.slane %v710, 5
      %v750 = vrot.slane %v749, 4
      %v751 = vrot.slane %v482, 5
      %v752 = vsel %vm732, %v750, %v751
      %v753 = vrot.slane %v711, 5
      %v754 = vrot.slane %v753, 4
      %v755 = vrot.slane %v484, 5
      %v756 = vsel %vm732, %v754, %v755
      %v757 = vrot.slane %v712, 5
      %v758 = vrot.slane %v757, 4
      %v759 = vrot.slane %v486, 5
      %v760 = vsel %vm732, %v758, %v759
      %v761 = vrot.slane %v713, 5
      %v762 = vrot.slane %v761, 4
      %v763 = vrot.slane %v488, 5
      %v764 = vsel %vm732, %v762, %v763
      %s765 = scalar_lea.vmem %s308, 8
      %v766 = vld [vmem:[%s765] sm:$0xf]
      %v767 = vunpack.c.l.b16 %v736
      %v768 = vunpack.c.l.b16 %v740
      %v769 = vunpack.c.l.b16 %v744
      %v770 = vunpack.c.l.b16 %v748
      %v771 = vunpack.c.l.b16 %v752
      %v772 = vunpack.c.l.b16 %v756
      %v773 = vunpack.c.l.b16 %v760
      %v774 = vunpack.c.l.b16 %v764
      %v775 = vpack.c.b16 %v768, %v767
      %v776 = vpack.c.b16 %v770, %v769
      %v777 = vpack.c.b16 %v772, %v771
      %v778 = vpack.c.b16 %v774, %v773
      %v780 = vsel %vm383, %v775, 0
      %v783 = vsel %vm383, %v776, 0
      %v786 = vsel %vm383, %v777, 0
      %v789 = vsel %vm383, %v778, 0
      %v792 = vsel %vm396, %v766, 0
      %794 = vmatprep.subr.bf16.mxu0 0
      %795 = vmatpush1.bf16.msra.mxu0 0
      %796 = vmatprep.subr.bf16.mxu0 0
      %797 = vmatpush1.bf16.msra.mxu0 0
      %798 = vmatprep.subr.bf16.mxu0 0
      %799 = vmatpush1.bf16.msra.mxu0 0
      %800 = vmatprep.subr.bf16.mxu0 0
      %801 = vmatpush1.bf16.msra.mxu0 0
      %802 = vmatprep.subr.bf16.mxu0 0
      %803 = vmatpush1.bf16.msra.mxu0 0
      %804 = vmatprep.subr.bf16.mxu0 0
      %805 = vmatpush1.bf16.msra.mxu0 0
      %806 = vmatprep.subr.bf16.mxu0 0
      %807 = vmatpush1.bf16.msra.mxu0 0
      %808 = vmatprep.subr.bf16.mxu0 0
      %809 = vmatpush1.bf16.msra.mxu0 %v792
      %810 = vmatprep.subr.bf16.mxu0 0
      %811 = vmatpush2.bf16.msra.mxu0 0
      %812 = vmatprep.subr.bf16.mxu0 0
      %813 = vmatpush2.bf16.msra.mxu0 0
      %814 = vmatprep.subr.bf16.mxu0 0
      %815 = vmatpush2.bf16.msra.mxu0 0
      %816 = vmatprep.subr.bf16.mxu0 0
      %817 = vmatpush2.bf16.msra.mxu0 0
      %818 = vmatprep.subr.bf16.mxu0 0
      %819 = vmatpush2.bf16.msra.mxu0 0
      %820 = vmatprep.subr.bf16.mxu0 0
      %821 = vmatpush2.bf16.msra.mxu0 0
      %822 = vmatprep.subr.bf16.mxu0 0
      %823 = vmatpush2.bf16.msra.mxu0 0
      %824 = vmatprep.subr.bf16.mxu0 0
      %825 = vmatpush2.bf16.msra.mxu0 0
      %826 = vmatprep.mubr.bf16.mxu0 0
      %827 = vmatmul.mubr.bf16.gmra.mxu0 %v780
      %v828 = vpop.f32.mrf.mxu0
      %v829 = vadd.f32 0.0, %v828
      %v830 = vpop.f32.mrf.mxu0
      %v831 = vpop.f32.mrf.mxu0
      %v832 = vadd.f32 0.0, %v831
      %v833 = vpop.f32.mrf.mxu0
      %834 = vmatprep.mubr.bf16.mxu0 0
      %835 = vmatmul.mubr.bf16.gmra.mxu0 %v783
      %v836 = vpop.f32.mrf.mxu0
      %v837 = vadd.f32 0.0, %v836
      %v838 = vpop.f32.mrf.mxu0
      %v839 = vpop.f32.mrf.mxu0
      %v840 = vadd.f32 0.0, %v839
      %v841 = vpop.f32.mrf.mxu0
      %842 = vmatprep.mubr.bf16.mxu0 0
      %843 = vmatmul.mubr.bf16.gmra.mxu0 %v786
      %v844 = vpop.f32.mrf.mxu0
      %v845 = vadd.f32 0.0, %v844
      %v846 = vpop.f32.mrf.mxu0
      %v847 = vpop.f32.mrf.mxu0
      %v848 = vadd.f32 0.0, %v847
      %v849 = vpop.f32.mrf.mxu0
      %850 = vmatprep.mubr.bf16.mxu0 0
      %851 = vmatmul.mubr.bf16.gmra.mxu0 %v789
      %v852 = vpop.f32.mrf.mxu0
      %v853 = vadd.f32 0.0, %v852
      %v854 = vpop.f32.mrf.mxu0
      %v855 = vpop.f32.mrf.mxu0
      %v856 = vadd.f32 0.0, %v855
      %v857 = vpop.f32.mrf.mxu0
      %858 = vdwg.mxu0
      %v859 = vadd.f32 %v698, %v829
      %v860 = vadd.f32 %v699, %v832
      %v861 = vadd.f32 %v700, %v837
      %v862 = vadd.f32 %v701, %v840
      %v863 = vadd.f32 %v702, %v845
      %v864 = vadd.f32 %v703, %v848
      %v865 = vadd.f32 %v704, %v853
      %v866 = vadd.f32 %v705, %v856
      %s867 = scalar_lea.vmem %s302, 8
      %v868 = vld [vmem:[%s867] sm:$0xf]
      %v869 = vld [vmem:[%s867 + $0x8] sm:$0xf]
      %v870 = vld [vmem:[%s867 + $0x10] sm:$0xf]
      %v871 = vld [vmem:[%s867 + $0x18] sm:$0xf]
      %v872 = vld [vmem:[%s867 + $0x20] sm:$0xf]
      %v873 = vld [vmem:[%s867 + $0x28] sm:$0xf]
      %v874 = vld [vmem:[%s867 + $0x30] sm:$0xf]
      %v875 = vld [vmem:[%s867 + $0x38] sm:$0xf]
      %s876 = scalar_lea.vmem %s308, 12
      %v877 = vld [vmem:[%s876] sm:$0xf]
      %v886 = vunpack.c.l.b16 %v868
      %v887 = vunpack.c.l.b16 %v869
      %v888 = vunpack.c.l.b16 %v870
      %v889 = vunpack.c.l.b16 %v871
      %v890 = vunpack.c.l.b16 %v872
      %v891 = vunpack.c.l.b16 %v873
      %v892 = vunpack.c.l.b16 %v874
      %v893 = vunpack.c.l.b16 %v875
      %v894 = vpack.c.b16 %v887, %v886
      %v895 = vpack.c.b16 %v889, %v888
      %v896 = vpack.c.b16 %v891, %v890
      %v897 = vpack.c.b16 %v893, %v892
      %v899 = vsel %vm383, %v894, 0
      %v902 = vsel %vm383, %v895, 0
      %v905 = vsel %vm383, %v896, 0
      %v908 = vsel %vm383, %v897, 0
      %v911 = vsel %vm396, %v877, 0
      %913 = vmatprep.subr.bf16.mxu0 0
      %914 = vmatpush1.bf16.msra.mxu0 0
      %915 = vmatprep.subr.bf16.mxu0 0
      %916 = vmatpush1.bf16.msra.mxu0 0
      %917 = vmatprep.subr.bf16.mxu0 0
      %918 = vmatpush1.bf16.msra.mxu0 0
      %919 = vmatprep.subr.bf16.mxu0 0
      %920 = vmatpush1.bf16.msra.mxu0 0
      %921 = vmatprep.subr.bf16.mxu0 0
      %922 = vmatpush1.bf16.msra.mxu0 0
      %923 = vmatprep.subr.bf16.mxu0 0
      %924 = vmatpush1.bf16.msra.mxu0 0
      %925 = vmatprep.subr.bf16.mxu0 0
      %926 = vmatpush1.bf16.msra.mxu0 0
      %927 = vmatprep.subr.bf16.mxu0 0
      %928 = vmatpush1.bf16.msra.mxu0 %v911
      %929 = vmatprep.subr.bf16.mxu0 0
      %930 = vmatpush2.bf16.msra.mxu0 0
      %931 = vmatprep.subr.bf16.mxu0 0
      %932 = vmatpush2.bf16.msra.mxu0 0
      %933 = vmatprep.subr.bf16.mxu0 0
      %934 = vmatpush2.bf16.msra.mxu0 0
      %935 = vmatprep.subr.bf16.mxu0 0
      %936 = vmatpush2.bf16.msra.mxu0 0
      %937 = vmatprep.subr.bf16.mxu0 0
      %938 = vmatpush2.bf16.msra.mxu0 0
      %939 = vmatprep.subr.bf16.mxu0 0
      %940 = vmatpush2.bf16.msra.mxu0 0
      %941 = vmatprep.subr.bf16.mxu0 0
      %942 = vmatpush2.bf16.msra.mxu0 0
      %943 = vmatprep.subr.bf16.mxu0 0
      %944 = vmatpush2.bf16.msra.mxu0 0
      %945 = vmatprep.mubr.bf16.mxu0 0
      %946 = vmatmul.mubr.bf16.gmra.mxu0 %v899
      %v947 = vpop.f32.mrf.mxu0
      %v948 = vadd.f32 0.0, %v947
      %v949 = vpop.f32.mrf.mxu0
      %v950 = vpop.f32.mrf.mxu0
      %v951 = vadd.f32 0.0, %v950
      %v952 = vpop.f32.mrf.mxu0
      %953 = vmatprep.mubr.bf16.mxu0 0
      %954 = vmatmul.mubr.bf16.gmra.mxu0 %v902
      %v955 = vpop.f32.mrf.mxu0
      %v956 = vadd.f32 0.0, %v955
      %v957 = vpop.f32.mrf.mxu0
      %v958 = vpop.f32.mrf.mxu0
      %v959 = vadd.f32 0.0, %v958
      %v960 = vpop.f32.mrf.mxu0
      %961 = vmatprep.mubr.bf16.mxu0 0
      %962 = vmatmul.mubr.bf16.gmra.mxu0 %v905
      %v963 = vpop.f32.mrf.mxu0
      %v964 = vadd.f32 0.0, %v963
      %v965 = vpop.f32.mrf.mxu0
      %v966 = vpop.f32.mrf.mxu0
      %v967 = vadd.f32 0.0, %v966
      %v968 = vpop.f32.mrf.mxu0
      %969 = vmatprep.mubr.bf16.mxu0 0
      %970 = vmatmul.mubr.bf16.gmra.mxu0 %v908
      %v971 = vpop.f32.mrf.mxu0
      %v972 = vadd.f32 0.0, %v971
      %v973 = vpop.f32.mrf.mxu0
      %v974 = vpop.f32.mrf.mxu0
      %v975 = vadd.f32 0.0, %v974
      %v976 = vpop.f32.mrf.mxu0
      %977 = vdwg.mxu0
      %v978 = vadd.f32 %v859, %v948
      %v979 = vadd.f32 %v860, %v951
      %v980 = vadd.f32 %v861, %v956
      %v981 = vadd.f32 %v862, %v959
      %v982 = vadd.f32 %v863, %v964
      %v983 = vadd.f32 %v864, %v967
      %v984 = vadd.f32 %v865, %v972
      %v985 = vadd.f32 %v866, %v975
      %v986 = vld [vmem:[%s867] sm:$0xf]
      %v987 = vld [vmem:[%s867 + $0x4] sm:$0x1]
      %v988 = vld [vmem:[%s867 + $0x8] sm:$0xf]
      %v989 = vld [vmem:[%s867 + $0xc] sm:$0x1]
      %v990 = vld [vmem:[%s867 + $0x10] sm:$0xf]
      %v991 = vld [vmem:[%s867 + $0x14] sm:$0x1]
      %v992 = vld [vmem:[%s867 + $0x18] sm:$0xf]
      %v993 = vld [vmem:[%s867 + $0x1c] sm:$0x1]
      %v994 = vld [vmem:[%s867 + $0x20] sm:$0xf]
      %v995 = vld [vmem:[%s867 + $0x24] sm:$0x1]
      %v996 = vld [vmem:[%s867 + $0x28] sm:$0xf]
      %v997 = vld [vmem:[%s867 + $0x2c] sm:$0x1]
      %v998 = vld [vmem:[%s867 + $0x30] sm:$0xf]
      %v999 = vld [vmem:[%s867 + $0x34] sm:$0x1]
      %v1000 = vld [vmem:[%s867 + $0x38] sm:$0xf]
      %v1001 = vld [vmem:[%s867 + $0x3c] sm:$0x1]
      %v1003 = vshrl.u32 %v986, 16
      %v1005 = vrot.slane %v1003, 4
      %v1006 = vshll.u32 %v986, 16
      %v1008 = vrot.slane %v1006, 5
      %v1009 = vor.u32 %v1005, %v1008
      %v1010 = vrot.slane %v1009, 4
      %v1012 = vshll.u32 %v987, 16
      %v1014 = vrot.slane %v1012, 5
      %v1015 = vsel %vm491, %v1010, %v1014
      %v1017 = vshrl.u32 %v988, 16
      %v1019 = vrot.slane %v1017, 4
      %v1020 = vshll.u32 %v988, 16
      %v1022 = vrot.slane %v1020, 5
      %v1023 = vor.u32 %v1019, %v1022
      %v1024 = vrot.slane %v1023, 4
      %v1026 = vshll.u32 %v989, 16
      %v1028 = vrot.slane %v1026, 5
      %v1029 = vsel %vm491, %v1024, %v1028
      %v1031 = vshrl.u32 %v990, 16
      %v1033 = vrot.slane %v1031, 4
      %v1034 = vshll.u32 %v990, 16
      %v1036 = vrot.slane %v1034, 5
      %v1037 = vor.u32 %v1033, %v1036
      %v1038 = vrot.slane %v1037, 4
      %v1040 = vshll.u32 %v991, 16
      %v1042 = vrot.slane %v1040, 5
      %v1043 = vsel %vm491, %v1038, %v1042
      %v1045 = vshrl.u32 %v992, 16
      %v1047 = vrot.slane %v1045, 4
      %v1048 = vshll.u32 %v992, 16
      %v1050 = vrot.slane %v1048, 5
      %v1051 = vor.u32 %v1047, %v1050
      %v1052 = vrot.slane %v1051, 4
      %v1054 = vshll.u32 %v993, 16
      %v1056 = vrot.slane %v1054, 5
      %v1057 = vsel %vm491, %v1052, %v1056
      %v1059 = vshrl.u32 %v994, 16
      %v1061 = vrot.slane %v1059, 4
      %v1062 = vshll.u32 %v994, 16
      %v1064 = vrot.slane %v1062, 5
      %v1065 = vor.u32 %v1061, %v1064
      %v1066 = vrot.slane %v1065, 4
      %v1068 = vshll.u32 %v995, 16
      %v1070 = vrot.slane %v1068, 5
      %v1071 = vsel %vm491, %v1066, %v1070
      %v1073 = vshrl.u32 %v996, 16
      %v1075 = vrot.slane %v1073, 4
      %v1076 = vshll.u32 %v996, 16
      %v1078 = vrot.slane %v1076, 5
      %v1079 = vor.u32 %v1075, %v1078
      %v1080 = vrot.slane %v1079, 4
      %v1082 = vshll.u32 %v997, 16
      %v1084 = vrot.slane %v1082, 5
      %v1085 = vsel %vm491, %v1080, %v1084
      %v1087 = vshrl.u32 %v998, 16
      %v1089 = vrot.slane %v1087, 4
      %v1090 = vshll.u32 %v998, 16
      %v1092 = vrot.slane %v1090, 5
      %v1093 = vor.u32 %v1089, %v1092
      %v1094 = vrot.slane %v1093, 4
      %v1096 = vshll.u32 %v999, 16
      %v1098 = vrot.slane %v1096, 5
      %v1099 = vsel %vm491, %v1094, %v1098
      %v1101 = vshrl.u32 %v1000, 16
      %v1103 = vrot.slane %v1101, 4
      %v1104 = vshll.u32 %v1000, 16
      %v1106 = vrot.slane %v1104, 5
      %v1107 = vor.u32 %v1103, %v1106
      %v1108 = vrot.slane %v1107, 4
      %v1110 = vshll.u32 %v1001, 16
      %v1112 = vrot.slane %v1110, 5
      %v1113 = vsel %vm491, %v1108, %v1112
      %s1114 = scalar_lea.vmem %s308, 16
      %v1115 = vld [vmem:[%s1114] sm:$0xf]
      %v1116 = vunpack.c.l.b16 %v1015
      %v1117 = vunpack.c.l.b16 %v1029
      %v1118 = vunpack.c.l.b16 %v1043
      %v1119 = vunpack.c.l.b16 %v1057
      %v1120 = vunpack.c.l.b16 %v1071
      %v1121 = vunpack.c.l.b16 %v1085
      %v1122 = vunpack.c.l.b16 %v1099
      %v1123 = vunpack.c.l.b16 %v1113
      %v1124 = vpack.c.b16 %v1117, %v1116
      %v1125 = vpack.c.b16 %v1119, %v1118
      %v1126 = vpack.c.b16 %v1121, %v1120
      %v1127 = vpack.c.b16 %v1123, %v1122
      %v1129 = vsel %vm383, %v1124, 0
      %v1132 = vsel %vm383, %v1125, 0
      %v1135 = vsel %vm383, %v1126, 0
      %v1138 = vsel %vm383, %v1127, 0
      %v1141 = vsel %vm396, %v1115, 0
      %1143 = vmatprep.subr.bf16.mxu0 0
      %1144 = vmatpush1.bf16.msra.mxu0 0
      %1145 = vmatprep.subr.bf16.mxu0 0
      %1146 = vmatpush1.bf16.msra.mxu0 0
      %1147 = vmatprep.subr.bf16.mxu0 0
      %1148 = vmatpush1.bf16.msra.mxu0 0
      %1149 = vmatprep.subr.bf16.mxu0 0
      %1150 = vmatpush1.bf16.msra.mxu0 0
      %1151 = vmatprep.subr.bf16.mxu0 0
      %1152 = vmatpush1.bf16.msra.mxu0 0
      %1153 = vmatprep.subr.bf16.mxu0 0
      %1154 = vmatpush1.bf16.msra.mxu0 0
      %1155 = vmatprep.subr.bf16.mxu0 0
      %1156 = vmatpush1.bf16.msra.mxu0 0
      %1157 = vmatprep.subr.bf16.mxu0 0
      %1158 = vmatpush1.bf16.msra.mxu0 %v1141
      %1159 = vmatprep.subr.bf16.mxu0 0
      %1160 = vmatpush2.bf16.msra.mxu0 0
      %1161 = vmatprep.subr.bf16.mxu0 0
      %1162 = vmatpush2.bf16.msra.mxu0 0
      %1163 = vmatprep.subr.bf16.mxu0 0
      %1164 = vmatpush2.bf16.msra.mxu0 0
      %1165 = vmatprep.subr.bf16.mxu0 0
      %1166 = vmatpush2.bf16.msra.mxu0 0
      %1167 = vmatprep.subr.bf16.mxu0 0
      %1168 = vmatpush2.bf16.msra.mxu0 0
      %1169 = vmatprep.subr.bf16.mxu0 0
      %1170 = vmatpush2.bf16.msra.mxu0 0
      %1171 = vmatprep.subr.bf16.mxu0 0
      %1172 = vmatpush2.bf16.msra.mxu0 0
      %1173 = vmatprep.subr.bf16.mxu0 0
      %1174 = vmatpush2.bf16.msra.mxu0 0
      %1175 = vmatprep.mubr.bf16.mxu0 0
      %1176 = vmatmul.mubr.bf16.gmra.mxu0 %v1129
      %v1177 = vpop.f32.mrf.mxu0
      %v1178 = vadd.f32 0.0, %v1177
      %v1179 = vpop.f32.mrf.mxu0
      %v1180 = vpop.f32.mrf.mxu0
      %v1181 = vadd.f32 0.0, %v1180
      %v1182 = vpop.f32.mrf.mxu0
      %1183 = vmatprep.mubr.bf16.mxu0 0
      %1184 = vmatmul.mubr.bf16.gmra.mxu0 %v1132
      %v1185 = vpop.f32.mrf.mxu0
      %v1186 = vadd.f32 0.0, %v1185
      %v1187 = vpop.f32.mrf.mxu0
      %v1188 = vpop.f32.mrf.mxu0
      %v1189 = vadd.f32 0.0, %v1188
      %v1190 = vpop.f32.mrf.mxu0
      %1191 = vmatprep.mubr.bf16.mxu0 0
      %1192 = vmatmul.mubr.bf16.gmra.mxu0 %v1135
      %v1193 = vpop.f32.mrf.mxu0
      %v1194 = vadd.f32 0.0, %v1193
      %v1195 = vpop.f32.mrf.mxu0
      %v1196 = vpop.f32.mrf.mxu0
      %v1197 = vadd.f32 0.0, %v1196
      %v1198 = vpop.f32.mrf.mxu0
      %1199 = vmatprep.mubr.bf16.mxu0 0
      %1200 = vmatmul.mubr.bf16.gmra.mxu0 %v1138
      %v1201 = vpop.f32.mrf.mxu0
      %v1202 = vadd.f32 0.0, %v1201
      %v1203 = vpop.f32.mrf.mxu0
      %v1204 = vpop.f32.mrf.mxu0
      %v1205 = vadd.f32 0.0, %v1204
      %v1206 = vpop.f32.mrf.mxu0
      %1207 = vdwg.mxu0
      %v1208 = vadd.f32 %v978, %v1178
      %v1209 = vadd.f32 %v979, %v1181
      %v1210 = vadd.f32 %v980, %v1186
      %v1211 = vadd.f32 %v981, %v1189
      %v1212 = vadd.f32 %v982, %v1194
      %v1213 = vadd.f32 %v983, %v1197
      %v1214 = vadd.f32 %v984, %v1202
      %v1215 = vadd.f32 %v985, %v1205
      %v1216 = vld [vmem:[%s867] sm:$0xe]
      %v1217 = vld [vmem:[%s867 + $0x8] sm:$0xe]
      %v1218 = vld [vmem:[%s867 + $0x10] sm:$0xe]
      %v1219 = vld [vmem:[%s867 + $0x18] sm:$0xe]
      %v1220 = vld [vmem:[%s867 + $0x20] sm:$0xe]
      %v1221 = vld [vmem:[%s867 + $0x28] sm:$0xe]
      %v1222 = vld [vmem:[%s867 + $0x30] sm:$0xe]
      %v1223 = vld [vmem:[%s867 + $0x38] sm:$0xe]
      %v1240 = vrot.slane %v1216, 5
      %v1241 = vrot.slane %v1240, 4
      %v1242 = vrot.slane %v987, 5
      %v1243 = vsel %vm732, %v1241, %v1242
      %v1244 = vrot.slane %v1217, 5
      %v1245 = vrot.slane %v1244, 4
      %v1246 = vrot.slane %v989, 5
      %v1247 = vsel %vm732, %v1245, %v1246
      %v1248 = vrot.slane %v1218, 5
      %v1249 = vrot.slane %v1248, 4
      %v1250 = vrot.slane %v991, 5
      %v1251 = vsel %vm732, %v1249, %v1250
      %v1252 = vrot.slane %v1219, 5
      %v1253 = vrot.slane %v1252, 4
      %v1254 = vrot.slane %v993, 5
      %v1255 = vsel %vm732, %v1253, %v1254
      %v1256 = vrot.slane %v1220, 5
      %v1257 = vrot.slane %v1256, 4
      %v1258 = vrot.slane %v995, 5
      %v1259 = vsel %vm732, %v1257, %v1258
      %v1260 = vrot.slane %v1221, 5
      %v1261 = vrot.slane %v1260, 4
      %v1262 = vrot.slane %v997, 5
      %v1263 = vsel %vm732, %v1261, %v1262
      %v1264 = vrot.slane %v1222, 5
      %v1265 = vrot.slane %v1264, 4
      %v1266 = vrot.slane %v999, 5
      %v1267 = vsel %vm732, %v1265, %v1266
      %v1268 = vrot.slane %v1223, 5
      %v1269 = vrot.slane %v1268, 4
      %v1270 = vrot.slane %v1001, 5
      %v1271 = vsel %vm732, %v1269, %v1270
      %s1272 = scalar_lea.vmem %s308, 20
      %v1273 = vld [vmem:[%s1272] sm:$0xf]
      %v1274 = vunpack.c.l.b16 %v1243
      %v1275 = vunpack.c.l.b16 %v1247
      %v1276 = vunpack.c.l.b16 %v1251
      %v1277 = vunpack.c.l.b16 %v1255
      %v1278 = vunpack.c.l.b16 %v1259
      %v1279 = vunpack.c.l.b16 %v1263
      %v1280 = vunpack.c.l.b16 %v1267
      %v1281 = vunpack.c.l.b16 %v1271
      %v1282 = vpack.c.b16 %v1275, %v1274
      %v1283 = vpack.c.b16 %v1277, %v1276
      %v1284 = vpack.c.b16 %v1279, %v1278
      %v1285 = vpack.c.b16 %v1281, %v1280
      %v1287 = vsel %vm383, %v1282, 0
      %v1290 = vsel %vm383, %v1283, 0
      %v1293 = vsel %vm383, %v1284, 0
      %v1296 = vsel %vm383, %v1285, 0
      %v1299 = vsel %vm396, %v1273, 0
      %1301 = vmatprep.subr.bf16.mxu0 0
      %1302 = vmatpush1.bf16.msra.mxu0 0
      %1303 = vmatprep.subr.bf16.mxu0 0
      %1304 = vmatpush1.bf16.msra.mxu0 0
      %1305 = vmatprep.subr.bf16.mxu0 0
      %1306 = vmatpush1.bf16.msra.mxu0 0
      %1307 = vmatprep.subr.bf16.mxu0 0
      %1308 = vmatpush1.bf16.msra.mxu0 0
      %1309 = vmatprep.subr.bf16.mxu0 0
      %1310 = vmatpush1.bf16.msra.mxu0 0
      %1311 = vmatprep.subr.bf16.mxu0 0
      %1312 = vmatpush1.bf16.msra.mxu0 0
      %1313 = vmatprep.subr.bf16.mxu0 0
      %1314 = vmatpush1.bf16.msra.mxu0 0
      %1315 = vmatprep.subr.bf16.mxu0 0
      %1316 = vmatpush1.bf16.msra.mxu0 %v1299
      %1317 = vmatprep.subr.bf16.mxu0 0
      %1318 = vmatpush2.bf16.msra.mxu0 0
      %1319 = vmatprep.subr.bf16.mxu0 0
      %1320 = vmatpush2.bf16.msra.mxu0 0
      %1321 = vmatprep.subr.bf16.mxu0 0
      %1322 = vmatpush2.bf16.msra.mxu0 0
      %1323 = vmatprep.subr.bf16.mxu0 0
      %1324 = vmatpush2.bf16.msra.mxu0 0
      %1325 = vmatprep.subr.bf16.mxu0 0
      %1326 = vmatpush2.bf16.msra.mxu0 0
      %1327 = vmatprep.subr.bf16.mxu0 0
      %1328 = vmatpush2.bf16.msra.mxu0 0
      %1329 = vmatprep.subr.bf16.mxu0 0
      %1330 = vmatpush2.bf16.msra.mxu0 0
      %1331 = vmatprep.subr.bf16.mxu0 0
      %1332 = vmatpush2.bf16.msra.mxu0 0
      %1333 = vmatprep.mubr.bf16.mxu0 0
      %1334 = vmatmul.mubr.bf16.gmra.mxu0 %v1287
      %v1335 = vpop.f32.mrf.mxu0
      %v1336 = vadd.f32 0.0, %v1335
      %v1337 = vpop.f32.mrf.mxu0
      %v1338 = vpop.f32.mrf.mxu0
      %v1339 = vadd.f32 0.0, %v1338
      %v1340 = vpop.f32.mrf.mxu0
      %1341 = vmatprep.mubr.bf16.mxu0 0
      %1342 = vmatmul.mubr.bf16.gmra.mxu0 %v1290
      %v1343 = vpop.f32.mrf.mxu0
      %v1344 = vadd.f32 0.0, %v1343
      %v1345 = vpop.f32.mrf.mxu0
      %v1346 = vpop.f32.mrf.mxu0
      %v1347 = vadd.f32 0.0, %v1346
      %v1348 = vpop.f32.mrf.mxu0
      %1349 = vmatprep.mubr.bf16.mxu0 0
      %1350 = vmatmul.mubr.bf16.gmra.mxu0 %v1293
      %v1351 = vpop.f32.mrf.mxu0
      %v1352 = vadd.f32 0.0, %v1351
      %v1353 = vpop.f32.mrf.mxu0
      %v1354 = vpop.f32.mrf.mxu0
      %v1355 = vadd.f32 0.0, %v1354
      %v1356 = vpop.f32.mrf.mxu0
      %1357 = vmatprep.mubr.bf16.mxu0 0
      %1358 = vmatmul.mubr.bf16.gmra.mxu0 %v1296
      %v1359 = vpop.f32.mrf.mxu0
      %v1360 = vadd.f32 0.0, %v1359
      %v1361 = vpop.f32.mrf.mxu0
      %v1362 = vpop.f32.mrf.mxu0
      %v1363 = vadd.f32 0.0, %v1362
      %v1364 = vpop.f32.mrf.mxu0
      %1365 = vdwg.mxu0
      %v1366 = vadd.f32 %v1208, %v1336
      %v1367 = vadd.f32 %v1209, %v1339
      %v1368 = vadd.f32 %v1210, %v1344
      %v1369 = vadd.f32 %v1211, %v1347
      %v1370 = vadd.f32 %v1212, %v1352
      %v1371 = vadd.f32 %v1213, %v1355
      %v1372 = vadd.f32 %v1214, %v1360
      %v1373 = vadd.f32 %v1215, %v1363
      %s1374 = scalar_lea.vmem %s302, 16
      %v1375 = vld [vmem:[%s1374] sm:$0xf]
      %v1376 = vld [vmem:[%s1374 + $0x8] sm:$0xf]
      %v1377 = vld [vmem:[%s1374 + $0x10] sm:$0xf]
      %v1378 = vld [vmem:[%s1374 + $0x18] sm:$0xf]
      %v1379 = vld [vmem:[%s1374 + $0x20] sm:$0xf]
      %v1380 = vld [vmem:[%s1374 + $0x28] sm:$0xf]
      %v1381 = vld [vmem:[%s1374 + $0x30] sm:$0xf]
      %v1382 = vld [vmem:[%s1374 + $0x38] sm:$0xf]
      %s1383 = scalar_lea.vmem %s308, 24
      %v1384 = vld [vmem:[%s1383] sm:$0xf]
      %v1393 = vunpack.c.l.b16 %v1375
      %v1394 = vunpack.c.l.b16 %v1376
      %v1395 = vunpack.c.l.b16 %v1377
      %v1396 = vunpack.c.l.b16 %v1378
      %v1397 = vunpack.c.l.b16 %v1379
      %v1398 = vunpack.c.l.b16 %v1380
      %v1399 = vunpack.c.l.b16 %v1381
      %v1400 = vunpack.c.l.b16 %v1382
      %v1401 = vpack.c.b16 %v1394, %v1393
      %v1402 = vpack.c.b16 %v1396, %v1395
      %v1403 = vpack.c.b16 %v1398, %v1397
      %v1404 = vpack.c.b16 %v1400, %v1399
      %v1406 = vsel %vm383, %v1401, 0
      %v1409 = vsel %vm383, %v1402, 0
      %v1412 = vsel %vm383, %v1403, 0
      %v1415 = vsel %vm383, %v1404, 0
      %v1418 = vsel %vm396, %v1384, 0
      %1420 = vmatprep.subr.bf16.mxu0 0
      %1421 = vmatpush1.bf16.msra.mxu0 0
      %1422 = vmatprep.subr.bf16.mxu0 0
      %1423 = vmatpush1.bf16.msra.mxu0 0
      %1424 = vmatprep.subr.bf16.mxu0 0
      %1425 = vmatpush1.bf16.msra.mxu0 0
      %1426 = vmatprep.subr.bf16.mxu0 0
      %1427 = vmatpush1.bf16.msra.mxu0 0
      %1428 = vmatprep.subr.bf16.mxu0 0
      %1429 = vmatpush1.bf16.msra.mxu0 0
      %1430 = vmatprep.subr.bf16.mxu0 0
      %1431 = vmatpush1.bf16.msra.mxu0 0
      %1432 = vmatprep.subr.bf16.mxu0 0
      %1433 = vmatpush1.bf16.msra.mxu0 0
      %1434 = vmatprep.subr.bf16.mxu0 0
      %1435 = vmatpush1.bf16.msra.mxu0 %v1418
      %1436 = vmatprep.subr.bf16.mxu0 0
      %1437 = vmatpush2.bf16.msra.mxu0 0
      %1438 = vmatprep.subr.bf16.mxu0 0
      %1439 = vmatpush2.bf16.msra.mxu0 0
      %1440 = vmatprep.subr.bf16.mxu0 0
      %1441 = vmatpush2.bf16.msra.mxu0 0
      %1442 = vmatprep.subr.bf16.mxu0 0
      %1443 = vmatpush2.bf16.msra.mxu0 0
      %1444 = vmatprep.subr.bf16.mxu0 0
      %1445 = vmatpush2.bf16.msra.mxu0 0
      %1446 = vmatprep.subr.bf16.mxu0 0
      %1447 = vmatpush2.bf16.msra.mxu0 0
      %1448 = vmatprep.subr.bf16.mxu0 0
      %1449 = vmatpush2.bf16.msra.mxu0 0
      %1450 = vmatprep.subr.bf16.mxu0 0
      %1451 = vmatpush2.bf16.msra.mxu0 0
      %1452 = vmatprep.mubr.bf16.mxu0 0
      %1453 = vmatmul.mubr.bf16.gmra.mxu0 %v1406
      %v1454 = vpop.f32.mrf.mxu0
      %v1455 = vadd.f32 0.0, %v1454
      %v1456 = vpop.f32.mrf.mxu0
      %v1457 = vpop.f32.mrf.mxu0
      %v1458 = vadd.f32 0.0, %v1457
      %v1459 = vpop.f32.mrf.mxu0
      %1460 = vmatprep.mubr.bf16.mxu0 0
      %1461 = vmatmul.mubr.bf16.gmra.mxu0 %v1409
      %v1462 = vpop.f32.mrf.mxu0
      %v1463 = vadd.f32 0.0, %v1462
      %v1464 = vpop.f32.mrf.mxu0
      %v1465 = vpop.f32.mrf.mxu0
      %v1466 = vadd.f32 0.0, %v1465
      %v1467 = vpop.f32.mrf.mxu0
      %1468 = vmatprep.mubr.bf16.mxu0 0
      %1469 = vmatmul.mubr.bf16.gmra.mxu0 %v1412
      %v1470 = vpop.f32.mrf.mxu0
      %v1471 = vadd.f32 0.0, %v1470
      %v1472 = vpop.f32.mrf.mxu0
      %v1473 = vpop.f32.mrf.mxu0
      %v1474 = vadd.f32 0.0, %v1473
      %v1475 = vpop.f32.mrf.mxu0
      %1476 = vmatprep.mubr.bf16.mxu0 0
      %1477 = vmatmul.mubr.bf16.gmra.mxu0 %v1415
      %v1478 = vpop.f32.mrf.mxu0
      %v1479 = vadd.f32 0.0, %v1478
      %v1480 = vpop.f32.mrf.mxu0
      %v1481 = vpop.f32.mrf.mxu0
      %v1482 = vadd.f32 0.0, %v1481
      %v1483 = vpop.f32.mrf.mxu0
      %1484 = vdwg.mxu0
      %v1485 = vadd.f32 %v1366, %v1455
      %v1486 = vadd.f32 %v1367, %v1458
      %v1487 = vadd.f32 %v1368, %v1463
      %v1488 = vadd.f32 %v1369, %v1466
      %v1489 = vadd.f32 %v1370, %v1471
      %v1490 = vadd.f32 %v1371, %v1474
      %v1491 = vadd.f32 %v1372, %v1479
      %v1492 = vadd.f32 %v1373, %v1482
      %v1493 = vld [vmem:[%s1374] sm:$0xf]
      %v1494 = vld [vmem:[%s1374 + $0x4] sm:$0x1]
      %v1495 = vld [vmem:[%s1374 + $0x8] sm:$0xf]
      %v1496 = vld [vmem:[%s1374 + $0xc] sm:$0x1]
      %v1497 = vld [vmem:[%s1374 + $0x10] sm:$0xf]
      %v1498 = vld [vmem:[%s1374 + $0x14] sm:$0x1]
      %v1499 = vld [vmem:[%s1374 + $0x18] sm:$0xf]
      %v1500 = vld [vmem:[%s1374 + $0x1c] sm:$0x1]
      %v1501 = vld [vmem:[%s1374 + $0x20] sm:$0xf]
      %v1502 = vld [vmem:[%s1374 + $0x24] sm:$0x1]
      %v1503 = vld [vmem:[%s1374 + $0x28] sm:$0xf]
      %v1504 = vld [vmem:[%s1374 + $0x2c] sm:$0x1]
      %v1505 = vld [vmem:[%s1374 + $0x30] sm:$0xf]
      %v1506 = vld [vmem:[%s1374 + $0x34] sm:$0x1]
      %v1507 = vld [vmem:[%s1374 + $0x38] sm:$0xf]
      %v1508 = vld [vmem:[%s1374 + $0x3c] sm:$0x1]
      %v1510 = vshrl.u32 %v1493, 16
      %v1512 = vrot.slane %v1510, 4
      %v1513 = vshll.u32 %v1493, 16
      %v1515 = vrot.slane %v1513, 5
      %v1516 = vor.u32 %v1512, %v1515
      %v1517 = vrot.slane %v1516, 4
      %v1519 = vshll.u32 %v1494, 16
      %v1521 = vrot.slane %v1519, 5
      %v1522 = vsel %vm491, %v1517, %v1521
      %v1524 = vshrl.u32 %v1495, 16
      %v1526 = vrot.slane %v1524, 4
      %v1527 = vshll.u32 %v1495, 16
      %v1529 = vrot.slane %v1527, 5
      %v1530 = vor.u32 %v1526, %v1529
      %v1531 = vrot.slane %v1530, 4
      %v1533 = vshll.u32 %v1496, 16
      %v1535 = vrot.slane %v1533, 5
      %v1536 = vsel %vm491, %v1531, %v1535
      %v1538 = vshrl.u32 %v1497, 16
      %v1540 = vrot.slane %v1538, 4
      %v1541 = vshll.u32 %v1497, 16
      %v1543 = vrot.slane %v1541, 5
      %v1544 = vor.u32 %v1540, %v1543
      %v1545 = vrot.slane %v1544, 4
      %v1547 = vshll.u32 %v1498, 16
      %v1549 = vrot.slane %v1547, 5
      %v1550 = vsel %vm491, %v1545, %v1549
      %v1552 = vshrl.u32 %v1499, 16
      %v1554 = vrot.slane %v1552, 4
      %v1555 = vshll.u32 %v1499, 16
      %v1557 = vrot.slane %v1555, 5
      %v1558 = vor.u32 %v1554, %v1557
      %v1559 = vrot.slane %v1558, 4
      %v1561 = vshll.u32 %v1500, 16
      %v1563 = vrot.slane %v1561, 5
      %v1564 = vsel %vm491, %v1559, %v1563
      %v1566 = vshrl.u32 %v1501, 16
      %v1568 = vrot.slane %v1566, 4
      %v1569 = vshll.u32 %v1501, 16
      %v1571 = vrot.slane %v1569, 5
      %v1572 = vor.u32 %v1568, %v1571
      %v1573 = vrot.slane %v1572, 4
      %v1575 = vshll.u32 %v1502, 16
      %v1577 = vrot.slane %v1575, 5
      %v1578 = vsel %vm491, %v1573, %v1577
      %v1580 = vshrl.u32 %v1503, 16
      %v1582 = vrot.slane %v1580, 4
      %v1583 = vshll.u32 %v1503, 16
      %v1585 = vrot.slane %v1583, 5
      %v1586 = vor.u32 %v1582, %v1585
      %v1587 = vrot.slane %v1586, 4
      %v1589 = vshll.u32 %v1504, 16
      %v1591 = vrot.slane %v1589, 5
      %v1592 = vsel %vm491, %v1587, %v1591
      %v1594 = vshrl.u32 %v1505, 16
      %v1596 = vrot.slane %v1594, 4
      %v1597 = vshll.u32 %v1505, 16
      %v1599 = vrot.slane %v1597, 5
      %v1600 = vor.u32 %v1596, %v1599
      %v1601 = vrot.slane %v1600, 4
      %v1603 = vshll.u32 %v1506, 16
      %v1605 = vrot.slane %v1603, 5
      %v1606 = vsel %vm491, %v1601, %v1605
      %v1608 = vshrl.u32 %v1507, 16
      %v1610 = vrot.slane %v1608, 4
      %v1611 = vshll.u32 %v1507, 16
      %v1613 = vrot.slane %v1611, 5
      %v1614 = vor.u32 %v1610, %v1613
      %v1615 = vrot.slane %v1614, 4
      %v1617 = vshll.u32 %v1508, 16
      %v1619 = vrot.slane %v1617, 5
      %v1620 = vsel %vm491, %v1615, %v1619
      %s1621 = scalar_lea.vmem %s308, 28
      %v1622 = vld [vmem:[%s1621] sm:$0xf]
      %v1623 = vunpack.c.l.b16 %v1522
      %v1624 = vunpack.c.l.b16 %v1536
      %v1625 = vunpack.c.l.b16 %v1550
      %v1626 = vunpack.c.l.b16 %v1564
      %v1627 = vunpack.c.l.b16 %v1578
      %v1628 = vunpack.c.l.b16 %v1592
      %v1629 = vunpack.c.l.b16 %v1606
      %v1630 = vunpack.c.l.b16 %v1620
      %v1631 = vpack.c.b16 %v1624, %v1623
      %v1632 = vpack.c.b16 %v1626, %v1625
      %v1633 = vpack.c.b16 %v1628, %v1627
      %v1634 = vpack.c.b16 %v1630, %v1629
      %v1636 = vsel %vm383, %v1631, 0
      %v1639 = vsel %vm383, %v1632, 0
      %v1642 = vsel %vm383, %v1633, 0
      %v1645 = vsel %vm383, %v1634, 0
      %v1648 = vsel %vm396, %v1622, 0
      %1650 = vmatprep.subr.bf16.mxu0 0
      %1651 = vmatpush1.bf16.msra.mxu0 0
      %1652 = vmatprep.subr.bf16.mxu0 0
      %1653 = vmatpush1.bf16.msra.mxu0 0
      %1654 = vmatprep.subr.bf16.mxu0 0
      %1655 = vmatpush1.bf16.msra.mxu0 0
      %1656 = vmatprep.subr.bf16.mxu0 0
      %1657 = vmatpush1.bf16.msra.mxu0 0
      %1658 = vmatprep.subr.bf16.mxu0 0
      %1659 = vmatpush1.bf16.msra.mxu0 0
      %1660 = vmatprep.subr.bf16.mxu0 0
      %1661 = vmatpush1.bf16.msra.mxu0 0
      %1662 = vmatprep.subr.bf16.mxu0 0
      %1663 = vmatpush1.bf16.msra.mxu0 0
      %1664 = vmatprep.subr.bf16.mxu0 0
      %1665 = vmatpush1.bf16.msra.mxu0 %v1648
      %1666 = vmatprep.subr.bf16.mxu0 0
      %1667 = vmatpush2.bf16.msra.mxu0 0
      %1668 = vmatprep.subr.bf16.mxu0 0
      %1669 = vmatpush2.bf16.msra.mxu0 0
      %1670 = vmatprep.subr.bf16.mxu0 0
      %1671 = vmatpush2.bf16.msra.mxu0 0
      %1672 = vmatprep.subr.bf16.mxu0 0
      %1673 = vmatpush2.bf16.msra.mxu0 0
      %1674 = vmatprep.subr.bf16.mxu0 0
      %1675 = vmatpush2.bf16.msra.mxu0 0
      %1676 = vmatprep.subr.bf16.mxu0 0
      %1677 = vmatpush2.bf16.msra.mxu0 0
      %1678 = vmatprep.subr.bf16.mxu0 0
      %1679 = vmatpush2.bf16.msra.mxu0 0
      %1680 = vmatprep.subr.bf16.mxu0 0
      %1681 = vmatpush2.bf16.msra.mxu0 0
      %1682 = vmatprep.mubr.bf16.mxu0 0
      %1683 = vmatmul.mubr.bf16.gmra.mxu0 %v1636
      %v1684 = vpop.f32.mrf.mxu0
      %v1685 = vadd.f32 0.0, %v1684
      %v1686 = vpop.f32.mrf.mxu0
      %v1687 = vpop.f32.mrf.mxu0
      %v1688 = vadd.f32 0.0, %v1687
      %v1689 = vpop.f32.mrf.mxu0
      %1690 = vmatprep.mubr.bf16.mxu0 0
      %1691 = vmatmul.mubr.bf16.gmra.mxu0 %v1639
      %v1692 = vpop.f32.mrf.mxu0
      %v1693 = vadd.f32 0.0, %v1692
      %v1694 = vpop.f32.mrf.mxu0
      %v1695 = vpop.f32.mrf.mxu0
      %v1696 = vadd.f32 0.0, %v1695
      %v1697 = vpop.f32.mrf.mxu0
      %1698 = vmatprep.mubr.bf16.mxu0 0
      %1699 = vmatmul.mubr.bf16.gmra.mxu0 %v1642
      %v1700 = vpop.f32.mrf.mxu0
      %v1701 = vadd.f32 0.0, %v1700
      %v1702 = vpop.f32.mrf.mxu0
      %v1703 = vpop.f32.mrf.mxu0
      %v1704 = vadd.f32 0.0, %v1703
      %v1705 = vpop.f32.mrf.mxu0
      %1706 = vmatprep.mubr.bf16.mxu0 0
      %1707 = vmatmul.mubr.bf16.gmra.mxu0 %v1645
      %v1708 = vpop.f32.mrf.mxu0
      %v1709 = vadd.f32 0.0, %v1708
      %v1710 = vpop.f32.mrf.mxu0
      %v1711 = vpop.f32.mrf.mxu0
      %v1712 = vadd.f32 0.0, %v1711
      %v1713 = vpop.f32.mrf.mxu0
      %1714 = vdwg.mxu0
      %v1715 = vadd.f32 %v1485, %v1685
      %v1716 = vadd.f32 %v1486, %v1688
      %v1717 = vadd.f32 %v1487, %v1693
      %v1718 = vadd.f32 %v1488, %v1696
      %v1719 = vadd.f32 %v1489, %v1701
      %v1720 = vadd.f32 %v1490, %v1704
      %v1721 = vadd.f32 %v1491, %v1709
      %v1722 = vadd.f32 %v1492, %v1712
      %v1723 = vld [vmem:[%s1374] sm:$0xe]
      %v1724 = vld [vmem:[%s1374 + $0x8] sm:$0xe]
      %v1725 = vld [vmem:[%s1374 + $0x10] sm:$0xe]
      %v1726 = vld [vmem:[%s1374 + $0x18] sm:$0xe]
      %v1727 = vld [vmem:[%s1374 + $0x20] sm:$0xe]
      %v1728 = vld [vmem:[%s1374 + $0x28] sm:$0xe]
      %v1729 = vld [vmem:[%s1374 + $0x30] sm:$0xe]
      %v1730 = vld [vmem:[%s1374 + $0x38] sm:$0xe]
      %v1747 = vrot.slane %v1723, 5
      %v1748 = vrot.slane %v1747, 4
      %v1749 = vrot.slane %v1494, 5
      %v1750 = vsel %vm732, %v1748, %v1749
      %v1751 = vrot.slane %v1724, 5
      %v1752 = vrot.slane %v1751, 4
      %v1753 = vrot.slane %v1496, 5
      %v1754 = vsel %vm732, %v1752, %v1753
      %v1755 = vrot.slane %v1725, 5
      %v1756 = vrot.slane %v1755, 4
      %v1757 = vrot.slane %v1498, 5
      %v1758 = vsel %vm732, %v1756, %v1757
      %v1759 = vrot.slane %v1726, 5
      %v1760 = vrot.slane %v1759, 4
      %v1761 = vrot.slane %v1500, 5
      %v1762 = vsel %vm732, %v1760, %v1761
      %v1763 = vrot.slane %v1727, 5
      %v1764 = vrot.slane %v1763, 4
      %v1765 = vrot.slane %v1502, 5
      %v1766 = vsel %vm732, %v1764, %v1765
      %v1767 = vrot.slane %v1728, 5
      %v1768 = vrot.slane %v1767, 4
      %v1769 = vrot.slane %v1504, 5
      %v1770 = vsel %vm732, %v1768, %v1769
      %v1771 = vrot.slane %v1729, 5
      %v1772 = vrot.slane %v1771, 4
      %v1773 = vrot.slane %v1506, 5
      %v1774 = vsel %vm732, %v1772, %v1773
      %v1775 = vrot.slane %v1730, 5
      %v1776 = vrot.slane %v1775, 4
      %v1777 = vrot.slane %v1508, 5
      %v1778 = vsel %vm732, %v1776, %v1777
      %s1779 = scalar_lea.vmem %s308, 32
      %v1780 = vld [vmem:[%s1779] sm:$0xf]
      %v1781 = vunpack.c.l.b16 %v1750
      %v1782 = vunpack.c.l.b16 %v1754
      %v1783 = vunpack.c.l.b16 %v1758
      %v1784 = vunpack.c.l.b16 %v1762
      %v1785 = vunpack.c.l.b16 %v1766
      %v1786 = vunpack.c.l.b16 %v1770
      %v1787 = vunpack.c.l.b16 %v1774
      %v1788 = vunpack.c.l.b16 %v1778
      %v1789 = vpack.c.b16 %v1782, %v1781
      %v1790 = vpack.c.b16 %v1784, %v1783
      %v1791 = vpack.c.b16 %v1786, %v1785
      %v1792 = vpack.c.b16 %v1788, %v1787
      %v1794 = vsel %vm383, %v1789, 0
      %v1797 = vsel %vm383, %v1790, 0
      %v1800 = vsel %vm383, %v1791, 0
      %v1803 = vsel %vm383, %v1792, 0
      %v1806 = vsel %vm396, %v1780, 0
      %1808 = vmatprep.subr.bf16.mxu0 0
      %1809 = vmatpush1.bf16.msra.mxu0 0
      %1810 = vmatprep.subr.bf16.mxu0 0
      %1811 = vmatpush1.bf16.msra.mxu0 0
      %1812 = vmatprep.subr.bf16.mxu0 0
      %1813 = vmatpush1.bf16.msra.mxu0 0
      %1814 = vmatprep.subr.bf16.mxu0 0
      %1815 = vmatpush1.bf16.msra.mxu0 0
      %1816 = vmatprep.subr.bf16.mxu0 0
      %1817 = vmatpush1.bf16.msra.mxu0 0
      %1818 = vmatprep.subr.bf16.mxu0 0
      %1819 = vmatpush1.bf16.msra.mxu0 0
      %1820 = vmatprep.subr.bf16.mxu0 0
      %1821 = vmatpush1.bf16.msra.mxu0 0
      %1822 = vmatprep.subr.bf16.mxu0 0
      %1823 = vmatpush1.bf16.msra.mxu0 %v1806
      %1824 = vmatprep.subr.bf16.mxu0 0
      %1825 = vmatpush2.bf16.msra.mxu0 0
      %1826 = vmatprep.subr.bf16.mxu0 0
      %1827 = vmatpush2.bf16.msra.mxu0 0
      %1828 = vmatprep.subr.bf16.mxu0 0
      %1829 = vmatpush2.bf16.msra.mxu0 0
      %1830 = vmatprep.subr.bf16.mxu0 0
      %1831 = vmatpush2.bf16.msra.mxu0 0
      %1832 = vmatprep.subr.bf16.mxu0 0
      %1833 = vmatpush2.bf16.msra.mxu0 0
      %1834 = vmatprep.subr.bf16.mxu0 0
      %1835 = vmatpush2.bf16.msra.mxu0 0
      %1836 = vmatprep.subr.bf16.mxu0 0
      %1837 = vmatpush2.bf16.msra.mxu0 0
      %1838 = vmatprep.subr.bf16.mxu0 0
      %1839 = vmatpush2.bf16.msra.mxu0 0
      %1840 = vmatprep.mubr.bf16.mxu0 0
      %1841 = vmatmul.mubr.bf16.gmra.mxu0 %v1794
      %v1842 = vpop.f32.mrf.mxu0
      %v1843 = vadd.f32 0.0, %v1842
      %v1844 = vpop.f32.mrf.mxu0
      %v1845 = vpop.f32.mrf.mxu0
      %v1846 = vadd.f32 0.0, %v1845
      %v1847 = vpop.f32.mrf.mxu0
      %1848 = vmatprep.mubr.bf16.mxu0 0
      %1849 = vmatmul.mubr.bf16.gmra.mxu0 %v1797
      %v1850 = vpop.f32.mrf.mxu0
      %v1851 = vadd.f32 0.0, %v1850
      %v1852 = vpop.f32.mrf.mxu0
      %v1853 = vpop.f32.mrf.mxu0
      %v1854 = vadd.f32 0.0, %v1853
      %v1855 = vpop.f32.mrf.mxu0
      %1856 = vmatprep.mubr.bf16.mxu0 0
      %1857 = vmatmul.mubr.bf16.gmra.mxu0 %v1800
      %v1858 = vpop.f32.mrf.mxu0
      %v1859 = vadd.f32 0.0, %v1858
      %v1860 = vpop.f32.mrf.mxu0
      %v1861 = vpop.f32.mrf.mxu0
      %v1862 = vadd.f32 0.0, %v1861
      %v1863 = vpop.f32.mrf.mxu0
      %1864 = vmatprep.mubr.bf16.mxu0 0
      %1865 = vmatmul.mubr.bf16.gmra.mxu0 %v1803
      %v1866 = vpop.f32.mrf.mxu0
      %v1867 = vadd.f32 0.0, %v1866
      %v1868 = vpop.f32.mrf.mxu0
      %v1869 = vpop.f32.mrf.mxu0
      %v1870 = vadd.f32 0.0, %v1869
      %v1871 = vpop.f32.mrf.mxu0
      %1872 = vdwg.mxu0
      %v1873 = vadd.f32 %v1715, %v1843
      %v1874 = vadd.f32 %v1716, %v1846
      %v1875 = vadd.f32 %v1717, %v1851
      %v1876 = vadd.f32 %v1718, %v1854
      %v1877 = vadd.f32 %v1719, %v1859
      %v1878 = vadd.f32 %v1720, %v1862
      %v1879 = vadd.f32 %v1721, %v1867
      %v1880 = vadd.f32 %v1722, %v1870
      %vm1881 = vcmask 31744
      %1882 = vst.msk [vmem:[#allocation2] sm:$0xff] %vm1881, %v1873
      %1883 = vst.msk [vmem:[#allocation2 + $0x8] sm:$0xff] %vm1881, %v1874
      %1884 = vst.msk [vmem:[#allocation2 + $0x10] sm:$0xff] %vm1881, %v1875
      %1885 = vst.msk [vmem:[#allocation2 + $0x18] sm:$0xff] %vm1881, %v1876
      %1886 = vst.msk [vmem:[#allocation2 + $0x20] sm:$0xff] %vm1881, %v1877
      %1887 = vst.msk [vmem:[#allocation2 + $0x28] sm:$0xff] %vm1881, %v1878
      %1888 = vst.msk [vmem:[#allocation2 + $0x30] sm:$0xff] %vm1881, %v1879
      %1889 = vst.msk [vmem:[#allocation2 + $0x38] sm:$0xff] %vm1881, %v1880
      %p1890 = scmp.eq.s32.totalorder %s24, 2
      // Predicated region
      $region37: #{decode_forward.4} parent=31 // pred_check
        %p1891 = pneg %p1890
      $region38: #{decode_forward.4} parent=31 // pred_check_branch
        %1893 = sbr.rel (%p1891) target = $region40
      $region39: #{decode_forward.4} parent=31 // pred_region
        %v1894 = vld [vmem:[#allocation2] sm:$0xff]
        %v1895 = vld [vmem:[#allocation2 + $0x8] sm:$0xff]
        %v1896 = vld [vmem:[#allocation2 + $0x10] sm:$0xff]
        %v1897 = vld [vmem:[#allocation2 + $0x18] sm:$0xff]
        %v1898 = vld [vmem:[#allocation2 + $0x20] sm:$0xff]
        %v1899 = vld [vmem:[#allocation2 + $0x28] sm:$0xff]
        %v1900 = vld [vmem:[#allocation2 + $0x30] sm:$0xff]
        %v1901 = vld [vmem:[#allocation2 + $0x38] sm:$0xff]
        %v1902 = vld [vmem:[%s2] sm:$0x1]
        %v1904 = vlaneseq
        %v1905 = vshrl.u32 %v1904, 7
        %v1906 = vsub.s32 0, %v1905
        %v1907 = vrot.slane %v1902, %v1906
        %v1909 = vadd.f32 %v1894, %v1907
        %v1910 = vadd.f32 %v1895, %v1907
        %v1911 = vadd.f32 %v1896, %v1907
        %v1912 = vadd.f32 %v1897, %v1907
        %v1913 = vadd.f32 %v1898, %v1907
        %v1914 = vadd.f32 %v1899, %v1907
        %v1915 = vadd.f32 %v1900, %v1907
        %v1916 = vadd.f32 %v1901, %v1907
        %v1917 = vmax.f32 %v1909, 0.0
        %v1918 = vmax.f32 %v1910, 0.0
        %v1919 = vmax.f32 %v1911, 0.0
        %v1920 = vmax.f32 %v1912, 0.0
        %v1921 = vmax.f32 %v1913, 0.0
        %v1922 = vmax.f32 %v1914, 0.0
        %v1923 = vmax.f32 %v1915, 0.0
        %v1924 = vmax.f32 %v1916, 0.0
        %1925 = vst.msk [vmem:[%s317] sm:$0xff] %vm1881, %v1917
        %1926 = vst.msk [vmem:[%s317 + $0x8] sm:$0xff] %vm1881, %v1918
        %1927 = vst.msk [vmem:[%s317 + $0x10] sm:$0xff] %vm1881, %v1919
        %1928 = vst.msk [vmem:[%s317 + $0x18] sm:$0xff] %vm1881, %v1920
        %1929 = vst.msk [vmem:[%s317 + $0x20] sm:$0xff] %vm1881, %v1921
        %1930 = vst.msk [vmem:[%s317 + $0x28] sm:$0xff] %vm1881, %v1922
        %1931 = vst.msk [vmem:[%s317 + $0x30] sm:$0xff] %vm1881, %v1923
        %1932 = vst.msk [vmem:[%s317 + $0x38] sm:$0xff] %vm1881, %v1924
        %v1933 = vsel %vm1881, %v1917, 0.0
        %v1934 = vsel %vm1881, %v1918, 0.0
        %v1935 = vadd.f32 %v1933, %v1934
        %v1936 = vsel %vm1881, %v1919, 0.0
        %v1937 = vadd.f32 %v1935, %v1936
        %v1938 = vsel %vm1881, %v1920, 0.0
        %v1939 = vadd.f32 %v1937, %v1938
        %v1940 = vsel %vm1881, %v1921, 0.0
        %v1941 = vadd.f32 %v1939, %v1940
        %v1942 = vsel %vm1881, %v1922, 0.0
        %v1943 = vadd.f32 %v1941, %v1942
        %v1944 = vsel %vm1881, %v1923, 0.0
        %v1945 = vadd.f32 %v1943, %v1944
        %v1946 = vsel %vm1881, %v1924, 0.0
        %v1947 = vadd.f32 %v1945, %v1946
        %v1948 = vrot.slane %v1947, 4
        %v1949 = vadd.f32 %v1947, %v1948
        %v1950 = vrot.slane %v1949, 2
        %v1951 = vadd.f32 %v1949, %v1950
        %v1952 = vrot.slane %v1951, 1
        %v1953 = vadd.f32 %v1951, %v1952
        %vm1954 = vcmask 24576
        %1955 = vst.msk [vmem:[%s324] sm:$0x1] %vm1954, %v1953
        %v1956 = vmul.f32 %v1917, %v1917
        %v1957 = vmul.f32 %v1918, %v1918
        %v1958 = vmul.f32 %v1919, %v1919
        %v1959 = vmul.f32 %v1920, %v1920
        %v1960 = vmul.f32 %v1921, %v1921
        %v1961 = vmul.f32 %v1922, %v1922
        %v1962 = vmul.f32 %v1923, %v1923
        %v1963 = vmul.f32 %v1924, %v1924
        %v1964 = vsel %vm1881, %v1956, 0.0
        %v1965 = vsel %vm1881, %v1957, 0.0
        %v1966 = vadd.f32 %v1964, %v1965
        %v1967 = vsel %vm1881, %v1958, 0.0
        %v1968 = vadd.f32 %v1966, %v1967
        %v1969 = vsel %vm1881, %v1959, 0.0
        %v1970 = vadd.f32 %v1968, %v1969
        %v1971 = vsel %vm1881, %v1960, 0.0
        %v1972 = vadd.f32 %v1970, %v1971
        %v1973 = vsel %vm1881, %v1961, 0.0
        %v1974 = vadd.f32 %v1972, %v1973
        %v1975 = vsel %vm1881, %v1962, 0.0
        %v1976 = vadd.f32 %v1974, %v1975
        %v1977 = vsel %vm1881, %v1963, 0.0
        %v1978 = vadd.f32 %v1976, %v1977
        %v1979 = vrot.slane %v1978, 4
        %v1980 = vadd.f32 %v1978, %v1979
        %v1981 = vrot.slane %v1980, 2
        %v1982 = vadd.f32 %v1980, %v1981
        %v1983 = vrot.slane %v1982, 1
        %v1984 = vadd.f32 %v1982, %v1983
        %1985 = vst.msk [vmem:[%s331] sm:$0x1] %vm1954, %v1984
      $region40: #{decode_forward.4} parent=31 // pred_fallthru
        _
      %p1986 = scmp.lt.s32.totalorder %s22, 1
      %s1987 = scalar_select %p1986, %s22, 1
      %p1988 = scmp.lt.s32.totalorder %s23, 7
      %s1989 = scalar_select %p1988, %s23, 7
      %s1990 = smul.addr %s1989, 8
      %s1991 = smul.addr %s1987, 64
      %s1992 = sadd.s32 %s1990, %s1991
      %s1993 = smul.addr %s1992, 8
      %s1994 = scalar_lea.vmem %s3, %s1993
      %p1995 = scmp.lt.s32.totalorder %s22, 1
      %s1996 = scalar_select %p1995, %s22, 1
      %p1997 = scmp.lt.s32.totalorder %s23, 7
      %s1998 = scalar_select %p1997, %s23, 7
      %s1999 = smul.addr %s1996, 8
      %s2000 = sadd.s32 %s1998, %s1999
      %s2001 = scalar_lea.vmem %s4, %s2000
      %p2002 = scmp.lt.s32.totalorder %s22, 1
      %s2003 = scalar_select %p2002, %s22, 1
      %p2004 = scmp.lt.s32.totalorder %s23, 7
      %s2005 = scalar_select %p2004, %s23, 7
      %s2006 = smul.addr %s2003, 8
      %s2007 = sadd.s32 %s2005, %s2006
      %s2008 = scalar_lea.vmem %s5, %s2007
      // Predicated region
      $region41: #{decode_forward.4} parent=31 // pred_check
        %p2009 = pneg %p133
      $region42: #{decode_forward.4} parent=31 // pred_check_branch
        %2011 = sbr.rel (%p2009) target = $region44
      $region43: #{decode_forward.4} parent=31 // pred_region
        _
      $region44: #{decode_forward.4} parent=31 // pred_fallthru
        _
      // Predicated region
      $region45: #{decode_forward.4} parent=31 // pred_check
        %p2012 = pneg %p161
      $region46: #{decode_forward.4} parent=31 // pred_check_branch
        %2014 = sbr.rel (%p2012) target = $region48
      $region47: #{decode_forward.4} parent=31 // pred_region
        _
      $region48: #{decode_forward.4} parent=31 // pred_fallthru
        _
      // Predicated region
      $region49: #{decode_forward.4} parent=31 // pred_check
        %p2015 = pneg %p189
      $region50: #{decode_forward.4} parent=31 // pred_check_branch
        %2017 = sbr.rel (%p2015) target = $region52
      $region51: #{decode_forward.4} parent=31 // pred_region
        _
      $region52: #{decode_forward.4} parent=31 // pred_fallthru
        _
    $region32: #{decode_forward.4} parent=5 // pred_fallthru
      _
    %p2018 = scmp.le.s32.totalorder 2, %s12
    // Predicated region
    $region53: #{decode_forward.4} parent=5 // pred_check
      %p2019 = pneg %p2018
    $region54: #{decode_forward.4} parent=5 // pred_check_branch
      %2021 = sbr.rel (%p2019) target = $region56
    $region55: #{decode_forward.4} parent=5 // pred_region
      %s2022 = ssub.s32 %s12, 2
      // Predicated region
      $region57: #{decode_forward.4} parent=55 // pred_check
        %p2023 = pneg %p139
      $region58: #{decode_forward.4} parent=55 // pred_check_branch
        %2025 = sbr.rel (%p2023) target = $region60
      $region59: #{decode_forward.4} parent=55 // pred_region
        %p2026 = scmp.lt.s32.totalorder %s25, 1
        %s2027 = scalar_select %p2026, %s25, 1
        %p2028 = scmp.lt.s32.totalorder %s26, 7
        %s2029 = scalar_select %p2028, %s26, 7
        %s2030 = smul.addr %s2029, 8
        %s2031 = smul.addr %s2027, 64
        %s2032 = sadd.s32 %s2030, %s2031
        %s2033 = smul.addr %s2032, 8
        %s2034 = scalar_lea.vmem %s3, %s2033
      $region60: #{decode_forward.4} parent=55 // pred_fallthru
        _
      // Predicated region
      $region61: #{decode_forward.4} parent=55 // pred_check
        %p2035 = pneg %p167
      $region62: #{decode_forward.4} parent=55 // pred_check_branch
        %2037 = sbr.rel (%p2035) target = $region64
      $region63: #{decode_forward.4} parent=55 // pred_region
        %p2038 = scmp.lt.s32.totalorder %s25, 1
        %s2039 = scalar_select %p2038, %s25, 1
        %p2040 = scmp.lt.s32.totalorder %s26, 7
        %s2041 = scalar_select %p2040, %s26, 7
        %s2042 = smul.addr %s2039, 8
        %s2043 = sadd.s32 %s2041, %s2042
        %s2044 = scalar_lea.vmem %s4, %s2043
      $region64: #{decode_forward.4} parent=55 // pred_fallthru
        _
      // Predicated region
      $region65: #{decode_forward.4} parent=55 // pred_check
        %p2045 = pneg %p195
      $region66: #{decode_forward.4} parent=55 // pred_check_branch
        %2047 = sbr.rel (%p2045) target = $region68
      $region67: #{decode_forward.4} parent=55 // pred_region
        %p2048 = scmp.lt.s32.totalorder %s25, 1
        %s2049 = scalar_select %p2048, %s25, 1
        %p2050 = scmp.lt.s32.totalorder %s26, 7
        %s2051 = scalar_select %p2050, %s26, 7
        %s2052 = smul.addr %s2049, 8
        %s2053 = sadd.s32 %s2051, %s2052
        %s2054 = scalar_lea.vmem %s5, %s2053
      $region68: #{decode_forward.4} parent=55 // pred_fallthru
        _
    $region56: #{decode_forward.4} parent=5 // pred_fallthru
      _
  $region6: #{decode_forward.4} parent=0 // loop_footer
    %s16 = sadd.s32 1, %s12
  $region7: #{decode_forward.4} parent=0 // loop_footer_branch
    %11 = sbr.rel target = $region3
  $region8: #{decode_forward.4} parent=0 // loop_exit
    _

</llo_original>
